<compile_context>
chip_gen: v7x
topology: tpu7x:2x2x1
jax: 0.10.0
libtpu: 0.0.40
codegen_flags: <defaults>
</compile_context>

<pallas_src>
import math

import jax
import jax.numpy as jnp
from jax.experimental import pallas as pl
from jax.experimental.pallas import tpu as pltpu

LN_EPS = 1e-5


def _act(x):
    return jax.nn.gelu(x, approximate=True)


def _decode_kernel(x_ref, gamma_ref, beta_ref, kq_ref,
                   wfo_ref, bfo_ref, wfc_ref, bfc_ref,
                   w2o_ref, b2o_ref, w2c_ref, b2c_ref,
                   tok_ref, conf_ref, h_ref):
    """Grid = (batch tiles, vocab tiles).

    vi == 0 : LayerNorm + two-head single-query attention + both FF hidden layers for this
              batch tile; the ff_out hidden activation is cached in `h_ref` (VMEM scratch)
              and the confidence output block is written.
    every vi: one (TILE_B, E) @ (E, TILE_V) logits matmul from the cached hidden.
    """
    vi = pl.program_id(1)

    @pl.when(vi == 0)
    def _attention_and_heads():
        x = x_ref[...]                                           # (TB, T, E) f32
        # LayerNorm over E (keep all elementwise math f32 — v5e has no bf16 VPU/EUP).
        mean = jnp.mean(x, axis=-1, keepdims=True)
        cent = x - mean
        var = jnp.mean(cent * cent, axis=-1, keepdims=True)
        xn = cent * jax.lax.rsqrt(var + LN_EPS)
        xn = xn * gamma_ref[...] + beta_ref[...]                 # (TB, T, E)

        # Single-query attention, algebraically rewritten:
        #   scores_h = xn @ kq_h          (kq_h = Wk_h @ q_h / sqrt(E), precomputed)
        #   pooled_h = sum_t softmax(scores_h)_t * xn_t
        # VPU multiply + lane reduce; K and V tiles never materialize.
        def pooled(head):
            s = jnp.sum(xn * kq_ref[head:head + 1, :],
                        axis=-1, keepdims=True)                  # (TB, T, 1)
            m = jnp.max(s, axis=1, keepdims=True)                # (TB, 1, 1)
            e = jnp.exp(s - m)
            p = e / jnp.sum(e, axis=1, keepdims=True)            # softmax over T
            return jnp.sum(p * xn, axis=1)                       # (TB, E)

        pooled_out = pooled(0)
        pooled_halt = pooled(1)

        # Fused (Wv @ W1) head projections + activation, f32 MXU accumulation.
        h = _act(jnp.dot(pooled_out, wfo_ref[...],
                         preferred_element_type=jnp.float32) + bfo_ref[...])
        h_ref[...] = h                                           # cache for all V tiles

        hc = _act(jnp.dot(pooled_halt, wfc_ref[...],
                          preferred_element_type=jnp.float32) + bfc_ref[...])
        # Confidence: VPU multiply + lane reduce (no (E,1) MXU matmul); one
        # (TILE_B, 1) store per batch tile instead of per-step scalars.
        conf_ref[...] = (jnp.sum(hc * w2c_ref[...], axis=-1, keepdims=True)
                         + b2c_ref[...])

    # Vocab tile: (TILE_B, E) @ (E, TILE_V) -> lane-dense (TILE_B, TILE_V) store.
    tok_ref[...] = (jnp.dot(h_ref[...], w2o_ref[...],
                            preferred_element_type=jnp.float32) + b2o_ref[...])


def _build_decode_call(B, T, E, V, tile_b, tile_v, single_buffer_weights):
    nb, nv = B // tile_b, V // tile_v

    def const_spec(shape):
        zeros = (0,) * len(shape)
        if single_buffer_weights:
            # Constant-index weights: double-buffering is pure VMEM waste (matters most
            # on v7x's 64 MiB VMEM).
            return pl.BlockSpec(shape, lambda bi, vi: zeros,
                                pipeline_mode=pl.Buffered(1))
        return pl.BlockSpec(shape, lambda bi, vi: zeros)

    grid_spec = pltpu.PrefetchScalarGridSpec(
        num_scalar_prefetch=0,
        grid=(nb, nv),
        in_specs=[
            pl.BlockSpec((tile_b, T, E), lambda bi, vi: (bi, 0, 0)),   # internal
            const_spec((1, E)),            # gamma
            const_spec((1, E)),            # beta
            const_spec((2, E)),            # kq   (row h = Wk_h @ q_h / sqrt(E))
            const_spec((E, E)),            # wfo  = Wv_out  @ W1_out
            const_spec((1, E)),            # bfo
            const_spec((E, E)),            # wfc  = Wv_halt @ W1_conf
            const_spec((1, E)),            # bfc
            pl.BlockSpec((E, tile_v), lambda bi, vi: (0, vi)),         # w2o tile
            pl.BlockSpec((1, tile_v), lambda bi, vi: (0, vi)),         # b2o tile
            const_spec((1, E)),            # w2c (row)
            const_spec((1, 1)),            # b2c
        ],
        out_specs=[
            pl.BlockSpec((tile_b, tile_v), lambda bi, vi: (bi, vi)),   # token logits
            pl.BlockSpec((tile_b, 1), lambda bi, vi: (bi, 0)),         # confidence
        ],
        scratch_shapes=[pltpu.VMEM((tile_b, E), jnp.float32)],         # cached hidden
    )
    return pl.pallas_call(
        _decode_kernel,
        out_shape=(jax.ShapeDtypeStruct((B, V), jnp.float32),
                   jax.ShapeDtypeStruct((B, 1), jnp.float32)),
        grid_spec=grid_spec,
        compiler_params=pltpu.CompilerParams(
            dimension_semantics=("parallel", "arbitrary")),
    )


def output_decode(internal, folded, *, tile_b=None, tile_v=None):
    """token_out (B, vocab), confidence (B,) from recurrent state (B, T, E)."""
    B, T, E = internal.shape
    V = folded["w2o"].shape[1]

    if tile_b is None:
        tile_b = B if B <= 128 else 128
    if tile_v is None:
        tile_v = V if V <= 512 else 512
    # At production sizes, pick tile_v so 2*E*tile_v*4B (double-buffered w2o tile) plus the
    # resident ExE weights stays well inside the scoped-VMEM budget (~32 MiB default;
    # v7x has only 64 MiB physical VMEM) — raise vmem_limit_bytes only if needed.
    assert B % tile_b == 0 and V % tile_v == 0
    assert tile_b == B or tile_b % 8 == 0
    assert tile_v == V or tile_v % 128 == 0

    args = (internal,
            folded["gamma"], folded["beta"], folded["kq"],
            folded["wfo"], folded["bfo"], folded["wfc"], folded["bfc"],
            folded["w2o"], folded["b2o"], folded["w2c"], folded["b2c"])
    try:
        tok, conf = _build_decode_call(B, T, E, V, tile_b, tile_v, True)(*args)
        jax.block_until_ready((tok, conf))
    except Exception:
        # pipeline_mode=pl.Buffered(1) not supported on this jax build — fall back to the
        # default (double-buffered) weight pipelining; everything else is unchanged.
        tok, conf = _build_decode_call(B, T, E, V, tile_b, tile_v, False)(*args)
    return tok, conf[:, 0]


def fold_params(p):
    """One-time exact algebraic folding of OutputDecode parameters.

    bko / bkh are intentionally absent: the key bias contributes a constant per-head shift
    to every attention score, which softmax ignores, so they cannot affect the output.
    """
    E = p["w1o"].shape[0]
    scale = 1.0 / math.sqrt(E)
    kq = jnp.stack([p["wko"] @ p["q"][0], p["wkh"] @ p["q"][1]], axis=0) * scale  # (2, E)
    wfo = p["wvo"] @ p["w1o"]
    bfo = p["bvo"] @ p["w1o"] + p["b1o"]
    wfc = p["wvh"] @ p["w1c"]
    bfc = p["bvh"] @ p["w1c"] + p["b1c"]
    return dict(gamma=p["gamma"], beta=p["beta"], kq=kq,
                wfo=wfo, bfo=bfo, wfc=wfc, bfc=bfc,
                w2o=p["w2o"], b2o=p["b2o"],
                w2c=p["w2c"].T,          # (1, E) row for the VPU mul + lane reduce
                b2c=p["b2c"])


def make_params(key, n_embed, vocab_size, qkv_bias=True):
    """Deterministic synthetic parameters matching OutputDecode.__init__ shapes."""
    E, V = n_embed, vocab_size
    ks = jax.random.split(key, 12)
    s = 1.0 / math.sqrt(E)  # ~ PyTorch Linear default scale
    normal = lambda k, shape, scale=1.0: scale * jax.random.normal(k, shape, jnp.float32)

    # kv_linear_* weights: PyTorch shape (2E, E); stored transposed & split into K / V halves.
    wkv_out = normal(ks[0], (E, 2 * E), s)
    bkv_out = normal(ks[1], (1, 2 * E), s) if qkv_bias else jnp.zeros((1, 2 * E), jnp.float32)
    wkv_halt = normal(ks[2], (E, 2 * E), s)
    bkv_halt = normal(ks[3], (1, 2 * E), s) if qkv_bias else jnp.zeros((1, 2 * E), jnp.float32)

    return dict(
        gamma=jnp.ones((1, E), jnp.float32),
        beta=jnp.zeros((1, E), jnp.float32),
        q=jnp.stack([jax.random.normal(ks[4], (E,), jnp.float32),
                     jax.random.normal(ks[5], (E,), jnp.float32)], axis=0),   # (2, E)
        wko=wkv_out[:, :E], bko=bkv_out[:, :E],
        wvo=wkv_out[:, E:], bvo=bkv_out[:, E:],
        wkh=wkv_halt[:, :E], bkh=bkv_halt[:, :E],
        wvh=wkv_halt[:, E:], bvh=bkv_halt[:, E:],
        w1o=normal(ks[6], (E, E), s), b1o=normal(ks[7], (1, E), s),
        w2o=normal(ks[8], (E, V), s), b2o=normal(ks[9], (1, V), s),
        w1c=normal(ks[10], (E, E), s), b1c=normal(ks[11], (1, E), s),
        w2c=normal(ks[0], (E, 1), s), b2c=jnp.zeros((1, 1), jnp.float32),
    )


def reference(internal, p):
    """Pure-JAX mirror of the PyTorch forward (unfused parameters) for validation."""
    E = internal.shape[-1]
    mean = internal.mean(-1, keepdims=True)
    var = ((internal - mean) ** 2).mean(-1, keepdims=True)
    xn = (internal - mean) / jnp.sqrt(var + LN_EPS) * p["gamma"][0] + p["beta"][0]

    def attend(wk, bk, wv, bv, q):
        k = xn @ wk + bk[0]
        v = xn @ wv + bv[0]
        s = jnp.einsum("bte,e->bt", k, q) / math.sqrt(E)
        w = jax.nn.softmax(s, axis=-1)
        return jnp.einsum("bt,bte->be", w, v)

    a_o = attend(p["wko"], p["bko"], p["wvo"], p["bvo"], p["q"][0])
    a_h = attend(p["wkh"], p["bkh"], p["wvh"], p["bvh"], p["q"][1])
    tok = _act(a_o @ p["w1o"] + p["b1o"][0]) @ p["w2o"] + p["b2o"][0]
    conf = (_act(a_h @ p["w1c"] + p["b1c"][0]) @ p["w2c"] + p["b2c"][0])[..., 0]
    return tok, conf


if __name__ == "__main__":
    # Small but lane-friendly shapes: E and V multiples of 128, TILE_B multiple of 8.
    B, T, E, V = 16, 8, 128, 512
    key = jax.random.PRNGKey(0)
    k_in, k_p = jax.random.split(key)
    internal = jax.random.normal(k_in, (B, T, E), jnp.float32)
    params = make_params(k_p, n_embed=E, vocab_size=V, qkv_bias=True)
    folded = fold_params(params)

    # tile_b=8, tile_v=256 -> grid (2, 2): exercises both the batch and vocab tiling.
    tok, conf = jax.block_until_ready(
        output_decode(internal, folded, tile_b=8, tile_v=256))
    tok_ref, conf_ref = reference(internal, params)

    assert tok.shape == (B, V) and conf.shape == (B,)
    assert jnp.allclose(tok, tok_ref, rtol=2e-3, atol=2e-3), \
        float(jnp.max(jnp.abs(tok - tok_ref)))
    assert jnp.allclose(conf, conf_ref, rtol=2e-3, atol=2e-3), \
        float(jnp.max(jnp.abs(conf - conf_ref)))
    print("KERNEL_OK")
</pallas_src>

<mosaic_0001>
module attributes {stable_mosaic.version = 11 : i64} {
  func.func @_decode_kernel(%arg0: i32, %arg1: i32, %arg2: memref<8x8x128xf32, #tpu.memory_space<vmem>>, %arg3: memref<1x128xf32, #tpu.memory_space<vmem>>, %arg4: memref<1x128xf32, #tpu.memory_space<vmem>>, %arg5: memref<2x128xf32, #tpu.memory_space<vmem>>, %arg6: memref<128x128xf32, #tpu.memory_space<vmem>>, %arg7: memref<1x128xf32, #tpu.memory_space<vmem>>, %arg8: memref<128x128xf32, #tpu.memory_space<vmem>>, %arg9: memref<1x128xf32, #tpu.memory_space<vmem>>, %arg10: memref<128x256xf32, #tpu.memory_space<vmem>>, %arg11: memref<1x256xf32, #tpu.memory_space<vmem>>, %arg12: memref<1x128xf32, #tpu.memory_space<vmem>>, %arg13: memref<1x1xf32, #tpu.memory_space<vmem>>, %arg14: memref<8x256xf32, #tpu.memory_space<vmem>>, %arg15: memref<8x1xf32, #tpu.memory_space<vmem>>, %arg16: memref<8x128xf32, #tpu.memory_space<vmem>>) attributes {dimension_semantics = [#tpu.dimension_semantics<parallel>, #tpu.dimension_semantics<arbitrary>], iteration_bounds = array<i64: 2, 2>, scalar_prefetch = 0 : i64, scratch_operands = 1 : i64, tpu.core_type = #tpu.core_type<tc>, window_params = [{transform_indices = @transform_0, window_bounds = array<i64: 8, 8, 128>}, {pipeline_mode = #tpu.pipeline_mode<synchronous>, transform_indices = @transform_1, window_bounds = array<i64: 1, 128>}, {pipeline_mode = #tpu.pipeline_mode<synchronous>, transform_indices = @transform_2, window_bounds = array<i64: 1, 128>}, {pipeline_mode = #tpu.pipeline_mode<synchronous>, transform_indices = @transform_3, window_bounds = array<i64: 2, 128>}, {pipeline_mode = #tpu.pipeline_mode<synchronous>, transform_indices = @transform_4, window_bounds = array<i64: 128, 128>}, {pipeline_mode = #tpu.pipeline_mode<synchronous>, transform_indices = @transform_5, window_bounds = array<i64: 1, 128>}, {pipeline_mode = #tpu.pipeline_mode<synchronous>, transform_indices = @transform_6, window_bounds = array<i64: 128, 128>}, {pipeline_mode = #tpu.pipeline_mode<synchronous>, transform_indices = @transform_7, window_bounds = array<i64: 1, 128>}, {transform_indices = @transform_8, window_bounds = array<i64: 128, 256>}, {transform_indices = @transform_9, window_bounds = array<i64: 1, 256>}, {pipeline_mode = #tpu.pipeline_mode<synchronous>, transform_indices = @transform_10, window_bounds = array<i64: 1, 128>}, {pipeline_mode = #tpu.pipeline_mode<synchronous>, transform_indices = @transform_11, window_bounds = array<i64: 1, 1>}, {transform_indices = @transform_12, window_bounds = array<i64: 8, 256>}, {transform_indices = @transform_13, window_bounds = array<i64: 8, 1>}]} {
    %c0_i32 = arith.constant 0 : i32
    %0 = arith.cmpi eq, %arg1, %c0_i32 : i32
    %1 = arith.extui %0 : i1 to i32
    %c0_i32_0 = arith.constant 0 : i32
    %2 = arith.cmpi ne, %1, %c0_i32_0 : i32
    scf.if %2 {
      %c0_8 = arith.constant 0 : index
      %c0_9 = arith.constant 0 : index
      %c0_10 = arith.constant 0 : index
      %10 = vector.load %arg2[%c0_8, %c0_9, %c0_10] : memref<8x8x128xf32, #tpu.memory_space<vmem>>, vector<8x8x128xf32>
      %cst_11 = arith.constant dense<0.000000e+00> : vector<8x8xf32>
      %11 = vector.multi_reduction <add>, %10, %cst_11 [2] : vector<8x8x128xf32> to vector<8x8xf32>
      %12 = vector.shape_cast %11 : vector<8x8xf32> to vector<8x8x1xf32>
      %cst_12 = arith.constant 1.280000e+02 : f32
      %13 = vector.broadcast %cst_12 : f32 to vector<8x8x1xf32>
      %14 = arith.divf %12, %13 : vector<8x8x1xf32>
      %15 = vector.broadcast %14 : vector<8x8x1xf32> to vector<8x8x128xf32>
      %16 = arith.subf %10, %15 : vector<8x8x128xf32>
      %17 = arith.mulf %16, %16 : vector<8x8x128xf32>
      %cst_13 = arith.constant dense<0.000000e+00> : vector<8x8xf32>
      %18 = vector.multi_reduction <add>, %17, %cst_13 [2] : vector<8x8x128xf32> to vector<8x8xf32>
      %19 = vector.shape_cast %18 : vector<8x8xf32> to vector<8x8x1xf32>
      %cst_14 = arith.constant 1.280000e+02 : f32
      %20 = vector.broadcast %cst_14 : f32 to vector<8x8x1xf32>
      %21 = arith.divf %19, %20 : vector<8x8x1xf32>
      %cst_15 = arith.constant 9.99999974E-6 : f32
      %22 = vector.broadcast %cst_15 : f32 to vector<8x8x1xf32>
      %23 = arith.addf %21, %22 : vector<8x8x1xf32>
      %24 = math.rsqrt %23 : vector<8x8x1xf32>
      %25 = vector.broadcast %24 : vector<8x8x1xf32> to vector<8x8x128xf32>
      %26 = arith.mulf %16, %25 : vector<8x8x128xf32>
      %c0_16 = arith.constant 0 : index
      %c0_17 = arith.constant 0 : index
      %27 = vector.load %arg3[%c0_16, %c0_17] : memref<1x128xf32, #tpu.memory_space<vmem>>, vector<1x128xf32>
      %28 = vector.shape_cast %27 : vector<1x128xf32> to vector<1x1x128xf32>
      %29 = vector.broadcast %28 : vector<1x1x128xf32> to vector<8x8x128xf32>
      %30 = arith.mulf %26, %29 : vector<8x8x128xf32>
      %c0_18 = arith.constant 0 : index
      %c0_19 = arith.constant 0 : index
      %31 = vector.load %arg4[%c0_18, %c0_19] : memref<1x128xf32, #tpu.memory_space<vmem>>, vector<1x128xf32>
      %32 = vector.shape_cast %31 : vector<1x128xf32> to vector<1x1x128xf32>
      %33 = vector.broadcast %32 : vector<1x1x128xf32> to vector<8x8x128xf32>
      %34 = arith.addf %30, %33 : vector<8x8x128xf32>
      %c0_20 = arith.constant 0 : index
      %c0_21 = arith.constant 0 : index
      %35 = vector.load %arg5[%c0_20, %c0_21] : memref<2x128xf32, #tpu.memory_space<vmem>>, vector<1x128xf32>
      %36 = vector.shape_cast %35 : vector<1x128xf32> to vector<1x1x128xf32>
      %37 = vector.broadcast %36 : vector<1x1x128xf32> to vector<8x8x128xf32>
      %38 = arith.mulf %34, %37 : vector<8x8x128xf32>
      %cst_22 = arith.constant dense<0.000000e+00> : vector<8x8xf32>
      %39 = vector.multi_reduction <add>, %38, %cst_22 [2] : vector<8x8x128xf32> to vector<8x8xf32>
      %40 = vector.shape_cast %39 : vector<8x8xf32> to vector<8x8x1xf32>
      %cst_23 = arith.constant dense<0xFF800000> : vector<8x1xf32>
      %41 = vector.multi_reduction <maximumf>, %40, %cst_23 [1] : vector<8x8x1xf32> to vector<8x1xf32>
      %42 = vector.shape_cast %41 : vector<8x1xf32> to vector<8x1x1xf32>
      %43 = vector.broadcast %42 : vector<8x1x1xf32> to vector<8x8x1xf32>
      %44 = arith.subf %40, %43 : vector<8x8x1xf32>
      %45 = math.exp %44 : vector<8x8x1xf32>
      %cst_24 = arith.constant dense<0.000000e+00> : vector<8x1xf32>
      %46 = vector.multi_reduction <add>, %45, %cst_24 [1] : vector<8x8x1xf32> to vector<8x1xf32>
      %47 = vector.shape_cast %46 : vector<8x1xf32> to vector<8x1x1xf32>
      %48 = vector.broadcast %47 : vector<8x1x1xf32> to vector<8x8x1xf32>
      %49 = arith.divf %45, %48 : vector<8x8x1xf32>
      %50 = vector.broadcast %49 : vector<8x8x1xf32> to vector<8x8x128xf32>
      %51 = arith.mulf %50, %34 : vector<8x8x128xf32>
      %cst_25 = arith.constant dense<0.000000e+00> : vector<8x128xf32>
      %52 = vector.multi_reduction <add>, %51, %cst_25 [1] : vector<8x8x128xf32> to vector<8x128xf32>
      %c1 = arith.constant 1 : index
      %c0_26 = arith.constant 0 : index
      %53 = vector.load %arg5[%c1, %c0_26] : memref<2x128xf32, #tpu.memory_space<vmem>>, vector<1x128xf32>
      %54 = vector.shape_cast %53 : vector<1x128xf32> to vector<1x1x128xf32>
      %55 = vector.broadcast %54 : vector<1x1x128xf32> to vector<8x8x128xf32>
      %56 = arith.mulf %34, %55 : vector<8x8x128xf32>
      %cst_27 = arith.constant dense<0.000000e+00> : vector<8x8xf32>
      %57 = vector.multi_reduction <add>, %56, %cst_27 [2] : vector<8x8x128xf32> to vector<8x8xf32>
      %58 = vector.shape_cast %57 : vector<8x8xf32> to vector<8x8x1xf32>
      %cst_28 = arith.constant dense<0xFF800000> : vector<8x1xf32>
      %59 = vector.multi_reduction <maximumf>, %58, %cst_28 [1] : vector<8x8x1xf32> to vector<8x1xf32>
      %60 = vector.shape_cast %59 : vector<8x1xf32> to vector<8x1x1xf32>
      %61 = vector.broadcast %60 : vector<8x1x1xf32> to vector<8x8x1xf32>
      %62 = arith.subf %58, %61 : vector<8x8x1xf32>
      %63 = math.exp %62 : vector<8x8x1xf32>
      %cst_29 = arith.constant dense<0.000000e+00> : vector<8x1xf32>
      %64 = vector.multi_reduction <add>, %63, %cst_29 [1] : vector<8x8x1xf32> to vector<8x1xf32>
      %65 = vector.shape_cast %64 : vector<8x1xf32> to vector<8x1x1xf32>
      %66 = vector.broadcast %65 : vector<8x1x1xf32> to vector<8x8x1xf32>
      %67 = arith.divf %63, %66 : vector<8x8x1xf32>
      %68 = vector.broadcast %67 : vector<8x8x1xf32> to vector<8x8x128xf32>
      %69 = arith.mulf %68, %34 : vector<8x8x128xf32>
      %cst_30 = arith.constant dense<0.000000e+00> : vector<8x128xf32>
      %70 = vector.multi_reduction <add>, %69, %cst_30 [1] : vector<8x8x128xf32> to vector<8x128xf32>
      %c0_31 = arith.constant 0 : index
      %c0_32 = arith.constant 0 : index
      %71 = vector.load %arg6[%c0_31, %c0_32] : memref<128x128xf32, #tpu.memory_space<vmem>>, vector<128x128xf32>
      %cst_33 = arith.constant dense<0.000000e+00> : vector<8x128xf32>
      %72 = tpu.matmul %52, %71, %cst_33 {dimension_numbers = #tpu.dot_dimension_numbers<[1], [0], [0], [1], [0, 0, 1, 1], [], []>} : vector<8x128xf32>, vector<128x128xf32>, vector<8x128xf32> -> vector<8x128xf32>
      %c0_34 = arith.constant 0 : index
      %c0_35 = arith.constant 0 : index
      %73 = vector.load %arg7[%c0_34, %c0_35] : memref<1x128xf32, #tpu.memory_space<vmem>>, vector<1x128xf32>
      %74 = vector.broadcast %73 : vector<1x128xf32> to vector<8x128xf32>
      %75 = arith.addf %72, %74 : vector<8x128xf32>
      %76 = arith.mulf %75, %75 : vector<8x128xf32>
      %77 = arith.mulf %75, %76 : vector<8x128xf32>
      %cst_36 = arith.constant 4.471500e-02 : f32
      %78 = vector.broadcast %cst_36 : f32 to vector<8x128xf32>
      %79 = arith.mulf %78, %77 : vector<8x128xf32>
      %80 = arith.addf %75, %79 : vector<8x128xf32>
      %cst_37 = arith.constant 0.797884583 : f32
      %81 = vector.broadcast %cst_37 : f32 to vector<8x128xf32>
      %82 = arith.mulf %81, %80 : vector<8x128xf32>
      %83 = math.tanh %82 : vector<8x128xf32>
      %cst_38 = arith.constant 1.000000e+00 : f32
      %84 = vector.broadcast %cst_38 : f32 to vector<8x128xf32>
      %85 = arith.addf %84, %83 : vector<8x128xf32>
      %cst_39 = arith.constant 5.000000e-01 : f32
      %86 = vector.broadcast %cst_39 : f32 to vector<8x128xf32>
      %87 = arith.mulf %86, %85 : vector<8x128xf32>
      %88 = arith.mulf %75, %87 : vector<8x128xf32>
      %c0_40 = arith.constant 0 : index
      %c0_41 = arith.constant 0 : index
      %89 = vector.load %arg16[%c0_40, %c0_41] : memref<8x128xf32, #tpu.memory_space<vmem>>, vector<8x128xf32>
      tpu.vector_store %arg16[%c0_40, %c0_41], %88 {strides = array<i32>} : memref<8x128xf32, #tpu.memory_space<vmem>>, vector<8x128xf32>,
      %c0_42 = arith.constant 0 : index
      %c0_43 = arith.constant 0 : index
      %90 = vector.load %arg8[%c0_42, %c0_43] : memref<128x128xf32, #tpu.memory_space<vmem>>, vector<128x128xf32>
      %cst_44 = arith.constant dense<0.000000e+00> : vector<8x128xf32>
      %91 = tpu.matmul %70, %90, %cst_44 {dimension_numbers = #tpu.dot_dimension_numbers<[1], [0], [0], [1], [0, 0, 1, 1], [], []>} : vector<8x128xf32>, vector<128x128xf32>, vector<8x128xf32> -> vector<8x128xf32>
      %c0_45 = arith.constant 0 : index
      %c0_46 = arith.constant 0 : index
      %92 = vector.load %arg9[%c0_45, %c0_46] : memref<1x128xf32, #tpu.memory_space<vmem>>, vector<1x128xf32>
      %93 = vector.broadcast %92 : vector<1x128xf32> to vector<8x128xf32>
      %94 = arith.addf %91, %93 : vector<8x128xf32>
      %95 = arith.mulf %94, %94 : vector<8x128xf32>
      %96 = arith.mulf %94, %95 : vector<8x128xf32>
      %cst_47 = arith.constant 4.471500e-02 : f32
      %97 = vector.broadcast %cst_47 : f32 to vector<8x128xf32>
      %98 = arith.mulf %97, %96 : vector<8x128xf32>
      %99 = arith.addf %94, %98 : vector<8x128xf32>
      %cst_48 = arith.constant 0.797884583 : f32
      %100 = vector.broadcast %cst_48 : f32 to vector<8x128xf32>
      %101 = arith.mulf %100, %99 : vector<8x128xf32>
      %102 = math.tanh %101 : vector<8x128xf32>
      %cst_49 = arith.constant 1.000000e+00 : f32
      %103 = vector.broadcast %cst_49 : f32 to vector<8x128xf32>
      %104 = arith.addf %103, %102 : vector<8x128xf32>
      %cst_50 = arith.constant 5.000000e-01 : f32
      %105 = vector.broadcast %cst_50 : f32 to vector<8x128xf32>
      %106 = arith.mulf %105, %104 : vector<8x128xf32>
      %107 = arith.mulf %94, %106 : vector<8x128xf32>
      %c0_51 = arith.constant 0 : index
      %c0_52 = arith.constant 0 : index
      %108 = vector.load %arg12[%c0_51, %c0_52] : memref<1x128xf32, #tpu.memory_space<vmem>>, vector<1x128xf32>
      %109 = vector.broadcast %108 : vector<1x128xf32> to vector<8x128xf32>
      %110 = arith.mulf %107, %109 : vector<8x128xf32>
      %cst_53 = arith.constant dense<0.000000e+00> : vector<8xf32>
      %111 = vector.multi_reduction <add>, %110, %cst_53 [1] : vector<8x128xf32> to vector<8xf32>
      %112 = vector.shape_cast %111 : vector<8xf32> to vector<8x1xf32>
      %c0_54 = arith.constant 0 : index
      %c0_55 = arith.constant 0 : index
      %113 = vector.load %arg13[%c0_54, %c0_55] : memref<1x1xf32, #tpu.memory_space<vmem>>, vector<1x1xf32>
      %114 = vector.broadcast %113 : vector<1x1xf32> to vector<8x1xf32>
      %115 = arith.addf %112, %114 : vector<8x1xf32>
      %c0_56 = arith.constant 0 : index
      %c0_57 = arith.constant 0 : index
      %116 = vector.load %arg15[%c0_56, %c0_57] : memref<8x1xf32, #tpu.memory_space<vmem>>, vector<8x1xf32>
      tpu.vector_store %arg15[%c0_56, %c0_57], %115 {strides = array<i32>} : memref<8x1xf32, #tpu.memory_space<vmem>>, vector<8x1xf32>,
    } else {
    }
    %c0 = arith.constant 0 : index
    %c0_1 = arith.constant 0 : index
    %3 = vector.load %arg16[%c0, %c0_1] : memref<8x128xf32, #tpu.memory_space<vmem>>, vector<8x128xf32>
    %c0_2 = arith.constant 0 : index
    %c0_3 = arith.constant 0 : index
    %4 = vector.load %arg10[%c0_2, %c0_3] : memref<128x256xf32, #tpu.memory_space<vmem>>, vector<128x256xf32>
    %cst = arith.constant dense<0.000000e+00> : vector<8x256xf32>
    %5 = tpu.matmul %3, %4, %cst {dimension_numbers = #tpu.dot_dimension_numbers<[1], [0], [0], [1], [0, 0, 1, 1], [], []>} : vector<8x128xf32>, vector<128x256xf32>, vector<8x256xf32> -> vector<8x256xf32>
    %c0_4 = arith.constant 0 : index
    %c0_5 = arith.constant 0 : index
    %6 = vector.load %arg11[%c0_4, %c0_5] : memref<1x256xf32, #tpu.memory_space<vmem>>, vector<1x256xf32>
    %7 = vector.broadcast %6 : vector<1x256xf32> to vector<8x256xf32>
    %8 = arith.addf %5, %7 : vector<8x256xf32>
    %c0_6 = arith.constant 0 : index
    %c0_7 = arith.constant 0 : index
    %9 = vector.load %arg14[%c0_6, %c0_7] : memref<8x256xf32, #tpu.memory_space<vmem>>, vector<8x256xf32>
    tpu.vector_store %arg14[%c0_6, %c0_7], %8 {strides = array<i32>} : memref<8x256xf32, #tpu.memory_space<vmem>>, vector<8x256xf32>,
    return
  }
  func.func @transform_0(%arg0: i32, %arg1: i32) -> (i32, i32, i32) {
    %c0_i32 = arith.constant 0 : i32
    %c0_i32_0 = arith.constant 0 : i32
    %c0_i32_1 = arith.constant 0 : i32
    return %arg0, %c0_i32, %c0_i32_0 : i32, i32, i32
  }
  func.func @transform_1(%arg0: i32, %arg1: i32) -> (i32, i32) {
    %c0_i32 = arith.constant 0 : i32
    %c0_i32_0 = arith.constant 0 : i32
    %c0_i32_1 = arith.constant 0 : i32
    return %c0_i32, %c0_i32_0 : i32, i32
  }
  func.func @transform_2(%arg0: i32, %arg1: i32) -> (i32, i32) {
    %c0_i32 = arith.constant 0 : i32
    %c0_i32_0 = arith.constant 0 : i32
    %c0_i32_1 = arith.constant 0 : i32
    return %c0_i32, %c0_i32_0 : i32, i32
  }
  func.func @transform_3(%arg0: i32, %arg1: i32) -> (i32, i32) {
    %c0_i32 = arith.constant 0 : i32
    %c0_i32_0 = arith.constant 0 : i32
    %c0_i32_1 = arith.constant 0 : i32
    return %c0_i32, %c0_i32_0 : i32, i32
  }
  func.func @transform_4(%arg0: i32, %arg1: i32) -> (i32, i32) {
    %c0_i32 = arith.constant 0 : i32
    %c0_i32_0 = arith.constant 0 : i32
    %c0_i32_1 = arith.constant 0 : i32
    return %c0_i32, %c0_i32_0 : i32, i32
  }
  func.func @transform_5(%arg0: i32, %arg1: i32) -> (i32, i32) {
    %c0_i32 = arith.constant 0 : i32
    %c0_i32_0 = arith.constant 0 : i32
    %c0_i32_1 = arith.constant 0 : i32
    return %c0_i32, %c0_i32_0 : i32, i32
  }
  func.func @transform_6(%arg0: i32, %arg1: i32) -> (i32, i32) {
    %c0_i32 = arith.constant 0 : i32
    %c0_i32_0 = arith.constant 0 : i32
    %c0_i32_1 = arith.constant 0 : i32
    return %c0_i32, %c0_i32_0 : i32, i32
  }
  func.func @transform_7(%arg0: i32, %arg1: i32) -> (i32, i32) {
    %c0_i32 = arith.constant 0 : i32
    %c0_i32_0 = arith.constant 0 : i32
    %c0_i32_1 = arith.constant 0 : i32
    return %c0_i32, %c0_i32_0 : i32, i32
  }
  func.func @transform_8(%arg0: i32, %arg1: i32) -> (i32, i32) {
    %c0_i32 = arith.constant 0 : i32
    %c0_i32_0 = arith.constant 0 : i32
    return %c0_i32, %arg1 : i32, i32
  }
  func.func @transform_9(%arg0: i32, %arg1: i32) -> (i32, i32) {
    %c0_i32 = arith.constant 0 : i32
    %c0_i32_0 = arith.constant 0 : i32
    return %c0_i32, %arg1 : i32, i32
  }
  func.func @transform_10(%arg0: i32, %arg1: i32) -> (i32, i32) {
    %c0_i32 = arith.constant 0 : i32
    %c0_i32_0 = arith.constant 0 : i32
    %c0_i32_1 = arith.constant 0 : i32
    return %c0_i32, %c0_i32_0 : i32, i32
  }
  func.func @transform_11(%arg0: i32, %arg1: i32) -> (i32, i32) {
    %c0_i32 = arith.constant 0 : i32
    %c0_i32_0 = arith.constant 0 : i32
    %c0_i32_1 = arith.constant 0 : i32
    return %c0_i32, %c0_i32_0 : i32, i32
  }
  func.func @transform_12(%arg0: i32, %arg1: i32) -> (i32, i32) {
    %c0_i32 = arith.constant 0 : i32
    return %arg0, %arg1 : i32, i32
  }
  func.func @transform_13(%arg0: i32, %arg1: i32) -> (i32, i32) {
    %c0_i32 = arith.constant 0 : i32
    %c0_i32_0 = arith.constant 0 : i32
    return %arg0, %c0_i32 : i32, i32
  }
}

module attributes {stable_mosaic.version = 11 : i64} {
  func.func @_decode_kernel(%arg0: i32, %arg1: i32, %arg2: memref<8x8x128xf32, #tpu.memory_space<vmem>>, %arg3: memref<1x128xf32, #tpu.memory_space<vmem>>, %arg4: memref<1x128xf32, #tpu.memory_space<vmem>>, %arg5: memref<2x128xf32, #tpu.memory_space<vmem>>, %arg6: memref<128x128xf32, #tpu.memory_space<vmem>>, %arg7: memref<1x128xf32, #tpu.memory_space<vmem>>, %arg8: memref<128x128xf32, #tpu.memory_space<vmem>>, %arg9: memref<1x128xf32, #tpu.memory_space<vmem>>, %arg10: memref<128x256xf32, #tpu.memory_space<vmem>>, %arg11: memref<1x256xf32, #tpu.memory_space<vmem>>, %arg12: memref<1x128xf32, #tpu.memory_space<vmem>>, %arg13: memref<1x1xf32, #tpu.memory_space<vmem>>, %arg14: memref<8x256xf32, #tpu.memory_space<vmem>>, %arg15: memref<8x1xf32, #tpu.memory_space<vmem>>, %arg16: memref<8x128xf32, #tpu.memory_space<vmem>>) attributes {dimension_semantics = [#tpu.dimension_semantics<parallel>, #tpu.dimension_semantics<arbitrary>], iteration_bounds = array<i64: 2, 2>, scalar_prefetch = 0 : i64, scratch_operands = 1 : i64, tpu.core_type = #tpu.core_type<tc>, window_params = [{transform_indices = @transform_0, window_bounds = array<i64: 8, 8, 128>}, {pipeline_mode = #tpu.pipeline_mode<synchronous>, transform_indices = @transform_1, window_bounds = array<i64: 1, 128>}, {pipeline_mode = #tpu.pipeline_mode<synchronous>, transform_indices = @transform_2, window_bounds = array<i64: 1, 128>}, {pipeline_mode = #tpu.pipeline_mode<synchronous>, transform_indices = @transform_3, window_bounds = array<i64: 2, 128>}, {pipeline_mode = #tpu.pipeline_mode<synchronous>, transform_indices = @transform_4, window_bounds = array<i64: 128, 128>}, {pipeline_mode = #tpu.pipeline_mode<synchronous>, transform_indices = @transform_5, window_bounds = array<i64: 1, 128>}, {pipeline_mode = #tpu.pipeline_mode<synchronous>, transform_indices = @transform_6, window_bounds = array<i64: 128, 128>}, {pipeline_mode = #tpu.pipeline_mode<synchronous>, transform_indices = @transform_7, window_bounds = array<i64: 1, 128>}, {transform_indices = @transform_8, window_bounds = array<i64: 128, 256>}, {transform_indices = @transform_9, window_bounds = array<i64: 1, 256>}, {pipeline_mode = #tpu.pipeline_mode<synchronous>, transform_indices = @transform_10, window_bounds = array<i64: 1, 128>}, {pipeline_mode = #tpu.pipeline_mode<synchronous>, transform_indices = @transform_11, window_bounds = array<i64: 1, 1>}, {transform_indices = @transform_12, window_bounds = array<i64: 8, 256>}, {transform_indices = @transform_13, window_bounds = array<i64: 8, 1>}]} {
    %c0_i32 = arith.constant 0 : i32
    %0 = arith.cmpi eq, %arg1, %c0_i32 : i32
    %1 = arith.extui %0 : i1 to i32
    %c0_i32_0 = arith.constant 0 : i32
    %2 = arith.cmpi ne, %1, %c0_i32_0 : i32
    scf.if %2 {
      %c0_8 = arith.constant 0 : index
      %c0_9 = arith.constant 0 : index
      %c0_10 = arith.constant 0 : index
      %10 = vector.load %arg2[%c0_8, %c0_9, %c0_10] : memref<8x8x128xf32, #tpu.memory_space<vmem>>, vector<8x8x128xf32>
      %cst_11 = arith.constant dense<0.000000e+00> : vector<8x8xf32>
      %11 = vector.multi_reduction <add>, %10, %cst_11 [2] : vector<8x8x128xf32> to vector<8x8xf32>
      %12 = vector.shape_cast %11 : vector<8x8xf32> to vector<8x8x1xf32>
      %cst_12 = arith.constant 1.280000e+02 : f32
      %13 = vector.broadcast %cst_12 : f32 to vector<8x8x1xf32>
      %14 = arith.divf %12, %13 : vector<8x8x1xf32>
      %15 = vector.broadcast %14 : vector<8x8x1xf32> to vector<8x8x128xf32>
      %16 = arith.subf %10, %15 : vector<8x8x128xf32>
      %17 = arith.mulf %16, %16 : vector<8x8x128xf32>
      %cst_13 = arith.constant dense<0.000000e+00> : vector<8x8xf32>
      %18 = vector.multi_reduction <add>, %17, %cst_13 [2] : vector<8x8x128xf32> to vector<8x8xf32>
      %19 = vector.shape_cast %18 : vector<8x8xf32> to vector<8x8x1xf32>
      %cst_14 = arith.constant 1.280000e+02 : f32
      %20 = vector.broadcast %cst_14 : f32 to vector<8x8x1xf32>
      %21 = arith.divf %19, %20 : vector<8x8x1xf32>
      %cst_15 = arith.constant 9.99999974E-6 : f32
      %22 = vector.broadcast %cst_15 : f32 to vector<8x8x1xf32>
      %23 = arith.addf %21, %22 : vector<8x8x1xf32>
      %24 = math.rsqrt %23 : vector<8x8x1xf32>
      %25 = vector.broadcast %24 : vector<8x8x1xf32> to vector<8x8x128xf32>
      %26 = arith.mulf %16, %25 : vector<8x8x128xf32>
      %c0_16 = arith.constant 0 : index
      %c0_17 = arith.constant 0 : index
      %27 = vector.load %arg3[%c0_16, %c0_17] : memref<1x128xf32, #tpu.memory_space<vmem>>, vector<1x128xf32>
      %28 = vector.shape_cast %27 : vector<1x128xf32> to vector<1x1x128xf32>
      %29 = vector.broadcast %28 : vector<1x1x128xf32> to vector<8x8x128xf32>
      %30 = arith.mulf %26, %29 : vector<8x8x128xf32>
      %c0_18 = arith.constant 0 : index
      %c0_19 = arith.constant 0 : index
      %31 = vector.load %arg4[%c0_18, %c0_19] : memref<1x128xf32, #tpu.memory_space<vmem>>, vector<1x128xf32>
      %32 = vector.shape_cast %31 : vector<1x128xf32> to vector<1x1x128xf32>
      %33 = vector.broadcast %32 : vector<1x1x128xf32> to vector<8x8x128xf32>
      %34 = arith.addf %30, %33 : vector<8x8x128xf32>
      %c0_20 = arith.constant 0 : index
      %c0_21 = arith.constant 0 : index
      %35 = vector.load %arg5[%c0_20, %c0_21] : memref<2x128xf32, #tpu.memory_space<vmem>>, vector<1x128xf32>
      %36 = vector.shape_cast %35 : vector<1x128xf32> to vector<1x1x128xf32>
      %37 = vector.broadcast %36 : vector<1x1x128xf32> to vector<8x8x128xf32>
      %38 = arith.mulf %34, %37 : vector<8x8x128xf32>
      %cst_22 = arith.constant dense<0.000000e+00> : vector<8x8xf32>
      %39 = vector.multi_reduction <add>, %38, %cst_22 [2] : vector<8x8x128xf32> to vector<8x8xf32>
      %40 = vector.shape_cast %39 : vector<8x8xf32> to vector<8x8x1xf32>
      %cst_23 = arith.constant dense<0xFF800000> : vector<8x1xf32>
      %41 = vector.multi_reduction <maximumf>, %40, %cst_23 [1] : vector<8x8x1xf32> to vector<8x1xf32>
      %42 = vector.shape_cast %41 : vector<8x1xf32> to vector<8x1x1xf32>
      %43 = vector.broadcast %42 : vector<8x1x1xf32> to vector<8x8x1xf32>
      %44 = arith.subf %40, %43 : vector<8x8x1xf32>
      %45 = math.exp %44 : vector<8x8x1xf32>
      %cst_24 = arith.constant dense<0.000000e+00> : vector<8x1xf32>
      %46 = vector.multi_reduction <add>, %45, %cst_24 [1] : vector<8x8x1xf32> to vector<8x1xf32>
      %47 = vector.shape_cast %46 : vector<8x1xf32> to vector<8x1x1xf32>
      %48 = vector.broadcast %47 : vector<8x1x1xf32> to vector<8x8x1xf32>
      %49 = arith.divf %45, %48 : vector<8x8x1xf32>
      %50 = vector.broadcast %49 : vector<8x8x1xf32> to vector<8x8x128xf32>
      %51 = arith.mulf %50, %34 : vector<8x8x128xf32>
      %cst_25 = arith.constant dense<0.000000e+00> : vector<8x128xf32>
      %52 = vector.multi_reduction <add>, %51, %cst_25 [1] : vector<8x8x128xf32> to vector<8x128xf32>
      %c1 = arith.constant 1 : index
      %c0_26 = arith.constant 0 : index
      %53 = vector.load %arg5[%c1, %c0_26] : memref<2x128xf32, #tpu.memory_space<vmem>>, vector<1x128xf32>
      %54 = vector.shape_cast %53 : vector<1x128xf32> to vector<1x1x128xf32>
      %55 = vector.broadcast %54 : vector<1x1x128xf32> to vector<8x8x128xf32>
      %56 = arith.mulf %34, %55 : vector<8x8x128xf32>
      %cst_27 = arith.constant dense<0.000000e+00> : vector<8x8xf32>
      %57 = vector.multi_reduction <add>, %56, %cst_27 [2] : vector<8x8x128xf32> to vector<8x8xf32>
      %58 = vector.shape_cast %57 : vector<8x8xf32> to vector<8x8x1xf32>
      %cst_28 = arith.constant dense<0xFF800000> : vector<8x1xf32>
      %59 = vector.multi_reduction <maximumf>, %58, %cst_28 [1] : vector<8x8x1xf32> to vector<8x1xf32>
      %60 = vector.shape_cast %59 : vector<8x1xf32> to vector<8x1x1xf32>
      %61 = vector.broadcast %60 : vector<8x1x1xf32> to vector<8x8x1xf32>
      %62 = arith.subf %58, %61 : vector<8x8x1xf32>
      %63 = math.exp %62 : vector<8x8x1xf32>
      %cst_29 = arith.constant dense<0.000000e+00> : vector<8x1xf32>
      %64 = vector.multi_reduction <add>, %63, %cst_29 [1] : vector<8x8x1xf32> to vector<8x1xf32>
      %65 = vector.shape_cast %64 : vector<8x1xf32> to vector<8x1x1xf32>
      %66 = vector.broadcast %65 : vector<8x1x1xf32> to vector<8x8x1xf32>
      %67 = arith.divf %63, %66 : vector<8x8x1xf32>
      %68 = vector.broadcast %67 : vector<8x8x1xf32> to vector<8x8x128xf32>
      %69 = arith.mulf %68, %34 : vector<8x8x128xf32>
      %cst_30 = arith.constant dense<0.000000e+00> : vector<8x128xf32>
      %70 = vector.multi_reduction <add>, %69, %cst_30 [1] : vector<8x8x128xf32> to vector<8x128xf32>
      %c0_31 = arith.constant 0 : index
      %c0_32 = arith.constant 0 : index
      %71 = vector.load %arg6[%c0_31, %c0_32] : memref<128x128xf32, #tpu.memory_space<vmem>>, vector<128x128xf32>
      %cst_33 = arith.constant dense<0.000000e+00> : vector<8x128xf32>
      %72 = tpu.matmul %52, %71, %cst_33 {dimension_numbers = #tpu.dot_dimension_numbers<[1], [0], [0], [1], [0, 0, 1, 1], [], []>} : vector<8x128xf32>, vector<128x128xf32>, vector<8x128xf32> -> vector<8x128xf32>
      %c0_34 = arith.constant 0 : index
      %c0_35 = arith.constant 0 : index
      %73 = vector.load %arg7[%c0_34, %c0_35] : memref<1x128xf32, #tpu.memory_space<vmem>>, vector<1x128xf32>
      %74 = vector.broadcast %73 : vector<1x128xf32> to vector<8x128xf32>
      %75 = arith.addf %72, %74 : vector<8x128xf32>
      %76 = arith.mulf %75, %75 : vector<8x128xf32>
      %77 = arith.mulf %75, %76 : vector<8x128xf32>
      %cst_36 = arith.constant 4.471500e-02 : f32
      %78 = vector.broadcast %cst_36 : f32 to vector<8x128xf32>
      %79 = arith.mulf %78, %77 : vector<8x128xf32>
      %80 = arith.addf %75, %79 : vector<8x128xf32>
      %cst_37 = arith.constant 0.797884583 : f32
      %81 = vector.broadcast %cst_37 : f32 to vector<8x128xf32>
      %82 = arith.mulf %81, %80 : vector<8x128xf32>
      %83 = math.tanh %82 : vector<8x128xf32>
      %cst_38 = arith.constant 1.000000e+00 : f32
      %84 = vector.broadcast %cst_38 : f32 to vector<8x128xf32>
      %85 = arith.addf %84, %83 : vector<8x128xf32>
      %cst_39 = arith.constant 5.000000e-01 : f32
      %86 = vector.broadcast %cst_39 : f32 to vector<8x128xf32>
      %87 = arith.mulf %86, %85 : vector<8x128xf32>
      %88 = arith.mulf %75, %87 : vector<8x128xf32>
      %c0_40 = arith.constant 0 : index
      %c0_41 = arith.constant 0 : index
      %89 = vector.load %arg16[%c0_40, %c0_41] : memref<8x128xf32, #tpu.memory_space<vmem>>, vector<8x128xf32>
      tpu.vector_store %arg16[%c0_40, %c0_41], %88 {strides = array<i32>} : memref<8x128xf32, #tpu.memory_space<vmem>>, vector<8x128xf32>,
      %c0_42 = arith.constant 0 : index
      %c0_43 = arith.constant 0 : index
      %90 = vector.load %arg8[%c0_42, %c0_43] : memref<128x128xf32, #tpu.memory_space<vmem>>, vector<128x128xf32>
      %cst_44 = arith.constant dense<0.000000e+00> : vector<8x128xf32>
      %91 = tpu.matmul %70, %90, %cst_44 {dimension_numbers = #tpu.dot_dimension_numbers<[1], [0], [0], [1], [0, 0, 1, 1], [], []>} : vector<8x128xf32>, vector<128x128xf32>, vector<8x128xf32> -> vector<8x128xf32>
      %c0_45 = arith.constant 0 : index
      %c0_46 = arith.constant 0 : index
      %92 = vector.load %arg9[%c0_45, %c0_46] : memref<1x128xf32, #tpu.memory_space<vmem>>, vector<1x128xf32>
      %93 = vector.broadcast %92 : vector<1x128xf32> to vector<8x128xf32>
      %94 = arith.addf %91, %93 : vector<8x128xf32>
      %95 = arith.mulf %94, %94 : vector<8x128xf32>
      %96 = arith.mulf %94, %95 : vector<8x128xf32>
      %cst_47 = arith.constant 4.471500e-02 : f32
      %97 = vector.broadcast %cst_47 : f32 to vector<8x128xf32>
      %98 = arith.mulf %97, %96 : vector<8x128xf32>
      %99 = arith.addf %94, %98 : vector<8x128xf32>
      %cst_48 = arith.constant 0.797884583 : f32
      %100 = vector.broadcast %cst_48 : f32 to vector<8x128xf32>
      %101 = arith.mulf %100, %99 : vector<8x128xf32>
      %102 = math.tanh %101 : vector<8x128xf32>
      %cst_49 = arith.constant 1.000000e+00 : f32
      %103 = vector.broadcast %cst_49 : f32 to vector<8x128xf32>
      %104 = arith.addf %103, %102 : vector<8x128xf32>
      %cst_50 = arith.constant 5.000000e-01 : f32
      %105 = vector.broadcast %cst_50 : f32 to vector<8x128xf32>
      %106 = arith.mulf %105, %104 : vector<8x128xf32>
      %107 = arith.mulf %94, %106 : vector<8x128xf32>
      %c0_51 = arith.constant 0 : index
      %c0_52 = arith.constant 0 : index
      %108 = vector.load %arg12[%c0_51, %c0_52] : memref<1x128xf32, #tpu.memory_space<vmem>>, vector<1x128xf32>
      %109 = vector.broadcast %108 : vector<1x128xf32> to vector<8x128xf32>
      %110 = arith.mulf %107, %109 : vector<8x128xf32>
      %cst_53 = arith.constant dense<0.000000e+00> : vector<8xf32>
      %111 = vector.multi_reduction <add>, %110, %cst_53 [1] : vector<8x128xf32> to vector<8xf32>
      %112 = vector.shape_cast %111 : vector<8xf32> to vector<8x1xf32>
      %c0_54 = arith.constant 0 : index
      %c0_55 = arith.constant 0 : index
      %113 = vector.load %arg13[%c0_54, %c0_55] : memref<1x1xf32, #tpu.memory_space<vmem>>, vector<1x1xf32>
      %114 = vector.broadcast %113 : vector<1x1xf32> to vector<8x1xf32>
      %115 = arith.addf %112, %114 : vector<8x1xf32>
      %c0_56 = arith.constant 0 : index
      %c0_57 = arith.constant 0 : index
      %116 = vector.load %arg15[%c0_56, %c0_57] : memref<8x1xf32, #tpu.memory_space<vmem>>, vector<8x1xf32>
      tpu.vector_store %arg15[%c0_56, %c0_57], %115 {strides = array<i32>} : memref<8x1xf32, #tpu.memory_space<vmem>>, vector<8x1xf32>,
    } else {
    }
    %c0 = arith.constant 0 : index
    %c0_1 = arith.constant 0 : index
    %3 = vector.load %arg16[%c0, %c0_1] : memref<8x128xf32, #tpu.memory_space<vmem>>, vector<8x128xf32>
    %c0_2 = arith.constant 0 : index
    %c0_3 = arith.constant 0 : index
    %4 = vector.load %arg10[%c0_2, %c0_3] : memref<128x256xf32, #tpu.memory_space<vmem>>, vector<128x256xf32>
    %cst = arith.constant dense<0.000000e+00> : vector<8x256xf32>
    %5 = tpu.matmul %3, %4, %cst {dimension_numbers = #tpu.dot_dimension_numbers<[1], [0], [0], [1], [0, 0, 1, 1], [], []>} : vector<8x128xf32>, vector<128x256xf32>, vector<8x256xf32> -> vector<8x256xf32>
    %c0_4 = arith.constant 0 : index
    %c0_5 = arith.constant 0 : index
    %6 = vector.load %arg11[%c0_4, %c0_5] : memref<1x256xf32, #tpu.memory_space<vmem>>, vector<1x256xf32>
    %7 = vector.broadcast %6 : vector<1x256xf32> to vector<8x256xf32>
    %8 = arith.addf %5, %7 : vector<8x256xf32>
    %c0_6 = arith.constant 0 : index
    %c0_7 = arith.constant 0 : index
    %9 = vector.load %arg14[%c0_6, %c0_7] : memref<8x256xf32, #tpu.memory_space<vmem>>, vector<8x256xf32>
    tpu.vector_store %arg14[%c0_6, %c0_7], %8 {strides = array<i32>} : memref<8x256xf32, #tpu.memory_space<vmem>>, vector<8x256xf32>,
    return
  }
  func.func @transform_0(%arg0: i32, %arg1: i32) -> (i32, i32, i32) {
    %c0_i32 = arith.constant 0 : i32
    %c0_i32_0 = arith.constant 0 : i32
    %c0_i32_1 = arith.constant 0 : i32
    return %arg0, %c0_i32, %c0_i32_0 : i32, i32, i32
  }
  func.func @transform_1(%arg0: i32, %arg1: i32) -> (i32, i32) {
    %c0_i32 = arith.constant 0 : i32
    %c0_i32_0 = arith.constant 0 : i32
    %c0_i32_1 = arith.constant 0 : i32
    return %c0_i32, %c0_i32_0 : i32, i32
  }
  func.func @transform_2(%arg0: i32, %arg1: i32) -> (i32, i32) {
    %c0_i32 = arith.constant 0 : i32
    %c0_i32_0 = arith.constant 0 : i32
    %c0_i32_1 = arith.constant 0 : i32
    return %c0_i32, %c0_i32_0 : i32, i32
  }
  func.func @transform_3(%arg0: i32, %arg1: i32) -> (i32, i32) {
    %c0_i32 = arith.constant 0 : i32
    %c0_i32_0 = arith.constant 0 : i32
    %c0_i32_1 = arith.constant 0 : i32
    return %c0_i32, %c0_i32_0 : i32, i32
  }
  func.func @transform_4(%arg0: i32, %arg1: i32) -> (i32, i32) {
    %c0_i32 = arith.constant 0 : i32
    %c0_i32_0 = arith.constant 0 : i32
    %c0_i32_1 = arith.constant 0 : i32
    return %c0_i32, %c0_i32_0 : i32, i32
  }
  func.func @transform_5(%arg0: i32, %arg1: i32) -> (i32, i32) {
    %c0_i32 = arith.constant 0 : i32
    %c0_i32_0 = arith.constant 0 : i32
    %c0_i32_1 = arith.constant 0 : i32
    return %c0_i32, %c0_i32_0 : i32, i32
  }
  func.func @transform_6(%arg0: i32, %arg1: i32) -> (i32, i32) {
    %c0_i32 = arith.constant 0 : i32
    %c0_i32_0 = arith.constant 0 : i32
    %c0_i32_1 = arith.constant 0 : i32
    return %c0_i32, %c0_i32_0 : i32, i32
  }
  func.func @transform_7(%arg0: i32, %arg1: i32) -> (i32, i32) {
    %c0_i32 = arith.constant 0 : i32
    %c0_i32_0 = arith.constant 0 : i32
    %c0_i32_1 = arith.constant 0 : i32
    return %c0_i32, %c0_i32_0 : i32, i32
  }
  func.func @transform_8(%arg0: i32, %arg1: i32) -> (i32, i32) {
    %c0_i32 = arith.constant 0 : i32
    %c0_i32_0 = arith.constant 0 : i32
    return %c0_i32, %arg1 : i32, i32
  }
  func.func @transform_9(%arg0: i32, %arg1: i32) -> (i32, i32) {
    %c0_i32 = arith.constant 0 : i32
    %c0_i32_0 = arith.constant 0 : i32
    return %c0_i32, %arg1 : i32, i32
  }
  func.func @transform_10(%arg0: i32, %arg1: i32) -> (i32, i32) {
    %c0_i32 = arith.constant 0 : i32
    %c0_i32_0 = arith.constant 0 : i32
    %c0_i32_1 = arith.constant 0 : i32
    return %c0_i32, %c0_i32_0 : i32, i32
  }
  func.func @transform_11(%arg0: i32, %arg1: i32) -> (i32, i32) {
    %c0_i32 = arith.constant 0 : i32
    %c0_i32_0 = arith.constant 0 : i32
    %c0_i32_1 = arith.constant 0 : i32
    return %c0_i32, %c0_i32_0 : i32, i32
  }
  func.func @transform_12(%arg0: i32, %arg1: i32) -> (i32, i32) {
    %c0_i32 = arith.constant 0 : i32
    return %arg0, %arg1 : i32, i32
  }
  func.func @transform_13(%arg0: i32, %arg1: i32) -> (i32, i32) {
    %c0_i32 = arith.constant 0 : i32
    %c0_i32_0 = arith.constant 0 : i32
    return %arg0, %c0_i32 : i32, i32
  }
}

</mosaic_0001>

<llo_original>
// kernel: tpu_custom_call.1
$region0: #{tpu_custom_call.1}
  #allocation0 [shape = 'u32[]', space=smem, size = 0x4, offset = 0x4, fixed_abs, tag = 'smem constant byte address 0x4 - core index']
  #allocation1 [shape = 'u32[144,128]{1,0:T(1,128)}', space=vmem, size = 0x12000, scoped, tag = 'internal scratch']
  #allocation2 [shape = 'f32[8,128]{1,0:T(8,128)}', space=vmem, size = 0x1000, scoped, tag = 'scratch operand']
  #allocation3 [shape = 'f32[1,1]{1,0:T(1,128)S(1)}', space=vmem, size = 0x200, scoped, tag = 'scoped memory for tpu_custom_call.1']
  %s0 = inlined_call_operand.hbm [shape: f32[16,8,128], index: 0, kind: input, shape index: {}]
  %s1 = inlined_call_operand.vmem [shape: f32[1,128], index: 1, kind: input, shape index: {}]
  %s2 = inlined_call_operand.vmem [shape: f32[1,128], index: 2, kind: input, shape index: {}]
  %s3 = inlined_call_operand.vmem [shape: f32[2,128], index: 3, kind: input, shape index: {}]
  %s4 = inlined_call_operand.hbm [shape: f32[128,128], index: 4, kind: input, shape index: {}]
  %s5 = inlined_call_operand.vmem [shape: f32[1,128], index: 5, kind: input, shape index: {}]
  %s6 = inlined_call_operand.hbm [shape: f32[128,128], index: 6, kind: input, shape index: {}]
  %s7 = inlined_call_operand.vmem [shape: f32[1,128], index: 7, kind: input, shape index: {}]
  %s8 = inlined_call_operand.hbm [shape: f32[128,512], index: 8, kind: input, shape index: {}]
  %s9 = inlined_call_operand.vmem [shape: f32[1,512], index: 9, kind: input, shape index: {}]
  %s10 = inlined_call_operand.vmem [shape: f32[1,128], index: 10, kind: input, shape index: {}]
  %s11 = inlined_call_operand.<no memory space> [shape: f32[1,1], index: 11, kind: input, shape index: {}]
  %s12 = inlined_call_operand.hbm [shape: f32[16,512], index: 12, kind: output, shape index: {0}]
  %s13 = inlined_call_operand.vmem [shape: f32[16,1], index: 13, kind: output, shape index: {1}]
  %14 = xla_tuple %s12, %s13
  %s15 = sld [smem:[#allocation0]]
  $region109: #{tpu_custom_call.1} parent=0
    _
  %s17 = ssub.s32 1, %s15
  %s18 = scalar_select 0, %s17, %s15
  %v19 = vstv %s11
  %20 = vst [vmem:[#allocation3] sm:$0x1] %v19
  $region1: #{tpu_custom_call.1} parent=0
    #allocation4 [shape = 'u8[65536]{0}', space=vmem, size = 0x10000, scoped, tag = 'input window, operand 0']
    #allocation5 [shape = 's32[2]{0}', space=sflag, size = 0x8, scoped, tag = 'scoped memory for tpu_custom_call.1']
    #allocation6 [shape = 's32[2]{0}', space=sflag, size = 0x8, scoped, tag = 'scoped memory for tpu_custom_call.1']
    #allocation7 [shape = 'u8[65536]{0}', space=vmem, size = 0x10000, scoped, tag = 'input window, operand 4, single buffered']
    #allocation8 [shape = 's32[1]{0}', space=sflag, size = 0x4, scoped, tag = 'scoped memory for tpu_custom_call.1']
    #allocation9 [shape = 'u8[65536]{0}', space=vmem, size = 0x10000, scoped, tag = 'input window, operand 6, single buffered']
    #allocation10 [shape = 'u8[262144]{0}', space=vmem, size = 0x40000, scoped, tag = 'input window, operand 8']
    #allocation11 [shape = 's32[2]{0}', space=sflag, size = 0x8, scoped, tag = 'scoped memory for tpu_custom_call.1']
    #allocation12 [shape = 'u8[16384]{0}', space=vmem, size = 0x4000, scoped, tag = 'output window, operand 0']
    %21 = vsyncpa [#allocation5], 0
    %s22 = scalar_lea.sflag [#allocation5], 1
    %23 = vsyncpa %s22, 0
    %24 = vsyncpa [#allocation8], 0
    %25 = vsyncpa [#allocation11], 0
    %s26 = scalar_lea.sflag [#allocation11], 1
    %27 = vsyncpa %s26, 0
    %28 = vsyncpa [#allocation6], 0
    %s29 = scalar_lea.sflag [#allocation6], 1
    %30 = vsyncpa %s29, 0
    loop: start=0, step=1, limit=6
    $region2: #{tpu_custom_call.1} parent=1 // loop_pre_header
      _
    $region3: #{tpu_custom_call.1} parent=1 // loop_header
      %s32 = sphi 0, %s36
      %p33 = scmp.ge.s32.totalorder %s32, 6
      %s39 = sphi 0, %s51
      %s40 = sphi 0, %s47
      %s41 = sphi 0, %s39
      %s42 = sphi 0, %s40
      %s43 = sphi 0, %s41
      %s44 = sphi 0, %s42
      %s54 = sphi 0, %s56
      %s57 = sphi 0, %s54
      %s58 = sphi 0, %s57
      %s74 = sphi 0, %s58
      %s78 = sphi 0, %s78
      %s80 = sphi 0, %s78
      %s81 = sphi 0, %s80
      %s95 = sphi 0, %s81
      %s99 = sphi 0, %s99
      %s101 = sphi 0, %s99
      %s102 = sphi 0, %s101
      %s116 = sphi 0, %s102
      %s120 = sphi 0, %s120
      %s122 = sphi 0, %s120
      %s123 = sphi 0, %s122
      %s137 = sphi 0, %s123
      %s141 = sphi 0, %s141
      %s143 = sphi 0, %s141
      %s144 = sphi 0, %s143
      %s158 = sphi 0, %s144
      %s162 = sphi 0, %s162
      %s164 = sphi 0, %s162
      %s165 = sphi 0, %s164
      %s179 = sphi 0, %s165
      %s183 = sphi 0, %s183
      %s185 = sphi 0, %s183
      %s186 = sphi 0, %s185
      %s200 = sphi 0, %s186
      %s204 = sphi 0, %s204
      %s206 = sphi 0, %s204
      %s207 = sphi 0, %s206
      %s221 = sphi 0, %s207
      %s227 = sphi 0, %s229
      %s230 = sphi 0, %s227
      %s231 = sphi 0, %s230
      %s247 = sphi 0, %s231
      %s253 = sphi 0, %s255
      %s256 = sphi 0, %s253
      %s257 = sphi 0, %s256
      %s273 = sphi 0, %s257
      %s277 = sphi 0, %s277
      %s279 = sphi 0, %s277
      %s280 = sphi 0, %s279
      %s294 = sphi 0, %s280
      %s298 = sphi 0, %s298
      %s300 = sphi 0, %s298
      %s301 = sphi 0, %s300
      %s315 = sphi 0, %s301
      %s323 = sphi 0, %s325
      %s326 = sphi 0, %s323
      %s327 = sphi 0, %s326
      %s343 = sphi 0, %s327
      %s349 = sphi 0, %s351
      %s352 = sphi 0, %s349
      %s353 = sphi 0, %s352
      %s369 = sphi 0, %s353
    $region4: #{tpu_custom_call.1} parent=1 // loop_header_branch
      %35 = sbr.rel (%p33) target = $region8
    $region5: #{tpu_custom_call.1} parent=1 // loop_body
      %s37 = ssub.s32 %s32, 1
      %s38 = ssub.s32 %s32, 2
      %s45 = sadd.s32 1, %s40
      %p46 = scmp.ge.s32.totalorder %s45, 2
      %s47 = scalar_select %p46, 0, %s45
      %s48 = sadd.s32 1, %s39
      %s49 = scalar_select %p46, %s48, %s39
      %p50 = scmp.ge.s32.totalorder %s49, 2
      %s51 = scalar_select %p50, 0, %s49
      %s52 = ssub.s32 %s39, %s51
      %p53 = scmp.eq.s32.totalorder %s52, 0
      %s55 = sadd.s32 %s54, 1
      %s56 = scalar_select %p53, %s54, %s55
      %p59 = pneg %p53
      %p60 = scmp.eq.s32.totalorder %s32, 3
      %p61 = por %p59, %p60
      %p62 = scmp.ne.s32.totalorder %s54, %s57
      %p63 = scmp.eq.s32.totalorder %s32, 0
      %p64 = por %p62, %p63
      %p65 = scmp.ne.s32.totalorder %s54, %s57
      %p66 = scmp.eq.s32.totalorder %s37, 3
      %p67 = por %p65, %p66
      %p68 = scmp.ne.s32.totalorder %s57, %s58
      %p69 = scmp.eq.s32.totalorder %s37, 0
      %p70 = por %p68, %p69
      %p71 = scmp.ne.s32.totalorder %s57, %s58
      %p72 = scmp.eq.s32.totalorder %s38, 3
      %p73 = por %p71, %p72
      %p75 = scmp.ne.s32.totalorder %s58, %s74
      %p76 = scmp.eq.s32.totalorder %s38, 0
      %p77 = por %p75, %p76
      %s79 = sadd.s32 %s78, 1
      %p82 = scmp.eq.s32.totalorder %s32, 3
      %p83 = scmp.ne.s32.totalorder %s78, %s80
      %p84 = scmp.eq.s32.totalorder %s32, 0
      %p85 = por %p83, %p84
      %p86 = scmp.ne.s32.totalorder %s78, %s80
      %p87 = scmp.eq.s32.totalorder %s37, 3
      %p88 = por %p86, %p87
      %p89 = scmp.ne.s32.totalorder %s80, %s81
      %p90 = scmp.eq.s32.totalorder %s37, 0
      %p91 = por %p89, %p90
      %p92 = scmp.ne.s32.totalorder %s80, %s81
      %p93 = scmp.eq.s32.totalorder %s38, 3
      %p94 = por %p92, %p93
      %p96 = scmp.ne.s32.totalorder %s81, %s95
      %p97 = scmp.eq.s32.totalorder %s38, 0
      %p98 = por %p96, %p97
      %s100 = sadd.s32 %s99, 1
      %p103 = scmp.eq.s32.totalorder %s32, 3
      %p104 = scmp.ne.s32.totalorder %s99, %s101
      %p105 = scmp.eq.s32.totalorder %s32, 0
      %p106 = por %p104, %p105
      %p107 = scmp.ne.s32.totalorder %s99, %s101
      %p108 = scmp.eq.s32.totalorder %s37, 3
      %p109 = por %p107, %p108
      %p110 = scmp.ne.s32.totalorder %s101, %s102
      %p111 = scmp.eq.s32.totalorder %s37, 0
      %p112 = por %p110, %p111
      %p113 = scmp.ne.s32.totalorder %s101, %s102
      %p114 = scmp.eq.s32.totalorder %s38, 3
      %p115 = por %p113, %p114
      %p117 = scmp.ne.s32.totalorder %s102, %s116
      %p118 = scmp.eq.s32.totalorder %s38, 0
      %p119 = por %p117, %p118
      %s121 = sadd.s32 %s120, 1
      %p124 = scmp.eq.s32.totalorder %s32, 3
      %p125 = scmp.ne.s32.totalorder %s120, %s122
      %p126 = scmp.eq.s32.totalorder %s32, 0
      %p127 = por %p125, %p126
      %p128 = scmp.ne.s32.totalorder %s120, %s122
      %p129 = scmp.eq.s32.totalorder %s37, 3
      %p130 = por %p128, %p129
      %p131 = scmp.ne.s32.totalorder %s122, %s123
      %p132 = scmp.eq.s32.totalorder %s37, 0
      %p133 = por %p131, %p132
      %p134 = scmp.ne.s32.totalorder %s122, %s123
      %p135 = scmp.eq.s32.totalorder %s38, 3
      %p136 = por %p134, %p135
      %p138 = scmp.ne.s32.totalorder %s123, %s137
      %p139 = scmp.eq.s32.totalorder %s38, 0
      %p140 = por %p138, %p139
      %s142 = sadd.s32 %s141, 1
      %p145 = scmp.eq.s32.totalorder %s32, 3
      %p146 = scmp.ne.s32.totalorder %s141, %s143
      %p147 = scmp.eq.s32.totalorder %s32, 0
      %p148 = por %p146, %p147
      %p149 = scmp.ne.s32.totalorder %s141, %s143
      %p150 = scmp.eq.s32.totalorder %s37, 3
      %p151 = por %p149, %p150
      %p152 = scmp.ne.s32.totalorder %s143, %s144
      %p153 = scmp.eq.s32.totalorder %s37, 0
      %p154 = por %p152, %p153
      %p155 = scmp.ne.s32.totalorder %s143, %s144
      %p156 = scmp.eq.s32.totalorder %s38, 3
      %p157 = por %p155, %p156
      %p159 = scmp.ne.s32.totalorder %s144, %s158
      %p160 = scmp.eq.s32.totalorder %s38, 0
      %p161 = por %p159, %p160
      %s163 = sadd.s32 %s162, 1
      %p166 = scmp.eq.s32.totalorder %s32, 3
      %p167 = scmp.ne.s32.totalorder %s162, %s164
      %p168 = scmp.eq.s32.totalorder %s32, 0
      %p169 = por %p167, %p168
      %p170 = scmp.ne.s32.totalorder %s162, %s164
      %p171 = scmp.eq.s32.totalorder %s37, 3
      %p172 = por %p170, %p171
      %p173 = scmp.ne.s32.totalorder %s164, %s165
      %p174 = scmp.eq.s32.totalorder %s37, 0
      %p175 = por %p173, %p174
      %p176 = scmp.ne.s32.totalorder %s164, %s165
      %p177 = scmp.eq.s32.totalorder %s38, 3
      %p178 = por %p176, %p177
      %p180 = scmp.ne.s32.totalorder %s165, %s179
      %p181 = scmp.eq.s32.totalorder %s38, 0
      %p182 = por %p180, %p181
      %s184 = sadd.s32 %s183, 1
      %p187 = scmp.eq.s32.totalorder %s32, 3
      %p188 = scmp.ne.s32.totalorder %s183, %s185
      %p189 = scmp.eq.s32.totalorder %s32, 0
      %p190 = por %p188, %p189
      %p191 = scmp.ne.s32.totalorder %s183, %s185
      %p192 = scmp.eq.s32.totalorder %s37, 3
      %p193 = por %p191, %p192
      %p194 = scmp.ne.s32.totalorder %s185, %s186
      %p195 = scmp.eq.s32.totalorder %s37, 0
      %p196 = por %p194, %p195
      %p197 = scmp.ne.s32.totalorder %s185, %s186
      %p198 = scmp.eq.s32.totalorder %s38, 3
      %p199 = por %p197, %p198
      %p201 = scmp.ne.s32.totalorder %s186, %s200
      %p202 = scmp.eq.s32.totalorder %s38, 0
      %p203 = por %p201, %p202
      %s205 = sadd.s32 %s204, 1
      %p208 = scmp.eq.s32.totalorder %s32, 3
      %p209 = scmp.ne.s32.totalorder %s204, %s206
      %p210 = scmp.eq.s32.totalorder %s32, 0
      %p211 = por %p209, %p210
      %p212 = scmp.ne.s32.totalorder %s204, %s206
      %p213 = scmp.eq.s32.totalorder %s37, 3
      %p214 = por %p212, %p213
      %p215 = scmp.ne.s32.totalorder %s206, %s207
      %p216 = scmp.eq.s32.totalorder %s37, 0
      %p217 = por %p215, %p216
      %p218 = scmp.ne.s32.totalorder %s206, %s207
      %p219 = scmp.eq.s32.totalorder %s38, 3
      %p220 = por %p218, %p219
      %p222 = scmp.ne.s32.totalorder %s207, %s221
      %p223 = scmp.eq.s32.totalorder %s38, 0
      %p224 = por %p222, %p223
      %s225 = ssub.s32 %s40, %s47
      %p226 = scmp.eq.s32.totalorder %s225, 0
      %s228 = sadd.s32 %s227, 1
      %s229 = scalar_select %p226, %s227, %s228
      %p232 = pneg %p226
      %p233 = scmp.eq.s32.totalorder %s32, 3
      %p234 = por %p232, %p233
      %p235 = scmp.ne.s32.totalorder %s227, %s230
      %p236 = scmp.eq.s32.totalorder %s32, 0
      %p237 = por %p235, %p236
      %p238 = scmp.ne.s32.totalorder %s227, %s230
      %p239 = scmp.eq.s32.totalorder %s37, 3
      %p240 = por %p238, %p239
      %p241 = scmp.ne.s32.totalorder %s230, %s231
      %p242 = scmp.eq.s32.totalorder %s37, 0
      %p243 = por %p241, %p242
      %p244 = scmp.ne.s32.totalorder %s230, %s231
      %p245 = scmp.eq.s32.totalorder %s38, 3
      %p246 = por %p244, %p245
      %p248 = scmp.ne.s32.totalorder %s231, %s247
      %p249 = scmp.eq.s32.totalorder %s38, 0
      %p250 = por %p248, %p249
      %s251 = ssub.s32 %s40, %s47
      %p252 = scmp.eq.s32.totalorder %s251, 0
      %s254 = sadd.s32 %s253, 1
      %s255 = scalar_select %p252, %s253, %s254
      %p258 = pneg %p252
      %p259 = scmp.eq.s32.totalorder %s32, 3
      %p260 = por %p258, %p259
      %p261 = scmp.ne.s32.totalorder %s253, %s256
      %p262 = scmp.eq.s32.totalorder %s32, 0
      %p263 = por %p261, %p262
      %p264 = scmp.ne.s32.totalorder %s253, %s256
      %p265 = scmp.eq.s32.totalorder %s37, 3
      %p266 = por %p264, %p265
      %p267 = scmp.ne.s32.totalorder %s256, %s257
      %p268 = scmp.eq.s32.totalorder %s37, 0
      %p269 = por %p267, %p268
      %p270 = scmp.ne.s32.totalorder %s256, %s257
      %p271 = scmp.eq.s32.totalorder %s38, 3
      %p272 = por %p270, %p271
      %p274 = scmp.ne.s32.totalorder %s257, %s273
      %p275 = scmp.eq.s32.totalorder %s38, 0
      %p276 = por %p274, %p275
      %s278 = sadd.s32 %s277, 1
      %p281 = scmp.eq.s32.totalorder %s32, 3
      %p282 = scmp.ne.s32.totalorder %s277, %s279
      %p283 = scmp.eq.s32.totalorder %s32, 0
      %p284 = por %p282, %p283
      %p285 = scmp.ne.s32.totalorder %s277, %s279
      %p286 = scmp.eq.s32.totalorder %s37, 3
      %p287 = por %p285, %p286
      %p288 = scmp.ne.s32.totalorder %s279, %s280
      %p289 = scmp.eq.s32.totalorder %s37, 0
      %p290 = por %p288, %p289
      %p291 = scmp.ne.s32.totalorder %s279, %s280
      %p292 = scmp.eq.s32.totalorder %s38, 3
      %p293 = por %p291, %p292
      %p295 = scmp.ne.s32.totalorder %s280, %s294
      %p296 = scmp.eq.s32.totalorder %s38, 0
      %p297 = por %p295, %p296
      %s299 = sadd.s32 %s298, 1
      %p302 = scmp.eq.s32.totalorder %s32, 3
      %p303 = scmp.ne.s32.totalorder %s298, %s300
      %p304 = scmp.eq.s32.totalorder %s32, 0
      %p305 = por %p303, %p304
      %p306 = scmp.ne.s32.totalorder %s298, %s300
      %p307 = scmp.eq.s32.totalorder %s37, 3
      %p308 = por %p306, %p307
      %p309 = scmp.ne.s32.totalorder %s300, %s301
      %p310 = scmp.eq.s32.totalorder %s37, 0
      %p311 = por %p309, %p310
      %p312 = scmp.ne.s32.totalorder %s300, %s301
      %p313 = scmp.eq.s32.totalorder %s38, 3
      %p314 = por %p312, %p313
      %p316 = scmp.ne.s32.totalorder %s301, %s315
      %p317 = scmp.eq.s32.totalorder %s38, 0
      %p318 = por %p316, %p317
      %s319 = ssub.s32 %s39, %s51
      %s320 = ssub.s32 %s40, %s47
      %s321 = sor.u32 %s319, %s320
      %p322 = scmp.eq.s32.totalorder %s321, 0
      %s324 = sadd.s32 %s323, 1
      %s325 = scalar_select %p322, %s323, %s324
      %p328 = pneg %p322
      %p329 = scmp.eq.s32.totalorder %s32, 3
      %p330 = por %p328, %p329
      %p331 = scmp.ne.s32.totalorder %s323, %s326
      %p332 = scmp.eq.s32.totalorder %s32, 0
      %p333 = por %p331, %p332
      %p334 = scmp.ne.s32.totalorder %s323, %s326
      %p335 = scmp.eq.s32.totalorder %s37, 3
      %p336 = por %p334, %p335
      %p337 = scmp.ne.s32.totalorder %s326, %s327
      %p338 = scmp.eq.s32.totalorder %s37, 0
      %p339 = por %p337, %p338
      %p340 = scmp.ne.s32.totalorder %s326, %s327
      %p341 = scmp.eq.s32.totalorder %s38, 3
      %p342 = por %p340, %p341
      %p344 = scmp.ne.s32.totalorder %s327, %s343
      %p345 = scmp.eq.s32.totalorder %s38, 0
      %p346 = por %p344, %p345
      %s347 = ssub.s32 %s39, %s51
      %p348 = scmp.eq.s32.totalorder %s347, 0
      %s350 = sadd.s32 %s349, 1
      %s351 = scalar_select %p348, %s349, %s350
      %p354 = pneg %p348
      %p355 = scmp.eq.s32.totalorder %s32, 3
      %p356 = por %p354, %p355
      %p357 = scmp.ne.s32.totalorder %s349, %s352
      %p358 = scmp.eq.s32.totalorder %s32, 0
      %p359 = por %p357, %p358
      %p360 = scmp.ne.s32.totalorder %s349, %s352
      %p361 = scmp.eq.s32.totalorder %s37, 3
      %p362 = por %p360, %p361
      %p363 = scmp.ne.s32.totalorder %s352, %s353
      %p364 = scmp.eq.s32.totalorder %s37, 0
      %p365 = por %p363, %p364
      %p366 = scmp.ne.s32.totalorder %s352, %s353
      %p367 = scmp.eq.s32.totalorder %s38, 3
      %p368 = por %p366, %p367
      %p370 = scmp.ne.s32.totalorder %s353, %s369
      %p371 = scmp.eq.s32.totalorder %s38, 0
      %p372 = por %p370, %p371
      %p373 = scmp.le.s32.totalorder 1, %s32
      %p374 = scmp.lt.s32.totalorder %s32, 5
      %p375 = pnand %p373, %p374
      %p376 = pneg %p375
      // Predicated region
      $region9: #{tpu_custom_call.1} parent=5 // pred_check
        _
      $region10: #{tpu_custom_call.1} parent=5 // pred_check_branch
        %378 = sbr.rel (%p375) target = $region12
      $region11: #{tpu_custom_call.1} parent=5 // pred_region
        %s379 = ssub.s32 %s32, 1
        // Predicated region
        $region13: #{tpu_custom_call.1} parent=11 // pred_check
          %p380 = pneg %p91
        $region14: #{tpu_custom_call.1} parent=11 // pred_check_branch
          %382 = sbr.rel (%p380) target = $region16
        $region15: #{tpu_custom_call.1} parent=11 // pred_region
          _
        $region16: #{tpu_custom_call.1} parent=11 // pred_fallthru
          _
        // Predicated region
        $region17: #{tpu_custom_call.1} parent=11 // pred_check
          %p383 = pneg %p112
        $region18: #{tpu_custom_call.1} parent=11 // pred_check_branch
          %385 = sbr.rel (%p383) target = $region20
        $region19: #{tpu_custom_call.1} parent=11 // pred_region
          _
        $region20: #{tpu_custom_call.1} parent=11 // pred_fallthru
          _
        // Predicated region
        $region21: #{tpu_custom_call.1} parent=11 // pred_check
          %p386 = pneg %p133
        $region22: #{tpu_custom_call.1} parent=11 // pred_check_branch
          %388 = sbr.rel (%p386) target = $region24
        $region23: #{tpu_custom_call.1} parent=11 // pred_region
          _
        $region24: #{tpu_custom_call.1} parent=11 // pred_fallthru
          _
        // Predicated region
        $region25: #{tpu_custom_call.1} parent=11 // pred_check
          %p389 = pneg %p154
        $region26: #{tpu_custom_call.1} parent=11 // pred_check_branch
          %391 = sbr.rel (%p389) target = $region28
        $region27: #{tpu_custom_call.1} parent=11 // pred_region
          %s393 = ssub.s32 2048, 2048
          %394 = vsyncadd [#allocation8], %s393
          %s395 = sshll.u32 [#allocation7], 4
          %s396 = int_to_ptr.vmem [resolvable:$true] %s395
          %401 = dma.hbm_to_vmem [thread:$0]  %s4, 2048, %s396, [#allocation8], 128, 128, 8
        $region28: #{tpu_custom_call.1} parent=11 // pred_fallthru
          _
        // Predicated region
        $region29: #{tpu_custom_call.1} parent=11 // pred_check
          %p402 = pneg %p175
        $region30: #{tpu_custom_call.1} parent=11 // pred_check_branch
          %404 = sbr.rel (%p402) target = $region32
        $region31: #{tpu_custom_call.1} parent=11 // pred_region
          _
        $region32: #{tpu_custom_call.1} parent=11 // pred_fallthru
          _
        // Predicated region
        $region33: #{tpu_custom_call.1} parent=11 // pred_check
          %p405 = pneg %p196
        $region34: #{tpu_custom_call.1} parent=11 // pred_check_branch
          %407 = sbr.rel (%p405) target = $region36
        $region35: #{tpu_custom_call.1} parent=11 // pred_region
          %s409 = ssub.s32 2048, 2048
          %410 = vsyncadd [#allocation8], %s409
          %s411 = sshll.u32 [#allocation9], 4
          %s412 = int_to_ptr.vmem [resolvable:$true] %s411
          %417 = dma.hbm_to_vmem [thread:$0]  %s6, 2048, %s412, [#allocation8], 128, 128, 8
        $region36: #{tpu_custom_call.1} parent=11 // pred_fallthru
          _
        // Predicated region
        $region37: #{tpu_custom_call.1} parent=11 // pred_check
          %p418 = pneg %p217
        $region38: #{tpu_custom_call.1} parent=11 // pred_check_branch
          %420 = sbr.rel (%p418) target = $region40
        $region39: #{tpu_custom_call.1} parent=11 // pred_region
          _
        $region40: #{tpu_custom_call.1} parent=11 // pred_fallthru
          _
        // Predicated region
        $region41: #{tpu_custom_call.1} parent=11 // pred_check
          %p421 = pneg %p290
        $region42: #{tpu_custom_call.1} parent=11 // pred_check_branch
          %423 = sbr.rel (%p421) target = $region44
        $region43: #{tpu_custom_call.1} parent=11 // pred_region
          _
        $region44: #{tpu_custom_call.1} parent=11 // pred_fallthru
          _
        // Predicated region
        $region45: #{tpu_custom_call.1} parent=11 // pred_check
          %p424 = pneg %p311
        $region46: #{tpu_custom_call.1} parent=11 // pred_check_branch
          %426 = sbr.rel (%p424) target = $region48
        $region47: #{tpu_custom_call.1} parent=11 // pred_region
          _
        $region48: #{tpu_custom_call.1} parent=11 // pred_fallthru
          _
      $region12: #{tpu_custom_call.1} parent=5 // pred_fallthru
        _
      %p427 = scmp.lt.s32.totalorder %s32, 4
      // Predicated region
      $region49: #{tpu_custom_call.1} parent=5 // pred_check
        %p428 = pneg %p427
      $region50: #{tpu_custom_call.1} parent=5 // pred_check_branch
        %430 = sbr.rel (%p428) target = $region52
      $region51: #{tpu_custom_call.1} parent=5 // pred_region
        // Predicated region
        $region53: #{tpu_custom_call.1} parent=51 // pred_check
          %p431 = pneg %p64
        $region54: #{tpu_custom_call.1} parent=51 // pred_check_branch
          %433 = sbr.rel (%p431) target = $region56
        $region55: #{tpu_custom_call.1} parent=51 // pred_region
          %s434 = sand.u32 %s54, 1
          %s435 = scalar_lea.sflag [#allocation5], %s434
          %s436 = sand.u32 %s54, 1
          %s437 = smul.addr %s436, 64
          %s438 = scalar_lea.vmem [#allocation4], %s437
          %s439 = smul.u32 8, %s39
          %s441 = ssub.s32 1024, 1024
          %442 = vsyncadd %s435, %s441
          %s443 = smul.addr %s439, 128
          %s444 = scalar_lea.hbm %s0, %s443
          %s445 = sshll.u32 %s438, 4
          %s446 = int_to_ptr.vmem [resolvable:$true] %s445
          %451 = dma.hbm_to_vmem [thread:$0]  %s444, 1024, %s446, %s435, 128, 128, 8
        $region56: #{tpu_custom_call.1} parent=51 // pred_fallthru
          _
        // Predicated region
        $region57: #{tpu_custom_call.1} parent=51 // pred_check
          %p452 = pneg %p237
        $region58: #{tpu_custom_call.1} parent=51 // pred_check_branch
          %454 = sbr.rel (%p452) target = $region60
        $region59: #{tpu_custom_call.1} parent=51 // pred_region
          %s455 = sand.u32 %s227, 1
          %s456 = scalar_lea.sflag [#allocation11], %s455
          %s457 = sand.u32 %s227, 1
          %s458 = smul.addr %s457, 256
          %s459 = scalar_lea.vmem [#allocation10], %s458
          %s460 = smul.u32 2, %s40
          %s462 = ssub.s32 4096, 4096
          %463 = vsyncadd %s456, %s462
          %s464 = smul.addr %s460, 128
          %s465 = scalar_lea.hbm %s8, %s464
          %s466 = sshll.u32 %s459, 4
          %s467 = int_to_ptr.vmem [resolvable:$true] %s466
          %472 = dma.hbm_to_vmem [thread:$0]  %s465, 4096, %s467, %s456, 512, 256, 16
        $region60: #{tpu_custom_call.1} parent=51 // pred_fallthru
          _
        // Predicated region
        $region61: #{tpu_custom_call.1} parent=51 // pred_check
          %p473 = pneg %p263
        $region62: #{tpu_custom_call.1} parent=51 // pred_check_branch
          %475 = sbr.rel (%p473) target = $region64
        $region63: #{tpu_custom_call.1} parent=51 // pred_region
          %s476 = smul.u32 2, %s40
          %p477 = scmp.lt.s32.totalorder %s476, 3
          %s478 = scalar_select %p477, %s476, 3
          %s479 = scalar_lea.vmem %s9, %s478
          %s480 = smul.u32 2, %s40
        $region64: #{tpu_custom_call.1} parent=51 // pred_fallthru
          _
      $region52: #{tpu_custom_call.1} parent=5 // pred_fallthru
        _
      %p481 = scmp.le.s32.totalorder 1, %s32
      %p482 = scmp.lt.s32.totalorder %s32, 5
      %p483 = pnand %p481, %p482
      %p484 = pneg %p483
      // Predicated region
      $region65: #{tpu_custom_call.1} parent=5 // pred_check
        _
      $region66: #{tpu_custom_call.1} parent=5 // pred_check_branch
        %486 = sbr.rel (%p483) target = $region68
      $region67: #{tpu_custom_call.1} parent=5 // pred_region
        %s487 = ssub.s32 %s32, 1
        %s488 = sand.u32 %s57, 1
        %s489 = scalar_lea.sflag [#allocation5], %s488
        %s490 = sand.u32 %s57, 1
        %s491 = smul.addr %s490, 64
        %s492 = scalar_lea.vmem [#allocation4], %s491
        // Predicated region
        $region69: #{tpu_custom_call.1} parent=67 // pred_check
          %p493 = pneg %p70
        $region70: #{tpu_custom_call.1} parent=67 // pred_check_branch
          %495 = sbr.rel (%p493) target = $region72
        $region71: #{tpu_custom_call.1} parent=67 // pred_region
          %496 = dma.done %s489, 1024
        $region72: #{tpu_custom_call.1} parent=67 // pred_fallthru
          _
        // Predicated region
        $region73: #{tpu_custom_call.1} parent=67 // pred_check
          %p497 = pneg %p154
        $region74: #{tpu_custom_call.1} parent=67 // pred_check_branch
          %499 = sbr.rel (%p497) target = $region76
        $region75: #{tpu_custom_call.1} parent=67 // pred_region
          %500 = dma.done [#allocation8], 2048
        $region76: #{tpu_custom_call.1} parent=67 // pred_fallthru
          _
        // Predicated region
        $region77: #{tpu_custom_call.1} parent=67 // pred_check
          %p501 = pneg %p196
        $region78: #{tpu_custom_call.1} parent=67 // pred_check_branch
          %503 = sbr.rel (%p501) target = $region80
        $region79: #{tpu_custom_call.1} parent=67 // pred_region
          %504 = dma.done [#allocation8], 2048
        $region80: #{tpu_custom_call.1} parent=67 // pred_fallthru
          _
        %s505 = sand.u32 %s230, 1
        %s506 = scalar_lea.sflag [#allocation11], %s505
        %s507 = sand.u32 %s230, 1
        %s508 = smul.addr %s507, 256
        %s509 = scalar_lea.vmem [#allocation10], %s508
        // Predicated region
        $region81: #{tpu_custom_call.1} parent=67 // pred_check
          %p510 = pneg %p243
        $region82: #{tpu_custom_call.1} parent=67 // pred_check_branch
          %512 = sbr.rel (%p510) target = $region84
        $region83: #{tpu_custom_call.1} parent=67 // pred_region
          %513 = dma.done %s506, 4096
        $region84: #{tpu_custom_call.1} parent=67 // pred_fallthru
          _
        %s514 = sand.u32 %s57, 1
        %s515 = scalar_lea.sflag [#allocation5], %s514
        %s516 = sand.u32 %s57, 1
        %s517 = smul.addr %s516, 64
        %s518 = scalar_lea.vmem [#allocation4], %s517
        %p519 = pneg %p70
        %p520 = pneg %p67
        %p521 = pneg %p91
        %p522 = pneg %p88
        %p523 = pneg %p112
        %p524 = pneg %p109
        %p525 = pneg %p133
        %p526 = pneg %p130
        %p527 = pneg %p154
        %p528 = pneg %p151
        %p529 = pneg %p175
        %p530 = pneg %p172
        %p531 = pneg %p196
        %p532 = pneg %p193
        %p533 = pneg %p217
        %p534 = pneg %p214
        %s535 = sand.u32 %s230, 1
        %s536 = scalar_lea.sflag [#allocation11], %s535
        %s537 = sand.u32 %s230, 1
        %s538 = smul.addr %s537, 256
        %s539 = scalar_lea.vmem [#allocation10], %s538
        %p540 = pneg %p243
        %p541 = pneg %p240
        %s542 = smul.u32 2, %s42
        %p543 = scmp.lt.s32.totalorder %s542, 3
        %s544 = scalar_select %p543, %s542, 3
        %s545 = scalar_lea.vmem %s9, %s544
        %p546 = pneg %p269
        %p547 = pneg %p266
        %p548 = pneg %p290
        %p549 = pneg %p287
        %p550 = pneg %p311
        %p551 = pneg %p308
        %p552 = pneg %p339
        %p553 = pneg %p336
        %s554 = sand.u32 %s326, 1
        %s555 = scalar_lea.sflag [#allocation6], %s554
        %s556 = sand.u32 %s326, 1
        %s557 = smul.addr %s556, 16
        %s558 = scalar_lea.vmem [#allocation12], %s557
        %p559 = pneg %p365
        %p560 = pneg %p362
        %p561 = scmp.lt.s32.totalorder %s41, 1
        %s562 = scalar_select %p561, %s41, 1
        %s563 = smul.addr %s562, 8
        %s564 = scalar_lea.vmem %s13, %s563
        %s565 = smul.u32 8, %s41
        %s566 = smul.u32 2, %s42
        %s567 = smul.u32 2, %s42
        %p568 = scmp.lt.s32.totalorder %s567, 3
        %s569 = scalar_select %p568, %s567, 3
        %s570 = scalar_lea.vmem %s9, %s569
        %s571 = smul.u32 2, %s42
        %s572 = smul.u32 2, %s42
        %p573 = scmp.lt.s32.totalorder %s41, 1
        %s574 = scalar_select %p573, %s41, 1
        %s575 = smul.addr %s574, 8
        %s576 = scalar_lea.vmem %s13, %s575
        %p577 = scmp.eq.s32.totalorder %s42, 0
        // Predicated region
        $region85: #{tpu_custom_call.1} parent=67 // pred_check
          %p578 = pneg %p577
        $region86: #{tpu_custom_call.1} parent=67 // pred_check_branch
          %580 = sbr.rel (%p578) target = $region88
        $region87: #{tpu_custom_call.1} parent=67 // pred_region
          %v581 = vld [vmem:[%s492] sm:$0xff]
          %v582 = vld [vmem:[%s492 + $0x8] sm:$0xff]
          %v583 = vld [vmem:[%s492 + $0x10] sm:$0xff]
          %v584 = vld [vmem:[%s492 + $0x18] sm:$0xff]
          %v585 = vld [vmem:[%s492 + $0x20] sm:$0xff]
          %v586 = vld [vmem:[%s492 + $0x28] sm:$0xff]
          %v587 = vld [vmem:[%s492 + $0x30] sm:$0xff]
          %v588 = vld [vmem:[%s492 + $0x38] sm:$0xff]
          %589 = vadd.xlane.f32.xlu0 %v581
          %v590 = vpop.xlane.xlu0 %589
          %591 = vadd.xlane.f32.xlu0 %v582
          %v592 = vpop.xlane.xlu0 %591
          %593 = vadd.xlane.f32.xlu0 %v583
          %v594 = vpop.xlane.xlu0 %593
          %595 = vadd.xlane.f32.xlu0 %v584
          %v596 = vpop.xlane.xlu0 %595
          %597 = vadd.xlane.f32.xlu0 %v585
          %v598 = vpop.xlane.xlu0 %597
          %599 = vadd.xlane.f32.xlu0 %v586
          %v600 = vpop.xlane.xlu0 %599
          %601 = vadd.xlane.f32.xlu0 %v587
          %v602 = vpop.xlane.xlu0 %601
          %603 = vadd.xlane.f32.xlu0 %v588
          %v604 = vpop.xlane.xlu0 %603
          %v605 = vrcp.pop 128.0
          %v606 = vmul.f32 %v590, %v605
          %v607 = vmul.f32 %v592, %v605
          %v608 = vmul.f32 %v594, %v605
          %v609 = vmul.f32 %v596, %v605
          %v610 = vmul.f32 %v598, %v605
          %v611 = vmul.f32 %v600, %v605
          %v612 = vmul.f32 %v602, %v605
          %v613 = vmul.f32 %v604, %v605
          %v614 = vsub.f32 %v581, %v606
          %v615 = vsub.f32 %v582, %v607
          %v616 = vsub.f32 %v583, %v608
          %v617 = vsub.f32 %v584, %v609
          %v618 = vsub.f32 %v585, %v610
          %v619 = vsub.f32 %v586, %v611
          %v620 = vsub.f32 %v587, %v612
          %v621 = vsub.f32 %v588, %v613
          %v622 = vmul.f32 %v614, %v614
          %v623 = vmul.f32 %v615, %v615
          %v624 = vmul.f32 %v616, %v616
          %v625 = vmul.f32 %v617, %v617
          %v626 = vmul.f32 %v618, %v618
          %v627 = vmul.f32 %v619, %v619
          %v628 = vmul.f32 %v620, %v620
          %v629 = vmul.f32 %v621, %v621
          %630 = vadd.xlane.f32.xlu0 %v622
          %v631 = vpop.xlane.xlu0 %630
          %632 = vadd.xlane.f32.xlu0 %v623
          %v633 = vpop.xlane.xlu0 %632
          %634 = vadd.xlane.f32.xlu0 %v624
          %v635 = vpop.xlane.xlu0 %634
          %636 = vadd.xlane.f32.xlu0 %v625
          %v637 = vpop.xlane.xlu0 %636
          %638 = vadd.xlane.f32.xlu0 %v626
          %v639 = vpop.xlane.xlu0 %638
          %640 = vadd.xlane.f32.xlu0 %v627
          %v641 = vpop.xlane.xlu0 %640
          %642 = vadd.xlane.f32.xlu0 %v628
          %v643 = vpop.xlane.xlu0 %642
          %644 = vadd.xlane.f32.xlu0 %v629
          %v645 = vpop.xlane.xlu0 %644
          %v646 = vmul.f32 %v631, %v605
          %v647 = vmul.f32 %v633, %v605
          %v648 = vmul.f32 %v635, %v605
          %v649 = vmul.f32 %v637, %v605
          %v650 = vmul.f32 %v639, %v605
          %v651 = vmul.f32 %v641, %v605
          %v652 = vmul.f32 %v643, %v605
          %v653 = vmul.f32 %v645, %v605
          %v654 = vadd.f32 %v646, 1e-05
          %v655 = vadd.f32 %v647, 1e-05
          %v656 = vadd.f32 %v648, 1e-05
          %v657 = vadd.f32 %v649, 1e-05
          %v658 = vadd.f32 %v650, 1e-05
          %v659 = vadd.f32 %v651, 1e-05
          %v660 = vadd.f32 %v652, 1e-05
          %v661 = vadd.f32 %v653, 1e-05
          %v662 = vrsqrt.pop %v654
          %v663 = vrsqrt.pop %v655
          %v664 = vrsqrt.pop %v656
          %v665 = vrsqrt.pop %v657
          %v666 = vrsqrt.pop %v658
          %v667 = vrsqrt.pop %v659
          %v668 = vrsqrt.pop %v660
          %v669 = vrsqrt.pop %v661
          %v670 = vmul.f32 %v614, %v662
          %v671 = vmul.f32 %v615, %v663
          %v672 = vmul.f32 %v616, %v664
          %v673 = vmul.f32 %v617, %v665
          %v674 = vmul.f32 %v618, %v666
          %v675 = vmul.f32 %v619, %v667
          %v676 = vmul.f32 %v620, %v668
          %v677 = vmul.f32 %v621, %v669
          %v678 = vld [vmem:[%s1] sm:$0x1]
          %v680 = vlaneseq
          %v681 = vshrl.u32 %v680, 7
          %v682 = vsub.s32 0, %v681
          %v683 = vrot.slane %v678, %v682
          %v685 = vmul.f32 %v670, %v683
          %v686 = vmul.f32 %v671, %v683
          %v687 = vmul.f32 %v672, %v683
          %v688 = vmul.f32 %v673, %v683
          %v689 = vmul.f32 %v674, %v683
          %v690 = vmul.f32 %v675, %v683
          %v691 = vmul.f32 %v676, %v683
          %v692 = vmul.f32 %v677, %v683
          %v693 = vld [vmem:[%s2] sm:$0x1]
          %v695 = vlaneseq
          %v696 = vshrl.u32 %v695, 7
          %v697 = vsub.s32 0, %v696
          %v698 = vrot.slane %v693, %v697
          %v700 = vadd.f32 %v685, %v698
          %v701 = vadd.f32 %v686, %v698
          %v702 = vadd.f32 %v687, %v698
          %v703 = vadd.f32 %v688, %v698
          %v704 = vadd.f32 %v689, %v698
          %v705 = vadd.f32 %v690, %v698
          %v706 = vadd.f32 %v691, %v698
          %v707 = vadd.f32 %v692, %v698
          %v708 = vld [vmem:[%s3] sm:$0x1]
          %v709 = vlaneseq
          %v710 = vshrl.u32 %v709, 7
          %v711 = vsub.s32 0, %v710
          %v712 = vrot.slane %v708, %v711
          %v713 = vmul.f32 %v700, %v712
          %v714 = vmul.f32 %v701, %v712
          %v715 = vmul.f32 %v702, %v712
          %v716 = vmul.f32 %v703, %v712
          %v717 = vmul.f32 %v704, %v712
          %v718 = vmul.f32 %v705, %v712
          %v719 = vmul.f32 %v706, %v712
          %v720 = vmul.f32 %v707, %v712
          %721 = vadd.xlane.f32.xlu0 %v713
          %v722 = vpop.xlane.xlu0 %721
          %723 = vadd.xlane.f32.xlu0 %v714
          %v724 = vpop.xlane.xlu0 %723
          %725 = vadd.xlane.f32.xlu0 %v715
          %v726 = vpop.xlane.xlu0 %725
          %727 = vadd.xlane.f32.xlu0 %v716
          %v728 = vpop.xlane.xlu0 %727
          %729 = vadd.xlane.f32.xlu0 %v717
          %v730 = vpop.xlane.xlu0 %729
          %731 = vadd.xlane.f32.xlu0 %v718
          %v732 = vpop.xlane.xlu0 %731
          %733 = vadd.xlane.f32.xlu0 %v719
          %v734 = vpop.xlane.xlu0 %733
          %735 = vadd.xlane.f32.xlu0 %v720
          %v736 = vpop.xlane.xlu0 %735
          %v737 = vrot.slane %v722, 4
          %v738 = vmax.f32 %v722, %v737
          %v739 = vrot.slane %v738, 2
          %v740 = vmax.f32 %v738, %v739
          %v741 = vrot.slane %v740, 1
          %v742 = vmax.f32 %v740, %v741
          %v743 = vrot.slane %v724, 4
          %v744 = vmax.f32 %v724, %v743
          %v745 = vrot.slane %v744, 2
          %v746 = vmax.f32 %v744, %v745
          %v747 = vrot.slane %v746, 1
          %v748 = vmax.f32 %v746, %v747
          %v749 = vrot.slane %v726, 4
          %v750 = vmax.f32 %v726, %v749
          %v751 = vrot.slane %v750, 2
          %v752 = vmax.f32 %v750, %v751
          %v753 = vrot.slane %v752, 1
          %v754 = vmax.f32 %v752, %v753
          %v755 = vrot.slane %v728, 4
          %v756 = vmax.f32 %v728, %v755
          %v757 = vrot.slane %v756, 2
          %v758 = vmax.f32 %v756, %v757
          %v759 = vrot.slane %v758, 1
          %v760 = vmax.f32 %v758, %v759
          %v761 = vrot.slane %v730, 4
          %v762 = vmax.f32 %v730, %v761
          %v763 = vrot.slane %v762, 2
          %v764 = vmax.f32 %v762, %v763
          %v765 = vrot.slane %v764, 1
          %v766 = vmax.f32 %v764, %v765
          %v767 = vrot.slane %v732, 4
          %v768 = vmax.f32 %v732, %v767
          %v769 = vrot.slane %v768, 2
          %v770 = vmax.f32 %v768, %v769
          %v771 = vrot.slane %v770, 1
          %v772 = vmax.f32 %v770, %v771
          %v773 = vrot.slane %v734, 4
          %v774 = vmax.f32 %v734, %v773
          %v775 = vrot.slane %v774, 2
          %v776 = vmax.f32 %v774, %v775
          %v777 = vrot.slane %v776, 1
          %v778 = vmax.f32 %v776, %v777
          %v779 = vrot.slane %v736, 4
          %v780 = vmax.f32 %v736, %v779
          %v781 = vrot.slane %v780, 2
          %v782 = vmax.f32 %v780, %v781
          %v783 = vrot.slane %v782, 1
          %v784 = vmax.f32 %v782, %v783
          %v785 = vsub.f32 %v722, %v742
          %v786 = vsub.f32 %v724, %v748
          %v787 = vsub.f32 %v726, %v754
          %v788 = vsub.f32 %v728, %v760
          %v789 = vsub.f32 %v730, %v766
          %v790 = vsub.f32 %v732, %v772
          %v791 = vsub.f32 %v734, %v778
          %v792 = vsub.f32 %v736, %v784
          %v793 = vmul.f32 %v785, 1.442695
          %v794 = vpow.pop %v793
          %v795 = vmul.f32 %v786, 1.442695
          %v796 = vpow.pop %v795
          %v797 = vmul.f32 %v787, 1.442695
          %v798 = vpow.pop %v797
          %v799 = vmul.f32 %v788, 1.442695
          %v800 = vpow.pop %v799
          %v801 = vmul.f32 %v789, 1.442695
          %v802 = vpow.pop %v801
          %v803 = vmul.f32 %v790, 1.442695
          %v804 = vpow.pop %v803
          %v805 = vmul.f32 %v791, 1.442695
          %v806 = vpow.pop %v805
          %v807 = vmul.f32 %v792, 1.442695
          %v808 = vpow.pop %v807
          %v809 = vrot.slane %v794, 4
          %v810 = vadd.f32 %v794, %v809
          %v811 = vrot.slane %v810, 2
          %v812 = vadd.f32 %v810, %v811
          %v813 = vrot.slane %v812, 1
          %v814 = vadd.f32 %v812, %v813
          %v815 = vrot.slane %v796, 4
          %v816 = vadd.f32 %v796, %v815
          %v817 = vrot.slane %v816, 2
          %v818 = vadd.f32 %v816, %v817
          %v819 = vrot.slane %v818, 1
          %v820 = vadd.f32 %v818, %v819
          %v821 = vrot.slane %v798, 4
          %v822 = vadd.f32 %v798, %v821
          %v823 = vrot.slane %v822, 2
          %v824 = vadd.f32 %v822, %v823
          %v825 = vrot.slane %v824, 1
          %v826 = vadd.f32 %v824, %v825
          %v827 = vrot.slane %v800, 4
          %v828 = vadd.f32 %v800, %v827
          %v829 = vrot.slane %v828, 2
          %v830 = vadd.f32 %v828, %v829
          %v831 = vrot.slane %v830, 1
          %v832 = vadd.f32 %v830, %v831
          %v833 = vrot.slane %v802, 4
          %v834 = vadd.f32 %v802, %v833
          %v835 = vrot.slane %v834, 2
          %v836 = vadd.f32 %v834, %v835
          %v837 = vrot.slane %v836, 1
          %v838 = vadd.f32 %v836, %v837
          %v839 = vrot.slane %v804, 4
          %v840 = vadd.f32 %v804, %v839
          %v841 = vrot.slane %v840, 2
          %v842 = vadd.f32 %v840, %v841
          %v843 = vrot.slane %v842, 1
          %v844 = vadd.f32 %v842, %v843
          %v845 = vrot.slane %v806, 4
          %v846 = vadd.f32 %v806, %v845
          %v847 = vrot.slane %v846, 2
          %v848 = vadd.f32 %v846, %v847
          %v849 = vrot.slane %v848, 1
          %v850 = vadd.f32 %v848, %v849
          %v851 = vrot.slane %v808, 4
          %v852 = vadd.f32 %v808, %v851
          %v853 = vrot.slane %v852, 2
          %v854 = vadd.f32 %v852, %v853
          %v855 = vrot.slane %v854, 1
          %v856 = vadd.f32 %v854, %v855
          %v857 = vrcp.pop %v814
          %v858 = vmul.f32 %v794, %v857
          %v859 = vrcp.pop %v820
          %v860 = vmul.f32 %v796, %v859
          %v861 = vrcp.pop %v826
          %v862 = vmul.f32 %v798, %v861
          %v863 = vrcp.pop %v832
          %v864 = vmul.f32 %v800, %v863
          %v865 = vrcp.pop %v838
          %v866 = vmul.f32 %v802, %v865
          %v867 = vrcp.pop %v844
          %v868 = vmul.f32 %v804, %v867
          %v869 = vrcp.pop %v850
          %v870 = vmul.f32 %v806, %v869
          %v871 = vrcp.pop %v856
          %v872 = vmul.f32 %v808, %v871
          %v873 = vmul.f32 %v858, %v700
          %v874 = vmul.f32 %v860, %v701
          %v875 = vmul.f32 %v862, %v702
          %v876 = vmul.f32 %v864, %v703
          %v877 = vmul.f32 %v866, %v704
          %v878 = vmul.f32 %v868, %v705
          %v879 = vmul.f32 %v870, %v706
          %v880 = vmul.f32 %v872, %v707
          %v881 = vrot.slane %v873, 4
          %v882 = vadd.f32 %v873, %v881
          %v883 = vrot.slane %v882, 2
          %v884 = vadd.f32 %v882, %v883
          %v885 = vrot.slane %v884, 1
          %v886 = vadd.f32 %v884, %v885
          %v887 = vrot.slane %v874, 4
          %v888 = vadd.f32 %v874, %v887
          %v889 = vrot.slane %v888, 2
          %v890 = vadd.f32 %v888, %v889
          %v891 = vrot.slane %v890, 1
          %v892 = vadd.f32 %v890, %v891
          %v893 = vrot.slane %v875, 4
          %v894 = vadd.f32 %v875, %v893
          %v895 = vrot.slane %v894, 2
          %v896 = vadd.f32 %v894, %v895
          %v897 = vrot.slane %v896, 1
          %v898 = vadd.f32 %v896, %v897
          %v899 = vrot.slane %v876, 4
          %v900 = vadd.f32 %v876, %v899
          %v901 = vrot.slane %v900, 2
          %v902 = vadd.f32 %v900, %v901
          %v903 = vrot.slane %v902, 1
          %v904 = vadd.f32 %v902, %v903
          %v905 = vrot.slane %v877, 4
          %v906 = vadd.f32 %v877, %v905
          %v907 = vrot.slane %v906, 2
          %v908 = vadd.f32 %v906, %v907
          %v909 = vrot.slane %v908, 1
          %v910 = vadd.f32 %v908, %v909
          %v911 = vrot.slane %v878, 4
          %v912 = vadd.f32 %v878, %v911
          %v913 = vrot.slane %v912, 2
          %v914 = vadd.f32 %v912, %v913
          %v915 = vrot.slane %v914, 1
          %v916 = vadd.f32 %v914, %v915
          %v917 = vrot.slane %v879, 4
          %v918 = vadd.f32 %v879, %v917
          %v919 = vrot.slane %v918, 2
          %v920 = vadd.f32 %v918, %v919
          %v921 = vrot.slane %v920, 1
          %v922 = vadd.f32 %v920, %v921
          %v923 = vrot.slane %v880, 4
          %v924 = vadd.f32 %v880, %v923
          %v925 = vrot.slane %v924, 2
          %v926 = vadd.f32 %v924, %v925
          %v927 = vrot.slane %v926, 1
          %v928 = vadd.f32 %v926, %v927
          %v929 = vld [vmem:[%s3 + $0x1] sm:$0x1]
          %v930 = vlaneseq
          %v931 = vshrl.u32 %v930, 7
          %v932 = vsub.s32 0, %v931
          %v933 = vrot.slane %v929, %v932
          %v934 = vmul.f32 %v700, %v933
          %v935 = vmul.f32 %v701, %v933
          %v936 = vmul.f32 %v702, %v933
          %v937 = vmul.f32 %v703, %v933
          %v938 = vmul.f32 %v704, %v933
          %v939 = vmul.f32 %v705, %v933
          %v940 = vmul.f32 %v706, %v933
          %v941 = vmul.f32 %v707, %v933
          %942 = vadd.xlane.f32.xlu0 %v934
          %v943 = vpop.xlane.xlu0 %942
          %944 = vadd.xlane.f32.xlu0 %v935
          %v945 = vpop.xlane.xlu0 %944
          %946 = vadd.xlane.f32.xlu0 %v936
          %v947 = vpop.xlane.xlu0 %946
          %948 = vadd.xlane.f32.xlu0 %v937
          %v949 = vpop.xlane.xlu0 %948
          %950 = vadd.xlane.f32.xlu0 %v938
          %v951 = vpop.xlane.xlu0 %950
          %952 = vadd.xlane.f32.xlu0 %v939
          %v953 = vpop.xlane.xlu0 %952
          %954 = vadd.xlane.f32.xlu0 %v940
          %v955 = vpop.xlane.xlu0 %954
          %956 = vadd.xlane.f32.xlu0 %v941
          %v957 = vpop.xlane.xlu0 %956
          %v958 = vrot.slane %v943, 4
          %v959 = vmax.f32 %v943, %v958
          %v960 = vrot.slane %v959, 2
          %v961 = vmax.f32 %v959, %v960
          %v962 = vrot.slane %v961, 1
          %v963 = vmax.f32 %v961, %v962
          %v964 = vrot.slane %v945, 4
          %v965 = vmax.f32 %v945, %v964
          %v966 = vrot.slane %v965, 2
          %v967 = vmax.f32 %v965, %v966
          %v968 = vrot.slane %v967, 1
          %v969 = vmax.f32 %v967, %v968
          %v970 = vrot.slane %v947, 4
          %v971 = vmax.f32 %v947, %v970
          %v972 = vrot.slane %v971, 2
          %v973 = vmax.f32 %v971, %v972
          %v974 = vrot.slane %v973, 1
          %v975 = vmax.f32 %v973, %v974
          %v976 = vrot.slane %v949, 4
          %v977 = vmax.f32 %v949, %v976
          %v978 = vrot.slane %v977, 2
          %v979 = vmax.f32 %v977, %v978
          %v980 = vrot.slane %v979, 1
          %v981 = vmax.f32 %v979, %v980
          %v982 = vrot.slane %v951, 4
          %v983 = vmax.f32 %v951, %v982
          %v984 = vrot.slane %v983, 2
          %v985 = vmax.f32 %v983, %v984
          %v986 = vrot.slane %v985, 1
          %v987 = vmax.f32 %v985, %v986
          %v988 = vrot.slane %v953, 4
          %v989 = vmax.f32 %v953, %v988
          %v990 = vrot.slane %v989, 2
          %v991 = vmax.f32 %v989, %v990
          %v992 = vrot.slane %v991, 1
          %v993 = vmax.f32 %v991, %v992
          %v994 = vrot.slane %v955, 4
          %v995 = vmax.f32 %v955, %v994
          %v996 = vrot.slane %v995, 2
          %v997 = vmax.f32 %v995, %v996
          %v998 = vrot.slane %v997, 1
          %v999 = vmax.f32 %v997, %v998
          %v1000 = vrot.slane %v957, 4
          %v1001 = vmax.f32 %v957, %v1000
          %v1002 = vrot.slane %v1001, 2
          %v1003 = vmax.f32 %v1001, %v1002
          %v1004 = vrot.slane %v1003, 1
          %v1005 = vmax.f32 %v1003, %v1004
          %v1006 = vsub.f32 %v943, %v963
          %v1007 = vsub.f32 %v945, %v969
          %v1008 = vsub.f32 %v947, %v975
          %v1009 = vsub.f32 %v949, %v981
          %v1010 = vsub.f32 %v951, %v987
          %v1011 = vsub.f32 %v953, %v993
          %v1012 = vsub.f32 %v955, %v999
          %v1013 = vsub.f32 %v957, %v1005
          %v1014 = vmul.f32 %v1006, 1.442695
          %v1015 = vpow.pop %v1014
          %v1016 = vmul.f32 %v1007, 1.442695
          %v1017 = vpow.pop %v1016
          %v1018 = vmul.f32 %v1008, 1.442695
          %v1019 = vpow.pop %v1018
          %v1020 = vmul.f32 %v1009, 1.442695
          %v1021 = vpow.pop %v1020
          %v1022 = vmul.f32 %v1010, 1.442695
          %v1023 = vpow.pop %v1022
          %v1024 = vmul.f32 %v1011, 1.442695
          %v1025 = vpow.pop %v1024
          %v1026 = vmul.f32 %v1012, 1.442695
          %v1027 = vpow.pop %v1026
          %v1028 = vmul.f32 %v1013, 1.442695
          %v1029 = vpow.pop %v1028
          %v1030 = vrot.slane %v1015, 4
          %v1031 = vadd.f32 %v1015, %v1030
          %v1032 = vrot.slane %v1031, 2
          %v1033 = vadd.f32 %v1031, %v1032
          %v1034 = vrot.slane %v1033, 1
          %v1035 = vadd.f32 %v1033, %v1034
          %v1036 = vrot.slane %v1017, 4
          %v1037 = vadd.f32 %v1017, %v1036
          %v1038 = vrot.slane %v1037, 2
          %v1039 = vadd.f32 %v1037, %v1038
          %v1040 = vrot.slane %v1039, 1
          %v1041 = vadd.f32 %v1039, %v1040
          %v1042 = vrot.slane %v1019, 4
          %v1043 = vadd.f32 %v1019, %v1042
          %v1044 = vrot.slane %v1043, 2
          %v1045 = vadd.f32 %v1043, %v1044
          %v1046 = vrot.slane %v1045, 1
          %v1047 = vadd.f32 %v1045, %v1046
          %v1048 = vrot.slane %v1021, 4
          %v1049 = vadd.f32 %v1021, %v1048
          %v1050 = vrot.slane %v1049, 2
          %v1051 = vadd.f32 %v1049, %v1050
          %v1052 = vrot.slane %v1051, 1
          %v1053 = vadd.f32 %v1051, %v1052
          %v1054 = vrot.slane %v1023, 4
          %v1055 = vadd.f32 %v1023, %v1054
          %v1056 = vrot.slane %v1055, 2
          %v1057 = vadd.f32 %v1055, %v1056
          %v1058 = vrot.slane %v1057, 1
          %v1059 = vadd.f32 %v1057, %v1058
          %v1060 = vrot.slane %v1025, 4
          %v1061 = vadd.f32 %v1025, %v1060
          %v1062 = vrot.slane %v1061, 2
          %v1063 = vadd.f32 %v1061, %v1062
          %v1064 = vrot.slane %v1063, 1
          %v1065 = vadd.f32 %v1063, %v1064
          %v1066 = vrot.slane %v1027, 4
          %v1067 = vadd.f32 %v1027, %v1066
          %v1068 = vrot.slane %v1067, 2
          %v1069 = vadd.f32 %v1067, %v1068
          %v1070 = vrot.slane %v1069, 1
          %v1071 = vadd.f32 %v1069, %v1070
          %v1072 = vrot.slane %v1029, 4
          %v1073 = vadd.f32 %v1029, %v1072
          %v1074 = vrot.slane %v1073, 2
          %v1075 = vadd.f32 %v1073, %v1074
          %v1076 = vrot.slane %v1075, 1
          %v1077 = vadd.f32 %v1075, %v1076
          %v1078 = vrcp.pop %v1035
          %v1079 = vmul.f32 %v1015, %v1078
          %v1080 = vrcp.pop %v1041
          %v1081 = vmul.f32 %v1017, %v1080
          %v1082 = vrcp.pop %v1047
          %v1083 = vmul.f32 %v1019, %v1082
          %v1084 = vrcp.pop %v1053
          %v1085 = vmul.f32 %v1021, %v1084
          %v1086 = vrcp.pop %v1059
          %v1087 = vmul.f32 %v1023, %v1086
          %v1088 = vrcp.pop %v1065
          %v1089 = vmul.f32 %v1025, %v1088
          %v1090 = vrcp.pop %v1071
          %v1091 = vmul.f32 %v1027, %v1090
          %v1092 = vrcp.pop %v1077
          %v1093 = vmul.f32 %v1029, %v1092
          %v1094 = vmul.f32 %v1079, %v700
          %v1095 = vmul.f32 %v1081, %v701
          %v1096 = vmul.f32 %v1083, %v702
          %v1097 = vmul.f32 %v1085, %v703
          %v1098 = vmul.f32 %v1087, %v704
          %v1099 = vmul.f32 %v1089, %v705
          %v1100 = vmul.f32 %v1091, %v706
          %v1101 = vmul.f32 %v1093, %v707
          %v1102 = vrot.slane %v1094, 4
          %v1103 = vadd.f32 %v1094, %v1102
          %v1104 = vrot.slane %v1103, 2
          %v1105 = vadd.f32 %v1103, %v1104
          %v1106 = vrot.slane %v1105, 1
          %v1107 = vadd.f32 %v1105, %v1106
          %v1108 = vrot.slane %v1095, 4
          %v1109 = vadd.f32 %v1095, %v1108
          %v1110 = vrot.slane %v1109, 2
          %v1111 = vadd.f32 %v1109, %v1110
          %v1112 = vrot.slane %v1111, 1
          %v1113 = vadd.f32 %v1111, %v1112
          %v1114 = vrot.slane %v1096, 4
          %v1115 = vadd.f32 %v1096, %v1114
          %v1116 = vrot.slane %v1115, 2
          %v1117 = vadd.f32 %v1115, %v1116
          %v1118 = vrot.slane %v1117, 1
          %v1119 = vadd.f32 %v1117, %v1118
          %v1120 = vrot.slane %v1097, 4
          %v1121 = vadd.f32 %v1097, %v1120
          %v1122 = vrot.slane %v1121, 2
          %v1123 = vadd.f32 %v1121, %v1122
          %v1124 = vrot.slane %v1123, 1
          %v1125 = vadd.f32 %v1123, %v1124
          %v1126 = vrot.slane %v1098, 4
          %v1127 = vadd.f32 %v1098, %v1126
          %v1128 = vrot.slane %v1127, 2
          %v1129 = vadd.f32 %v1127, %v1128
          %v1130 = vrot.slane %v1129, 1
          %v1131 = vadd.f32 %v1129, %v1130
          %v1132 = vrot.slane %v1099, 4
          %v1133 = vadd.f32 %v1099, %v1132
          %v1134 = vrot.slane %v1133, 2
          %v1135 = vadd.f32 %v1133, %v1134
          %v1136 = vrot.slane %v1135, 1
          %v1137 = vadd.f32 %v1135, %v1136
          %v1138 = vrot.slane %v1100, 4
          %v1139 = vadd.f32 %v1100, %v1138
          %v1140 = vrot.slane %v1139, 2
          %v1141 = vadd.f32 %v1139, %v1140
          %v1142 = vrot.slane %v1141, 1
          %v1143 = vadd.f32 %v1141, %v1142
          %v1144 = vrot.slane %v1101, 4
          %v1145 = vadd.f32 %v1101, %v1144
          %v1146 = vrot.slane %v1145, 2
          %v1147 = vadd.f32 %v1145, %v1146
          %v1148 = vrot.slane %v1147, 1
          %v1149 = vadd.f32 %v1147, %v1148
          %v1150 = vld [vmem:[#allocation7] sm:$0xff]
          %v1151 = vld [vmem:[#allocation7 + $0x8] sm:$0xff]
          %v1152 = vld [vmem:[#allocation7 + $0x10] sm:$0xff]
          %v1153 = vld [vmem:[#allocation7 + $0x18] sm:$0xff]
          %v1154 = vld [vmem:[#allocation7 + $0x20] sm:$0xff]
          %v1155 = vld [vmem:[#allocation7 + $0x28] sm:$0xff]
          %v1156 = vld [vmem:[#allocation7 + $0x30] sm:$0xff]
          %v1157 = vld [vmem:[#allocation7 + $0x38] sm:$0xff]
          %v1158 = vld [vmem:[#allocation7 + $0x40] sm:$0xff]
          %v1159 = vld [vmem:[#allocation7 + $0x48] sm:$0xff]
          %v1160 = vld [vmem:[#allocation7 + $0x50] sm:$0xff]
          %v1161 = vld [vmem:[#allocation7 + $0x58] sm:$0xff]
          %v1162 = vld [vmem:[#allocation7 + $0x60] sm:$0xff]
          %v1163 = vld [vmem:[#allocation7 + $0x68] sm:$0xff]
          %v1164 = vld [vmem:[#allocation7 + $0x70] sm:$0xff]
          %v1165 = vld [vmem:[#allocation7 + $0x78] sm:$0xff]
          %v1166 = vld [vmem:[%s5] sm:$0x1]
          %v1168 = vlaneseq
          %v1169 = vshrl.u32 %v1168, 7
          %v1170 = vsub.s32 0, %v1169
          %v1171 = vrot.slane %v1166, %v1170
          %vm1181 = vcmask 1041409
          %v1182 = vsel %vm1181, %v892, %v886
          %vm1183 = vcmask 1042434
          %v1184 = vsel %vm1183, %v898, %v1182
          %vm1185 = vcmask 1043459
          %v1186 = vsel %vm1185, %v904, %v1184
          %vm1187 = vcmask 1044484
          %v1188 = vsel %vm1187, %v910, %v1186
          %vm1189 = vcmask 1045509
          %v1190 = vsel %vm1189, %v916, %v1188
          %vm1191 = vcmask 1046534
          %v1192 = vsel %vm1191, %v922, %v1190
          %vm1193 = vcmask 1047559
          %v1194 = vsel %vm1193, %v928, %v1192
          %1196 = vmatprep.subr.mxu0 0.0
          %1197 = vmatpush1.msra.mxu0 %v1150
          %1198 = vmatprep.subr.mxu0 0.0
          %1199 = vmatpush1.msra.mxu0 %v1151
          %1200 = vmatprep.subr.mxu0 0.0
          %1201 = vmatpush1.msra.mxu0 %v1152
          %1202 = vmatprep.subr.mxu0 0.0
          %1203 = vmatpush1.msra.mxu0 %v1153
          %1204 = vmatprep.subr.mxu0 0.0
          %1205 = vmatpush1.msra.mxu0 %v1154
          %1206 = vmatprep.subr.mxu0 0.0
          %1207 = vmatpush1.msra.mxu0 %v1155
          %1208 = vmatprep.subr.mxu0 0.0
          %1209 = vmatpush1.msra.mxu0 %v1156
          %1210 = vmatprep.subr.mxu0 0.0
          %1211 = vmatpush1.msra.mxu0 %v1157
          %1212 = vmatprep.subr.mxu0 0.0
          %1213 = vmatpush1.msra.mxu0 %v1158
          %1214 = vmatprep.subr.mxu0 0.0
          %1215 = vmatpush1.msra.mxu0 %v1159
          %1216 = vmatprep.subr.mxu0 0.0
          %1217 = vmatpush1.msra.mxu0 %v1160
          %1218 = vmatprep.subr.mxu0 0.0
          %1219 = vmatpush1.msra.mxu0 %v1161
          %1220 = vmatprep.subr.mxu0 0.0
          %1221 = vmatpush1.msra.mxu0 %v1162
          %1222 = vmatprep.subr.mxu0 0.0
          %1223 = vmatpush1.msra.mxu0 %v1163
          %1224 = vmatprep.subr.mxu0 0.0
          %1225 = vmatpush1.msra.mxu0 %v1164
          %1226 = vmatprep.subr.mxu0 0.0
          %1227 = vmatpush1.msra.mxu0 %v1165
          %1228 = vmatprep.subr.mxu0 0.0
          %1229 = vmatpush1.msra.mxu0 0.0
          %1230 = vmatprep.subr.mxu0 0.0
          %1231 = vmatpush1.msra.mxu0 0.0
          %1232 = vmatprep.subr.mxu0 0.0
          %1233 = vmatpush1.msra.mxu0 0.0
          %1234 = vmatprep.subr.mxu0 0.0
          %1235 = vmatpush1.msra.mxu0 0.0
          %1236 = vmatprep.subr.mxu0 0.0
          %1237 = vmatpush1.msra.mxu0 0.0
          %1238 = vmatprep.subr.mxu0 0.0
          %1239 = vmatpush1.msra.mxu0 0.0
          %1240 = vmatprep.subr.mxu0 0.0
          %1241 = vmatpush1.msra.mxu0 0.0
          %1242 = vmatprep.subr.mxu0 0.0
          %1243 = vmatpush1.msra.mxu0 0.0
          %1244 = vmatprep.subr.mxu0 0.0
          %1245 = vmatpush1.msra.mxu0 0.0
          %1246 = vmatprep.subr.mxu0 0.0
          %1247 = vmatpush1.msra.mxu0 0.0
          %1248 = vmatprep.subr.mxu0 0.0
          %1249 = vmatpush1.msra.mxu0 0.0
          %1250 = vmatprep.subr.mxu0 0.0
          %1251 = vmatpush1.msra.mxu0 0.0
          %1252 = vmatprep.subr.mxu0 0.0
          %1253 = vmatpush1.msra.mxu0 0.0
          %1254 = vmatprep.subr.mxu0 0.0
          %1255 = vmatpush1.msra.mxu0 0.0
          %1256 = vmatprep.subr.mxu0 0.0
          %1257 = vmatpush1.msra.mxu0 0.0
          %1258 = vmatprep.subr.mxu0 0.0
          %1259 = vmatpush1.msra.mxu0 0.0
          %1260 = vmatprep.mubr.f32.mxu0 0.0
          %1261 = vmatmul.mubr.f32.gmra.mrb[0].mxu0 %v1194
          %v1262 = vpop.f32.mrb[0].mxu0
          %v1263 = vadd.f32 %v1171, %v1262
          %v1264 = vpop.f32.mrb[0].mxu0
          %1265 = vdwg.mxu0
          %v1266 = vmul.f32 %v1263, %v1263
          %v1267 = vmul.f32 %v1263, %v1266
          %v1268 = vmul.f32 %v1267, 0.044715
          %v1269 = vadd.f32 %v1263, %v1268
          %v1270 = vmul.f32 %v1269, 0.7978846
          %v1271 = vtanh.pop %v1270
          %v1272 = vadd.f32 %v1271, 1.0
          %v1273 = vmul.f32 %v1272, 0.5
          %v1274 = vmul.f32 %v1263, %v1273
          %1275 = vst [vmem:[#allocation2] sm:$0xff] %v1274
          %v1276 = vld [vmem:[#allocation9] sm:$0xff]
          %v1277 = vld [vmem:[#allocation9 + $0x8] sm:$0xff]
          %v1278 = vld [vmem:[#allocation9 + $0x10] sm:$0xff]
          %v1279 = vld [vmem:[#allocation9 + $0x18] sm:$0xff]
          %v1280 = vld [vmem:[#allocation9 + $0x20] sm:$0xff]
          %v1281 = vld [vmem:[#allocation9 + $0x28] sm:$0xff]
          %v1282 = vld [vmem:[#allocation9 + $0x30] sm:$0xff]
          %v1283 = vld [vmem:[#allocation9 + $0x38] sm:$0xff]
          %v1284 = vld [vmem:[#allocation9 + $0x40] sm:$0xff]
          %v1285 = vld [vmem:[#allocation9 + $0x48] sm:$0xff]
          %v1286 = vld [vmem:[#allocation9 + $0x50] sm:$0xff]
          %v1287 = vld [vmem:[#allocation9 + $0x58] sm:$0xff]
          %v1288 = vld [vmem:[#allocation9 + $0x60] sm:$0xff]
          %v1289 = vld [vmem:[#allocation9 + $0x68] sm:$0xff]
          %v1290 = vld [vmem:[#allocation9 + $0x70] sm:$0xff]
          %v1291 = vld [vmem:[#allocation9 + $0x78] sm:$0xff]
          %v1292 = vld [vmem:[%s7] sm:$0x1]
          %v1294 = vlaneseq
          %v1295 = vshrl.u32 %v1294, 7
          %v1296 = vsub.s32 0, %v1295
          %v1297 = vrot.slane %v1292, %v1296
          %v1307 = vsel %vm1181, %v1113, %v1107
          %v1308 = vsel %vm1183, %v1119, %v1307
          %v1309 = vsel %vm1185, %v1125, %v1308
          %v1310 = vsel %vm1187, %v1131, %v1309
          %v1311 = vsel %vm1189, %v1137, %v1310
          %v1312 = vsel %vm1191, %v1143, %v1311
          %v1313 = vsel %vm1193, %v1149, %v1312
          %1315 = vmatprep.subr.mxu0 0.0
          %1316 = vmatpush1.msra.mxu0 %v1276
          %1317 = vmatprep.subr.mxu0 0.0
          %1318 = vmatpush1.msra.mxu0 %v1277
          %1319 = vmatprep.subr.mxu0 0.0
          %1320 = vmatpush1.msra.mxu0 %v1278
          %1321 = vmatprep.subr.mxu0 0.0
          %1322 = vmatpush1.msra.mxu0 %v1279
          %1323 = vmatprep.subr.mxu0 0.0
          %1324 = vmatpush1.msra.mxu0 %v1280
          %1325 = vmatprep.subr.mxu0 0.0
          %1326 = vmatpush1.msra.mxu0 %v1281
          %1327 = vmatprep.subr.mxu0 0.0
          %1328 = vmatpush1.msra.mxu0 %v1282
          %1329 = vmatprep.subr.mxu0 0.0
          %1330 = vmatpush1.msra.mxu0 %v1283
          %1331 = vmatprep.subr.mxu0 0.0
          %1332 = vmatpush1.msra.mxu0 %v1284
          %1333 = vmatprep.subr.mxu0 0.0
          %1334 = vmatpush1.msra.mxu0 %v1285
          %1335 = vmatprep.subr.mxu0 0.0
          %1336 = vmatpush1.msra.mxu0 %v1286
          %1337 = vmatprep.subr.mxu0 0.0
          %1338 = vmatpush1.msra.mxu0 %v1287
          %1339 = vmatprep.subr.mxu0 0.0
          %1340 = vmatpush1.msra.mxu0 %v1288
          %1341 = vmatprep.subr.mxu0 0.0
          %1342 = vmatpush1.msra.mxu0 %v1289
          %1343 = vmatprep.subr.mxu0 0.0
          %1344 = vmatpush1.msra.mxu0 %v1290
          %1345 = vmatprep.subr.mxu0 0.0
          %1346 = vmatpush1.msra.mxu0 %v1291
          %1347 = vmatprep.subr.mxu0 0.0
          %1348 = vmatpush1.msra.mxu0 0.0
          %1349 = vmatprep.subr.mxu0 0.0
          %1350 = vmatpush1.msra.mxu0 0.0
          %1351 = vmatprep.subr.mxu0 0.0
          %1352 = vmatpush1.msra.mxu0 0.0
          %1353 = vmatprep.subr.mxu0 0.0
          %1354 = vmatpush1.msra.mxu0 0.0
          %1355 = vmatprep.subr.mxu0 0.0
          %1356 = vmatpush1.msra.mxu0 0.0
          %1357 = vmatprep.subr.mxu0 0.0
          %1358 = vmatpush1.msra.mxu0 0.0
          %1359 = vmatprep.subr.mxu0 0.0
          %1360 = vmatpush1.msra.mxu0 0.0
          %1361 = vmatprep.subr.mxu0 0.0
          %1362 = vmatpush1.msra.mxu0 0.0
          %1363 = vmatprep.subr.mxu0 0.0
          %1364 = vmatpush1.msra.mxu0 0.0
          %1365 = vmatprep.subr.mxu0 0.0
          %1366 = vmatpush1.msra.mxu0 0.0
          %1367 = vmatprep.subr.mxu0 0.0
          %1368 = vmatpush1.msra.mxu0 0.0
          %1369 = vmatprep.subr.mxu0 0.0
          %1370 = vmatpush1.msra.mxu0 0.0
          %1371 = vmatprep.subr.mxu0 0.0
          %1372 = vmatpush1.msra.mxu0 0.0
          %1373 = vmatprep.subr.mxu0 0.0
          %1374 = vmatpush1.msra.mxu0 0.0
          %1375 = vmatprep.subr.mxu0 0.0
          %1376 = vmatpush1.msra.mxu0 0.0
          %1377 = vmatprep.subr.mxu0 0.0
          %1378 = vmatpush1.msra.mxu0 0.0
          %1379 = vmatprep.mubr.f32.mxu0 0.0
          %1380 = vmatmul.mubr.f32.gmra.mrb[0].mxu0 %v1313
          %v1381 = vpop.f32.mrb[0].mxu0
          %v1382 = vadd.f32 %v1297, %v1381
          %v1383 = vpop.f32.mrb[0].mxu0
          %1384 = vdwg.mxu0
          %v1385 = vmul.f32 %v1382, %v1382
          %v1386 = vmul.f32 %v1382, %v1385
          %v1387 = vmul.f32 %v1386, 0.044715
          %v1388 = vadd.f32 %v1382, %v1387
          %v1389 = vmul.f32 %v1388, 0.7978846
          %v1390 = vtanh.pop %v1389
          %v1391 = vadd.f32 %v1390, 1.0
          %v1392 = vmul.f32 %v1391, 0.5
          %v1393 = vmul.f32 %v1382, %v1392
          %v1394 = vld [vmem:[%s10] sm:$0x1]
          %v1396 = vlaneseq
          %v1397 = vshrl.u32 %v1396, 7
          %v1398 = vsub.s32 0, %v1397
          %v1399 = vrot.slane %v1394, %v1398
          %v1401 = vmul.f32 %v1393, %v1399
          %1402 = vadd.xlane.f32.xlu0 %v1401
          %v1403 = vpop.xlane.xlu0 %1402
          %v1404 = vld [vmem:[#allocation3] sm:$0x1]
          %v1406 = vlaneseq
          %v1407 = vshrl.u32 %v1406, 7
          %v1408 = vsub.s32 0, %v1407
          %v1409 = vrot.slane %v1404, %v1408
          %v1411 = vadd.f32 %v1403, %v1409
          %vm1412 = vcmask 7168
          %1413 = vst.msk [vmem:[%s576] sm:$0xff] %vm1412, %v1411
        $region88: #{tpu_custom_call.1} parent=67 // pred_fallthru
          _
        %v1414 = vld [vmem:[#allocation2] sm:$0xff]
        %v1415 = vld [vmem:[%s509] sm:$0xff]
        %v1416 = vld [vmem:[%s509 + $0x8] sm:$0xff]
        %v1417 = vld [vmem:[%s509 + $0x10] sm:$0xff]
        %v1418 = vld [vmem:[%s509 + $0x18] sm:$0xff]
        %v1419 = vld [vmem:[%s509 + $0x20] sm:$0xff]
        %v1420 = vld [vmem:[%s509 + $0x28] sm:$0xff]
        %v1421 = vld [vmem:[%s509 + $0x30] sm:$0xff]
        %v1422 = vld [vmem:[%s509 + $0x38] sm:$0xff]
        %v1423 = vld [vmem:[%s509 + $0x40] sm:$0xff]
        %v1424 = vld [vmem:[%s509 + $0x48] sm:$0xff]
        %v1425 = vld [vmem:[%s509 + $0x50] sm:$0xff]
        %v1426 = vld [vmem:[%s509 + $0x58] sm:$0xff]
        %v1427 = vld [vmem:[%s509 + $0x60] sm:$0xff]
        %v1428 = vld [vmem:[%s509 + $0x68] sm:$0xff]
        %v1429 = vld [vmem:[%s509 + $0x70] sm:$0xff]
        %v1430 = vld [vmem:[%s509 + $0x78] sm:$0xff]
        %v1431 = vld [vmem:[%s509 + $0x80] sm:$0xff]
        %v1432 = vld [vmem:[%s509 + $0x88] sm:$0xff]
        %v1433 = vld [vmem:[%s509 + $0x90] sm:$0xff]
        %v1434 = vld [vmem:[%s509 + $0x98] sm:$0xff]
        %v1435 = vld [vmem:[%s509 + $0xa0] sm:$0xff]
        %v1436 = vld [vmem:[%s509 + $0xa8] sm:$0xff]
        %v1437 = vld [vmem:[%s509 + $0xb0] sm:$0xff]
        %v1438 = vld [vmem:[%s509 + $0xb8] sm:$0xff]
        %v1439 = vld [vmem:[%s509 + $0xc0] sm:$0xff]
        %v1440 = vld [vmem:[%s509 + $0xc8] sm:$0xff]
        %v1441 = vld [vmem:[%s509 + $0xd0] sm:$0xff]
        %v1442 = vld [vmem:[%s509 + $0xd8] sm:$0xff]
        %v1443 = vld [vmem:[%s509 + $0xe0] sm:$0xff]
        %v1444 = vld [vmem:[%s509 + $0xe8] sm:$0xff]
        %v1445 = vld [vmem:[%s509 + $0xf0] sm:$0xff]
        %v1446 = vld [vmem:[%s509 + $0xf8] sm:$0xff]
        %v1447 = vld [vmem:[%s570] sm:$0x3]
        %v1449 = vlaneseq
        %v1450 = vshrl.u32 %v1449, 7
        %v1451 = vsub.s32 0, %v1450
        %v1452 = vrot.slane %v1447, %v1451
        %v1453 = vlaneseq
        %v1454 = vshrl.u32 %v1453, 7
        %v1455 = vsub.s32 1, %v1454
        %v1456 = vrot.slane %v1447, %v1455
        %1459 = vmatprep.subr.mxu0 %v1416
        %1460 = vmatpush1.msra.mxu0 %v1415
        %1461 = vmatprep.subr.mxu0 %v1418
        %1462 = vmatpush1.msra.mxu0 %v1417
        %1463 = vmatprep.subr.mxu0 %v1420
        %1464 = vmatpush1.msra.mxu0 %v1419
        %1465 = vmatprep.subr.mxu0 %v1422
        %1466 = vmatpush1.msra.mxu0 %v1421
        %1467 = vmatprep.subr.mxu0 %v1424
        %1468 = vmatpush1.msra.mxu0 %v1423
        %1469 = vmatprep.subr.mxu0 %v1426
        %1470 = vmatpush1.msra.mxu0 %v1425
        %1471 = vmatprep.subr.mxu0 %v1428
        %1472 = vmatpush1.msra.mxu0 %v1427
        %1473 = vmatprep.subr.mxu0 %v1430
        %1474 = vmatpush1.msra.mxu0 %v1429
        %1475 = vmatprep.subr.mxu0 %v1432
        %1476 = vmatpush1.msra.mxu0 %v1431
        %1477 = vmatprep.subr.mxu0 %v1434
        %1478 = vmatpush1.msra.mxu0 %v1433
        %1479 = vmatprep.subr.mxu0 %v1436
        %1480 = vmatpush1.msra.mxu0 %v1435
        %1481 = vmatprep.subr.mxu0 %v1438
        %1482 = vmatpush1.msra.mxu0 %v1437
        %1483 = vmatprep.subr.mxu0 %v1440
        %1484 = vmatpush1.msra.mxu0 %v1439
        %1485 = vmatprep.subr.mxu0 %v1442
        %1486 = vmatpush1.msra.mxu0 %v1441
        %1487 = vmatprep.subr.mxu0 %v1444
        %1488 = vmatpush1.msra.mxu0 %v1443
        %1489 = vmatprep.subr.mxu0 %v1446
        %1490 = vmatpush1.msra.mxu0 %v1445
        %1491 = vmatprep.subr.mxu0 0.0
        %1492 = vmatpush1.msra.mxu0 0.0
        %1493 = vmatprep.subr.mxu0 0.0
        %1494 = vmatpush1.msra.mxu0 0.0
        %1495 = vmatprep.subr.mxu0 0.0
        %1496 = vmatpush1.msra.mxu0 0.0
        %1497 = vmatprep.subr.mxu0 0.0
        %1498 = vmatpush1.msra.mxu0 0.0
        %1499 = vmatprep.subr.mxu0 0.0
        %1500 = vmatpush1.msra.mxu0 0.0
        %1501 = vmatprep.subr.mxu0 0.0
        %1502 = vmatpush1.msra.mxu0 0.0
        %1503 = vmatprep.subr.mxu0 0.0
        %1504 = vmatpush1.msra.mxu0 0.0
        %1505 = vmatprep.subr.mxu0 0.0
        %1506 = vmatpush1.msra.mxu0 0.0
        %1507 = vmatprep.subr.mxu0 0.0
        %1508 = vmatpush1.msra.mxu0 0.0
        %1509 = vmatprep.subr.mxu0 0.0
        %1510 = vmatpush1.msra.mxu0 0.0
        %1511 = vmatprep.subr.mxu0 0.0
        %1512 = vmatpush1.msra.mxu0 0.0
        %1513 = vmatprep.subr.mxu0 0.0
        %1514 = vmatpush1.msra.mxu0 0.0
        %1515 = vmatprep.subr.mxu0 0.0
        %1516 = vmatpush1.msra.mxu0 0.0
        %1517 = vmatprep.subr.mxu0 0.0
        %1518 = vmatpush1.msra.mxu0 0.0
        %1519 = vmatprep.subr.mxu0 0.0
        %1520 = vmatpush1.msra.mxu0 0.0
        %1521 = vmatprep.subr.mxu0 0.0
        %1522 = vmatpush1.msra.mxu0 0.0
        %1523 = vmatprep.mubr.f32.mxu0 0.0
        %1524 = vmatmul.mubr.f32.gmra.mrb[0].mxu0 %v1414
        %v1525 = vpop.f32.mrb[0].mxu0
        %v1526 = vadd.f32 %v1452, %v1525
        %v1527 = vpop.f32.mrb[0].mxu0
        %v1528 = vadd.f32 %v1456, %v1527
        %1529 = vdwg.mxu0
        %1530 = vst [vmem:[%s558] sm:$0xff] %v1526
        %1531 = vst [vmem:[%s558 + $0x8] sm:$0xff] %v1528
        %s1532 = sand.u32 %s326, 1
        %s1533 = scalar_lea.sflag [#allocation6], %s1532
        %s1534 = sand.u32 %s326, 1
        %s1535 = smul.addr %s1534, 16
        %s1536 = scalar_lea.vmem [#allocation12], %s1535
        %p1537 = scmp.lt.s32.totalorder %s41, 1
        %s1538 = scalar_select %p1537, %s41, 1
        %s1539 = smul.addr %s1538, 8
        %s1540 = scalar_lea.vmem %s13, %s1539
        // Predicated region
        $region89: #{tpu_custom_call.1} parent=67 // pred_check
          %p1541 = pneg %p336
        $region90: #{tpu_custom_call.1} parent=67 // pred_check_branch
          %1543 = sbr.rel (%p1541) target = $region92
        $region91: #{tpu_custom_call.1} parent=67 // pred_region
          %s1544 = smul.u32 2, %s42
          %s1546 = ssub.s32 256, 256
          %1547 = vsyncadd %s1533, %s1546
          %s1548 = smul.addr %s41, 4
          %s1549 = sadd.s32 %s1544, %s1548
          %s1550 = smul.addr %s1549, 128
          %s1551 = scalar_lea.hbm %s12, %s1550
          %s1553 = sshll.u32 %s1536, 4
          %s1554 = int_to_ptr.vmem [resolvable:$true] %s1553
          %1556 = dma.vmem_to_hbm [thread:$0]  %s1554, 256, %s1551, %s1533
        $region92: #{tpu_custom_call.1} parent=67 // pred_fallthru
          _
        // Predicated region
        $region93: #{tpu_custom_call.1} parent=67 // pred_check
          %p1557 = pneg %p362
        $region94: #{tpu_custom_call.1} parent=67 // pred_check_branch
          %1559 = sbr.rel (%p1557) target = $region96
        $region95: #{tpu_custom_call.1} parent=67 // pred_region
          _
        $region96: #{tpu_custom_call.1} parent=67 // pred_fallthru
          _
      $region68: #{tpu_custom_call.1} parent=5 // pred_fallthru
        _
      %p1560 = scmp.le.s32.totalorder 2, %s32
      // Predicated region
      $region97: #{tpu_custom_call.1} parent=5 // pred_check
        %p1561 = pneg %p1560
      $region98: #{tpu_custom_call.1} parent=5 // pred_check_branch
        %1563 = sbr.rel (%p1561) target = $region100
      $region99: #{tpu_custom_call.1} parent=5 // pred_region
        %s1564 = ssub.s32 %s32, 2
        // Predicated region
        $region101: #{tpu_custom_call.1} parent=99 // pred_check
          %p1565 = pneg %p342
        $region102: #{tpu_custom_call.1} parent=99 // pred_check_branch
          %1567 = sbr.rel (%p1565) target = $region104
        $region103: #{tpu_custom_call.1} parent=99 // pred_region
          %s1568 = sand.u32 %s327, 1
          %s1569 = scalar_lea.sflag [#allocation6], %s1568
          %s1570 = sand.u32 %s327, 1
          %s1571 = smul.addr %s1570, 16
          %s1572 = scalar_lea.vmem [#allocation12], %s1571
          %1573 = dma.done %s1569, 256
        $region104: #{tpu_custom_call.1} parent=99 // pred_fallthru
          _
        // Predicated region
        $region105: #{tpu_custom_call.1} parent=99 // pred_check
          %p1574 = pneg %p368
        $region106: #{tpu_custom_call.1} parent=99 // pred_check_branch
          %1576 = sbr.rel (%p1574) target = $region108
        $region107: #{tpu_custom_call.1} parent=99 // pred_region
          %p1577 = scmp.lt.s32.totalorder %s43, 1
          %s1578 = scalar_select %p1577, %s43, 1
          %s1579 = smul.addr %s1578, 8
          %s1580 = scalar_lea.vmem %s13, %s1579
        $region108: #{tpu_custom_call.1} parent=99 // pred_fallthru
          _
      $region100: #{tpu_custom_call.1} parent=5 // pred_fallthru
        _
    $region6: #{tpu_custom_call.1} parent=1 // loop_footer
      %s36 = sadd.s32 1, %s32
    $region7: #{tpu_custom_call.1} parent=1 // loop_footer_branch
      %31 = sbr.rel target = $region3
    $region8: #{tpu_custom_call.1} parent=1 // loop_exit
      _
    %1581 = vsyncpa [#allocation5], 1
    %s1582 = scalar_lea.sflag [#allocation5], 1
    %1583 = vsyncpa %s1582, 1
    %1584 = vsyncpa [#allocation8], 1
    %1585 = vsyncpa [#allocation11], 1
    %s1586 = scalar_lea.sflag [#allocation11], 1
    %1587 = vsyncpa %s1586, 1
    %1588 = vsyncpa [#allocation6], 1
    %s1589 = scalar_lea.sflag [#allocation6], 1
    %1590 = vsyncpa %s1589, 1

// kernel: tpu_custom_call.1
$region0: #{tpu_custom_call.1}
  #allocation0 [shape = 'u32[]', space=smem, size = 0x4, offset = 0x4, fixed_abs, tag = 'smem constant byte address 0x4 - core index']
  #allocation1 [shape = 'u32[144,128]{1,0:T(1,128)}', space=vmem, size = 0x12000, scoped, tag = 'internal scratch']
  #allocation2 [shape = 'f32[8,128]{1,0:T(8,128)}', space=vmem, size = 0x1000, scoped, tag = 'scratch operand']
  #allocation3 [shape = 'f32[1,1]{1,0:T(1,128)S(1)}', space=vmem, size = 0x200, scoped, tag = 'scoped memory for tpu_custom_call.1']
  %s0 = inlined_call_operand.hbm [shape: f32[16,8,128], index: 0, kind: input, shape index: {}]
  %s1 = inlined_call_operand.vmem [shape: f32[1,128], index: 1, kind: input, shape index: {}]
  %s2 = inlined_call_operand.vmem [shape: f32[1,128], index: 2, kind: input, shape index: {}]
  %s3 = inlined_call_operand.vmem [shape: f32[2,128], index: 3, kind: input, shape index: {}]
  %s4 = inlined_call_operand.hbm [shape: f32[128,128], index: 4, kind: input, shape index: {}]
  %s5 = inlined_call_operand.vmem [shape: f32[1,128], index: 5, kind: input, shape index: {}]
  %s6 = inlined_call_operand.hbm [shape: f32[128,128], index: 6, kind: input, shape index: {}]
  %s7 = inlined_call_operand.vmem [shape: f32[1,128], index: 7, kind: input, shape index: {}]
  %s8 = inlined_call_operand.hbm [shape: f32[128,512], index: 8, kind: input, shape index: {}]
  %s9 = inlined_call_operand.vmem [shape: f32[1,512], index: 9, kind: input, shape index: {}]
  %s10 = inlined_call_operand.vmem [shape: f32[1,128], index: 10, kind: input, shape index: {}]
  %s11 = inlined_call_operand.<no memory space> [shape: f32[1,1], index: 11, kind: input, shape index: {}]
  %s12 = inlined_call_operand.hbm [shape: f32[16,512], index: 12, kind: output, shape index: {0}]
  %s13 = inlined_call_operand.vmem [shape: f32[16,1], index: 13, kind: output, shape index: {1}]
  %14 = xla_tuple %s12, %s13
  %s15 = sld [smem:[#allocation0]]
  $region109: #{tpu_custom_call.1} parent=0
    _
  %s17 = ssub.s32 1, %s15
  %s18 = scalar_select 0, %s17, %s15
  %v19 = vstv %s11
  %20 = vst [vmem:[#allocation3] sm:$0x1] %v19
  $region1: #{tpu_custom_call.1} parent=0
    #allocation4 [shape = 'u8[65536]{0}', space=vmem, size = 0x10000, scoped, tag = 'input window, operand 0']
    #allocation5 [shape = 's32[2]{0}', space=sflag, size = 0x8, scoped, tag = 'scoped memory for tpu_custom_call.1']
    #allocation6 [shape = 's32[2]{0}', space=sflag, size = 0x8, scoped, tag = 'scoped memory for tpu_custom_call.1']
    #allocation7 [shape = 'u8[65536]{0}', space=vmem, size = 0x10000, scoped, tag = 'input window, operand 4, single buffered']
    #allocation8 [shape = 's32[1]{0}', space=sflag, size = 0x4, scoped, tag = 'scoped memory for tpu_custom_call.1']
    #allocation9 [shape = 'u8[65536]{0}', space=vmem, size = 0x10000, scoped, tag = 'input window, operand 6, single buffered']
    #allocation10 [shape = 'u8[262144]{0}', space=vmem, size = 0x40000, scoped, tag = 'input window, operand 8']
    #allocation11 [shape = 's32[2]{0}', space=sflag, size = 0x8, scoped, tag = 'scoped memory for tpu_custom_call.1']
    #allocation12 [shape = 'u8[16384]{0}', space=vmem, size = 0x4000, scoped, tag = 'output window, operand 0']
    %21 = vsyncpa [#allocation5], 0
    %s22 = scalar_lea.sflag [#allocation5], 1
    %23 = vsyncpa %s22, 0
    %24 = vsyncpa [#allocation8], 0
    %25 = vsyncpa [#allocation11], 0
    %s26 = scalar_lea.sflag [#allocation11], 1
    %27 = vsyncpa %s26, 0
    %28 = vsyncpa [#allocation6], 0
    %s29 = scalar_lea.sflag [#allocation6], 1
    %30 = vsyncpa %s29, 0
    loop: start=0, step=1, limit=6
    $region2: #{tpu_custom_call.1} parent=1 // loop_pre_header
      _
    $region3: #{tpu_custom_call.1} parent=1 // loop_header
      %s32 = sphi 0, %s36
      %p33 = scmp.ge.s32.totalorder %s32, 6
      %s39 = sphi 0, %s51
      %s40 = sphi 0, %s47
      %s41 = sphi 0, %s39
      %s42 = sphi 0, %s40
      %s43 = sphi 0, %s41
      %s44 = sphi 0, %s42
      %s54 = sphi 0, %s56
      %s57 = sphi 0, %s54
      %s58 = sphi 0, %s57
      %s74 = sphi 0, %s58
      %s78 = sphi 0, %s78
      %s80 = sphi 0, %s78
      %s81 = sphi 0, %s80
      %s95 = sphi 0, %s81
      %s99 = sphi 0, %s99
      %s101 = sphi 0, %s99
      %s102 = sphi 0, %s101
      %s116 = sphi 0, %s102
      %s120 = sphi 0, %s120
      %s122 = sphi 0, %s120
      %s123 = sphi 0, %s122
      %s137 = sphi 0, %s123
      %s141 = sphi 0, %s141
      %s143 = sphi 0, %s141
      %s144 = sphi 0, %s143
      %s158 = sphi 0, %s144
      %s162 = sphi 0, %s162
      %s164 = sphi 0, %s162
      %s165 = sphi 0, %s164
      %s179 = sphi 0, %s165
      %s183 = sphi 0, %s183
      %s185 = sphi 0, %s183
      %s186 = sphi 0, %s185
      %s200 = sphi 0, %s186
      %s204 = sphi 0, %s204
      %s206 = sphi 0, %s204
      %s207 = sphi 0, %s206
      %s221 = sphi 0, %s207
      %s227 = sphi 0, %s229
      %s230 = sphi 0, %s227
      %s231 = sphi 0, %s230
      %s247 = sphi 0, %s231
      %s253 = sphi 0, %s255
      %s256 = sphi 0, %s253
      %s257 = sphi 0, %s256
      %s273 = sphi 0, %s257
      %s277 = sphi 0, %s277
      %s279 = sphi 0, %s277
      %s280 = sphi 0, %s279
      %s294 = sphi 0, %s280
      %s298 = sphi 0, %s298
      %s300 = sphi 0, %s298
      %s301 = sphi 0, %s300
      %s315 = sphi 0, %s301
      %s323 = sphi 0, %s325
      %s326 = sphi 0, %s323
      %s327 = sphi 0, %s326
      %s343 = sphi 0, %s327
      %s349 = sphi 0, %s351
      %s352 = sphi 0, %s349
      %s353 = sphi 0, %s352
      %s369 = sphi 0, %s353
    $region4: #{tpu_custom_call.1} parent=1 // loop_header_branch
      %35 = sbr.rel (%p33) target = $region8
    $region5: #{tpu_custom_call.1} parent=1 // loop_body
      %s37 = ssub.s32 %s32, 1
      %s38 = ssub.s32 %s32, 2
      %s45 = sadd.s32 1, %s40
      %p46 = scmp.ge.s32.totalorder %s45, 2
      %s47 = scalar_select %p46, 0, %s45
      %s48 = sadd.s32 1, %s39
      %s49 = scalar_select %p46, %s48, %s39
      %p50 = scmp.ge.s32.totalorder %s49, 2
      %s51 = scalar_select %p50, 0, %s49
      %s52 = ssub.s32 %s39, %s51
      %p53 = scmp.eq.s32.totalorder %s52, 0
      %s55 = sadd.s32 %s54, 1
      %s56 = scalar_select %p53, %s54, %s55
      %p59 = pneg %p53
      %p60 = scmp.eq.s32.totalorder %s32, 3
      %p61 = por %p59, %p60
      %p62 = scmp.ne.s32.totalorder %s54, %s57
      %p63 = scmp.eq.s32.totalorder %s32, 0
      %p64 = por %p62, %p63
      %p65 = scmp.ne.s32.totalorder %s54, %s57
      %p66 = scmp.eq.s32.totalorder %s37, 3
      %p67 = por %p65, %p66
      %p68 = scmp.ne.s32.totalorder %s57, %s58
      %p69 = scmp.eq.s32.totalorder %s37, 0
      %p70 = por %p68, %p69
      %p71 = scmp.ne.s32.totalorder %s57, %s58
      %p72 = scmp.eq.s32.totalorder %s38, 3
      %p73 = por %p71, %p72
      %p75 = scmp.ne.s32.totalorder %s58, %s74
      %p76 = scmp.eq.s32.totalorder %s38, 0
      %p77 = por %p75, %p76
      %s79 = sadd.s32 %s78, 1
      %p82 = scmp.eq.s32.totalorder %s32, 3
      %p83 = scmp.ne.s32.totalorder %s78, %s80
      %p84 = scmp.eq.s32.totalorder %s32, 0
      %p85 = por %p83, %p84
      %p86 = scmp.ne.s32.totalorder %s78, %s80
      %p87 = scmp.eq.s32.totalorder %s37, 3
      %p88 = por %p86, %p87
      %p89 = scmp.ne.s32.totalorder %s80, %s81
      %p90 = scmp.eq.s32.totalorder %s37, 0
      %p91 = por %p89, %p90
      %p92 = scmp.ne.s32.totalorder %s80, %s81
      %p93 = scmp.eq.s32.totalorder %s38, 3
      %p94 = por %p92, %p93
      %p96 = scmp.ne.s32.totalorder %s81, %s95
      %p97 = scmp.eq.s32.totalorder %s38, 0
      %p98 = por %p96, %p97
      %s100 = sadd.s32 %s99, 1
      %p103 = scmp.eq.s32.totalorder %s32, 3
      %p104 = scmp.ne.s32.totalorder %s99, %s101
      %p105 = scmp.eq.s32.totalorder %s32, 0
      %p106 = por %p104, %p105
      %p107 = scmp.ne.s32.totalorder %s99, %s101
      %p108 = scmp.eq.s32.totalorder %s37, 3
      %p109 = por %p107, %p108
      %p110 = scmp.ne.s32.totalorder %s101, %s102
      %p111 = scmp.eq.s32.totalorder %s37, 0
      %p112 = por %p110, %p111
      %p113 = scmp.ne.s32.totalorder %s101, %s102
      %p114 = scmp.eq.s32.totalorder %s38, 3
      %p115 = por %p113, %p114
      %p117 = scmp.ne.s32.totalorder %s102, %s116
      %p118 = scmp.eq.s32.totalorder %s38, 0
      %p119 = por %p117, %p118
      %s121 = sadd.s32 %s120, 1
      %p124 = scmp.eq.s32.totalorder %s32, 3
      %p125 = scmp.ne.s32.totalorder %s120, %s122
      %p126 = scmp.eq.s32.totalorder %s32, 0
      %p127 = por %p125, %p126
      %p128 = scmp.ne.s32.totalorder %s120, %s122
      %p129 = scmp.eq.s32.totalorder %s37, 3
      %p130 = por %p128, %p129
      %p131 = scmp.ne.s32.totalorder %s122, %s123
      %p132 = scmp.eq.s32.totalorder %s37, 0
      %p133 = por %p131, %p132
      %p134 = scmp.ne.s32.totalorder %s122, %s123
      %p135 = scmp.eq.s32.totalorder %s38, 3
      %p136 = por %p134, %p135
      %p138 = scmp.ne.s32.totalorder %s123, %s137
      %p139 = scmp.eq.s32.totalorder %s38, 0
      %p140 = por %p138, %p139
      %s142 = sadd.s32 %s141, 1
      %p145 = scmp.eq.s32.totalorder %s32, 3
      %p146 = scmp.ne.s32.totalorder %s141, %s143
      %p147 = scmp.eq.s32.totalorder %s32, 0
      %p148 = por %p146, %p147
      %p149 = scmp.ne.s32.totalorder %s141, %s143
      %p150 = scmp.eq.s32.totalorder %s37, 3
      %p151 = por %p149, %p150
      %p152 = scmp.ne.s32.totalorder %s143, %s144
      %p153 = scmp.eq.s32.totalorder %s37, 0
      %p154 = por %p152, %p153
      %p155 = scmp.ne.s32.totalorder %s143, %s144
      %p156 = scmp.eq.s32.totalorder %s38, 3
      %p157 = por %p155, %p156
      %p159 = scmp.ne.s32.totalorder %s144, %s158
      %p160 = scmp.eq.s32.totalorder %s38, 0
      %p161 = por %p159, %p160
      %s163 = sadd.s32 %s162, 1
      %p166 = scmp.eq.s32.totalorder %s32, 3
      %p167 = scmp.ne.s32.totalorder %s162, %s164
      %p168 = scmp.eq.s32.totalorder %s32, 0
      %p169 = por %p167, %p168
      %p170 = scmp.ne.s32.totalorder %s162, %s164
      %p171 = scmp.eq.s32.totalorder %s37, 3
      %p172 = por %p170, %p171
      %p173 = scmp.ne.s32.totalorder %s164, %s165
      %p174 = scmp.eq.s32.totalorder %s37, 0
      %p175 = por %p173, %p174
      %p176 = scmp.ne.s32.totalorder %s164, %s165
      %p177 = scmp.eq.s32.totalorder %s38, 3
      %p178 = por %p176, %p177
      %p180 = scmp.ne.s32.totalorder %s165, %s179
      %p181 = scmp.eq.s32.totalorder %s38, 0
      %p182 = por %p180, %p181
      %s184 = sadd.s32 %s183, 1
      %p187 = scmp.eq.s32.totalorder %s32, 3
      %p188 = scmp.ne.s32.totalorder %s183, %s185
      %p189 = scmp.eq.s32.totalorder %s32, 0
      %p190 = por %p188, %p189
      %p191 = scmp.ne.s32.totalorder %s183, %s185
      %p192 = scmp.eq.s32.totalorder %s37, 3
      %p193 = por %p191, %p192
      %p194 = scmp.ne.s32.totalorder %s185, %s186
      %p195 = scmp.eq.s32.totalorder %s37, 0
      %p196 = por %p194, %p195
      %p197 = scmp.ne.s32.totalorder %s185, %s186
      %p198 = scmp.eq.s32.totalorder %s38, 3
      %p199 = por %p197, %p198
      %p201 = scmp.ne.s32.totalorder %s186, %s200
      %p202 = scmp.eq.s32.totalorder %s38, 0
      %p203 = por %p201, %p202
      %s205 = sadd.s32 %s204, 1
      %p208 = scmp.eq.s32.totalorder %s32, 3
      %p209 = scmp.ne.s32.totalorder %s204, %s206
      %p210 = scmp.eq.s32.totalorder %s32, 0
      %p211 = por %p209, %p210
      %p212 = scmp.ne.s32.totalorder %s204, %s206
      %p213 = scmp.eq.s32.totalorder %s37, 3
      %p214 = por %p212, %p213
      %p215 = scmp.ne.s32.totalorder %s206, %s207
      %p216 = scmp.eq.s32.totalorder %s37, 0
      %p217 = por %p215, %p216
      %p218 = scmp.ne.s32.totalorder %s206, %s207
      %p219 = scmp.eq.s32.totalorder %s38, 3
      %p220 = por %p218, %p219
      %p222 = scmp.ne.s32.totalorder %s207, %s221
      %p223 = scmp.eq.s32.totalorder %s38, 0
      %p224 = por %p222, %p223
      %s225 = ssub.s32 %s40, %s47
      %p226 = scmp.eq.s32.totalorder %s225, 0
      %s228 = sadd.s32 %s227, 1
      %s229 = scalar_select %p226, %s227, %s228
      %p232 = pneg %p226
      %p233 = scmp.eq.s32.totalorder %s32, 3
      %p234 = por %p232, %p233
      %p235 = scmp.ne.s32.totalorder %s227, %s230
      %p236 = scmp.eq.s32.totalorder %s32, 0
      %p237 = por %p235, %p236
      %p238 = scmp.ne.s32.totalorder %s227, %s230
      %p239 = scmp.eq.s32.totalorder %s37, 3
      %p240 = por %p238, %p239
      %p241 = scmp.ne.s32.totalorder %s230, %s231
      %p242 = scmp.eq.s32.totalorder %s37, 0
      %p243 = por %p241, %p242
      %p244 = scmp.ne.s32.totalorder %s230, %s231
      %p245 = scmp.eq.s32.totalorder %s38, 3
      %p246 = por %p244, %p245
      %p248 = scmp.ne.s32.totalorder %s231, %s247
      %p249 = scmp.eq.s32.totalorder %s38, 0
      %p250 = por %p248, %p249
      %s251 = ssub.s32 %s40, %s47
      %p252 = scmp.eq.s32.totalorder %s251, 0
      %s254 = sadd.s32 %s253, 1
      %s255 = scalar_select %p252, %s253, %s254
      %p258 = pneg %p252
      %p259 = scmp.eq.s32.totalorder %s32, 3
      %p260 = por %p258, %p259
      %p261 = scmp.ne.s32.totalorder %s253, %s256
      %p262 = scmp.eq.s32.totalorder %s32, 0
      %p263 = por %p261, %p262
      %p264 = scmp.ne.s32.totalorder %s253, %s256
      %p265 = scmp.eq.s32.totalorder %s37, 3
      %p266 = por %p264, %p265
      %p267 = scmp.ne.s32.totalorder %s256, %s257
      %p268 = scmp.eq.s32.totalorder %s37, 0
      %p269 = por %p267, %p268
      %p270 = scmp.ne.s32.totalorder %s256, %s257
      %p271 = scmp.eq.s32.totalorder %s38, 3
      %p272 = por %p270, %p271
      %p274 = scmp.ne.s32.totalorder %s257, %s273
      %p275 = scmp.eq.s32.totalorder %s38, 0
      %p276 = por %p274, %p275
      %s278 = sadd.s32 %s277, 1
      %p281 = scmp.eq.s32.totalorder %s32, 3
      %p282 = scmp.ne.s32.totalorder %s277, %s279
      %p283 = scmp.eq.s32.totalorder %s32, 0
      %p284 = por %p282, %p283
      %p285 = scmp.ne.s32.totalorder %s277, %s279
      %p286 = scmp.eq.s32.totalorder %s37, 3
      %p287 = por %p285, %p286
      %p288 = scmp.ne.s32.totalorder %s279, %s280
      %p289 = scmp.eq.s32.totalorder %s37, 0
      %p290 = por %p288, %p289
      %p291 = scmp.ne.s32.totalorder %s279, %s280
      %p292 = scmp.eq.s32.totalorder %s38, 3
      %p293 = por %p291, %p292
      %p295 = scmp.ne.s32.totalorder %s280, %s294
      %p296 = scmp.eq.s32.totalorder %s38, 0
      %p297 = por %p295, %p296
      %s299 = sadd.s32 %s298, 1
      %p302 = scmp.eq.s32.totalorder %s32, 3
      %p303 = scmp.ne.s32.totalorder %s298, %s300
      %p304 = scmp.eq.s32.totalorder %s32, 0
      %p305 = por %p303, %p304
      %p306 = scmp.ne.s32.totalorder %s298, %s300
      %p307 = scmp.eq.s32.totalorder %s37, 3
      %p308 = por %p306, %p307
      %p309 = scmp.ne.s32.totalorder %s300, %s301
      %p310 = scmp.eq.s32.totalorder %s37, 0
      %p311 = por %p309, %p310
      %p312 = scmp.ne.s32.totalorder %s300, %s301
      %p313 = scmp.eq.s32.totalorder %s38, 3
      %p314 = por %p312, %p313
      %p316 = scmp.ne.s32.totalorder %s301, %s315
      %p317 = scmp.eq.s32.totalorder %s38, 0
      %p318 = por %p316, %p317
      %s319 = ssub.s32 %s39, %s51
      %s320 = ssub.s32 %s40, %s47
      %s321 = sor.u32 %s319, %s320
      %p322 = scmp.eq.s32.totalorder %s321, 0
      %s324 = sadd.s32 %s323, 1
      %s325 = scalar_select %p322, %s323, %s324
      %p328 = pneg %p322
      %p329 = scmp.eq.s32.totalorder %s32, 3
      %p330 = por %p328, %p329
      %p331 = scmp.ne.s32.totalorder %s323, %s326
      %p332 = scmp.eq.s32.totalorder %s32, 0
      %p333 = por %p331, %p332
      %p334 = scmp.ne.s32.totalorder %s323, %s326
      %p335 = scmp.eq.s32.totalorder %s37, 3
      %p336 = por %p334, %p335
      %p337 = scmp.ne.s32.totalorder %s326, %s327
      %p338 = scmp.eq.s32.totalorder %s37, 0
      %p339 = por %p337, %p338
      %p340 = scmp.ne.s32.totalorder %s326, %s327
      %p341 = scmp.eq.s32.totalorder %s38, 3
      %p342 = por %p340, %p341
      %p344 = scmp.ne.s32.totalorder %s327, %s343
      %p345 = scmp.eq.s32.totalorder %s38, 0
      %p346 = por %p344, %p345
      %s347 = ssub.s32 %s39, %s51
      %p348 = scmp.eq.s32.totalorder %s347, 0
      %s350 = sadd.s32 %s349, 1
      %s351 = scalar_select %p348, %s349, %s350
      %p354 = pneg %p348
      %p355 = scmp.eq.s32.totalorder %s32, 3
      %p356 = por %p354, %p355
      %p357 = scmp.ne.s32.totalorder %s349, %s352
      %p358 = scmp.eq.s32.totalorder %s32, 0
      %p359 = por %p357, %p358
      %p360 = scmp.ne.s32.totalorder %s349, %s352
      %p361 = scmp.eq.s32.totalorder %s37, 3
      %p362 = por %p360, %p361
      %p363 = scmp.ne.s32.totalorder %s352, %s353
      %p364 = scmp.eq.s32.totalorder %s37, 0
      %p365 = por %p363, %p364
      %p366 = scmp.ne.s32.totalorder %s352, %s353
      %p367 = scmp.eq.s32.totalorder %s38, 3
      %p368 = por %p366, %p367
      %p370 = scmp.ne.s32.totalorder %s353, %s369
      %p371 = scmp.eq.s32.totalorder %s38, 0
      %p372 = por %p370, %p371
      %p373 = scmp.le.s32.totalorder 1, %s32
      %p374 = scmp.lt.s32.totalorder %s32, 5
      %p375 = pnand %p373, %p374
      %p376 = pneg %p375
      // Predicated region
      $region9: #{tpu_custom_call.1} parent=5 // pred_check
        _
      $region10: #{tpu_custom_call.1} parent=5 // pred_check_branch
        %378 = sbr.rel (%p375) target = $region12
      $region11: #{tpu_custom_call.1} parent=5 // pred_region
        %s379 = ssub.s32 %s32, 1
        // Predicated region
        $region13: #{tpu_custom_call.1} parent=11 // pred_check
          %p380 = pneg %p91
        $region14: #{tpu_custom_call.1} parent=11 // pred_check_branch
          %382 = sbr.rel (%p380) target = $region16
        $region15: #{tpu_custom_call.1} parent=11 // pred_region
          _
        $region16: #{tpu_custom_call.1} parent=11 // pred_fallthru
          _
        // Predicated region
        $region17: #{tpu_custom_call.1} parent=11 // pred_check
          %p383 = pneg %p112
        $region18: #{tpu_custom_call.1} parent=11 // pred_check_branch
          %385 = sbr.rel (%p383) target = $region20
        $region19: #{tpu_custom_call.1} parent=11 // pred_region
          _
        $region20: #{tpu_custom_call.1} parent=11 // pred_fallthru
          _
        // Predicated region
        $region21: #{tpu_custom_call.1} parent=11 // pred_check
          %p386 = pneg %p133
        $region22: #{tpu_custom_call.1} parent=11 // pred_check_branch
          %388 = sbr.rel (%p386) target = $region24
        $region23: #{tpu_custom_call.1} parent=11 // pred_region
          _
        $region24: #{tpu_custom_call.1} parent=11 // pred_fallthru
          _
        // Predicated region
        $region25: #{tpu_custom_call.1} parent=11 // pred_check
          %p389 = pneg %p154
        $region26: #{tpu_custom_call.1} parent=11 // pred_check_branch
          %391 = sbr.rel (%p389) target = $region28
        $region27: #{tpu_custom_call.1} parent=11 // pred_region
          %s393 = ssub.s32 2048, 2048
          %394 = vsyncadd [#allocation8], %s393
          %s395 = sshll.u32 [#allocation7], 4
          %s396 = int_to_ptr.vmem [resolvable:$true] %s395
          %401 = dma.hbm_to_vmem [thread:$0]  %s4, 2048, %s396, [#allocation8], 128, 128, 8
        $region28: #{tpu_custom_call.1} parent=11 // pred_fallthru
          _
        // Predicated region
        $region29: #{tpu_custom_call.1} parent=11 // pred_check
          %p402 = pneg %p175
        $region30: #{tpu_custom_call.1} parent=11 // pred_check_branch
          %404 = sbr.rel (%p402) target = $region32
        $region31: #{tpu_custom_call.1} parent=11 // pred_region
          _
        $region32: #{tpu_custom_call.1} parent=11 // pred_fallthru
          _
        // Predicated region
        $region33: #{tpu_custom_call.1} parent=11 // pred_check
          %p405 = pneg %p196
        $region34: #{tpu_custom_call.1} parent=11 // pred_check_branch
          %407 = sbr.rel (%p405) target = $region36
        $region35: #{tpu_custom_call.1} parent=11 // pred_region
          %s409 = ssub.s32 2048, 2048
          %410 = vsyncadd [#allocation8], %s409
          %s411 = sshll.u32 [#allocation9], 4
          %s412 = int_to_ptr.vmem [resolvable:$true] %s411
          %417 = dma.hbm_to_vmem [thread:$0]  %s6, 2048, %s412, [#allocation8], 128, 128, 8
        $region36: #{tpu_custom_call.1} parent=11 // pred_fallthru
          _
        // Predicated region
        $region37: #{tpu_custom_call.1} parent=11 // pred_check
          %p418 = pneg %p217
        $region38: #{tpu_custom_call.1} parent=11 // pred_check_branch
          %420 = sbr.rel (%p418) target = $region40
        $region39: #{tpu_custom_call.1} parent=11 // pred_region
          _
        $region40: #{tpu_custom_call.1} parent=11 // pred_fallthru
          _
        // Predicated region
        $region41: #{tpu_custom_call.1} parent=11 // pred_check
          %p421 = pneg %p290
        $region42: #{tpu_custom_call.1} parent=11 // pred_check_branch
          %423 = sbr.rel (%p421) target = $region44
        $region43: #{tpu_custom_call.1} parent=11 // pred_region
          _
        $region44: #{tpu_custom_call.1} parent=11 // pred_fallthru
          _
        // Predicated region
        $region45: #{tpu_custom_call.1} parent=11 // pred_check
          %p424 = pneg %p311
        $region46: #{tpu_custom_call.1} parent=11 // pred_check_branch
          %426 = sbr.rel (%p424) target = $region48
        $region47: #{tpu_custom_call.1} parent=11 // pred_region
          _
        $region48: #{tpu_custom_call.1} parent=11 // pred_fallthru
          _
      $region12: #{tpu_custom_call.1} parent=5 // pred_fallthru
        _
      %p427 = scmp.lt.s32.totalorder %s32, 4
      // Predicated region
      $region49: #{tpu_custom_call.1} parent=5 // pred_check
        %p428 = pneg %p427
      $region50: #{tpu_custom_call.1} parent=5 // pred_check_branch
        %430 = sbr.rel (%p428) target = $region52
      $region51: #{tpu_custom_call.1} parent=5 // pred_region
        // Predicated region
        $region53: #{tpu_custom_call.1} parent=51 // pred_check
          %p431 = pneg %p64
        $region54: #{tpu_custom_call.1} parent=51 // pred_check_branch
          %433 = sbr.rel (%p431) target = $region56
        $region55: #{tpu_custom_call.1} parent=51 // pred_region
          %s434 = sand.u32 %s54, 1
          %s435 = scalar_lea.sflag [#allocation5], %s434
          %s436 = sand.u32 %s54, 1
          %s437 = smul.addr %s436, 64
          %s438 = scalar_lea.vmem [#allocation4], %s437
          %s439 = smul.u32 8, %s39
          %s441 = ssub.s32 1024, 1024
          %442 = vsyncadd %s435, %s441
          %s443 = smul.addr %s439, 128
          %s444 = scalar_lea.hbm %s0, %s443
          %s445 = sshll.u32 %s438, 4
          %s446 = int_to_ptr.vmem [resolvable:$true] %s445
          %451 = dma.hbm_to_vmem [thread:$0]  %s444, 1024, %s446, %s435, 128, 128, 8
        $region56: #{tpu_custom_call.1} parent=51 // pred_fallthru
          _
        // Predicated region
        $region57: #{tpu_custom_call.1} parent=51 // pred_check
          %p452 = pneg %p237
        $region58: #{tpu_custom_call.1} parent=51 // pred_check_branch
          %454 = sbr.rel (%p452) target = $region60
        $region59: #{tpu_custom_call.1} parent=51 // pred_region
          %s455 = sand.u32 %s227, 1
          %s456 = scalar_lea.sflag [#allocation11], %s455
          %s457 = sand.u32 %s227, 1
          %s458 = smul.addr %s457, 256
          %s459 = scalar_lea.vmem [#allocation10], %s458
          %s460 = smul.u32 2, %s40
          %s462 = ssub.s32 4096, 4096
          %463 = vsyncadd %s456, %s462
          %s464 = smul.addr %s460, 128
          %s465 = scalar_lea.hbm %s8, %s464
          %s466 = sshll.u32 %s459, 4
          %s467 = int_to_ptr.vmem [resolvable:$true] %s466
          %472 = dma.hbm_to_vmem [thread:$0]  %s465, 4096, %s467, %s456, 512, 256, 16
        $region60: #{tpu_custom_call.1} parent=51 // pred_fallthru
          _
        // Predicated region
        $region61: #{tpu_custom_call.1} parent=51 // pred_check
          %p473 = pneg %p263
        $region62: #{tpu_custom_call.1} parent=51 // pred_check_branch
          %475 = sbr.rel (%p473) target = $region64
        $region63: #{tpu_custom_call.1} parent=51 // pred_region
          %s476 = smul.u32 2, %s40
          %p477 = scmp.lt.s32.totalorder %s476, 3
          %s478 = scalar_select %p477, %s476, 3
          %s479 = scalar_lea.vmem %s9, %s478
          %s480 = smul.u32 2, %s40
        $region64: #{tpu_custom_call.1} parent=51 // pred_fallthru
          _
      $region52: #{tpu_custom_call.1} parent=5 // pred_fallthru
        _
      %p481 = scmp.le.s32.totalorder 1, %s32
      %p482 = scmp.lt.s32.totalorder %s32, 5
      %p483 = pnand %p481, %p482
      %p484 = pneg %p483
      // Predicated region
      $region65: #{tpu_custom_call.1} parent=5 // pred_check
        _
      $region66: #{tpu_custom_call.1} parent=5 // pred_check_branch
        %486 = sbr.rel (%p483) target = $region68
      $region67: #{tpu_custom_call.1} parent=5 // pred_region
        %s487 = ssub.s32 %s32, 1
        %s488 = sand.u32 %s57, 1
        %s489 = scalar_lea.sflag [#allocation5], %s488
        %s490 = sand.u32 %s57, 1
        %s491 = smul.addr %s490, 64
        %s492 = scalar_lea.vmem [#allocation4], %s491
        // Predicated region
        $region69: #{tpu_custom_call.1} parent=67 // pred_check
          %p493 = pneg %p70
        $region70: #{tpu_custom_call.1} parent=67 // pred_check_branch
          %495 = sbr.rel (%p493) target = $region72
        $region71: #{tpu_custom_call.1} parent=67 // pred_region
          %496 = dma.done %s489, 1024
        $region72: #{tpu_custom_call.1} parent=67 // pred_fallthru
          _
        // Predicated region
        $region73: #{tpu_custom_call.1} parent=67 // pred_check
          %p497 = pneg %p154
        $region74: #{tpu_custom_call.1} parent=67 // pred_check_branch
          %499 = sbr.rel (%p497) target = $region76
        $region75: #{tpu_custom_call.1} parent=67 // pred_region
          %500 = dma.done [#allocation8], 2048
        $region76: #{tpu_custom_call.1} parent=67 // pred_fallthru
          _
        // Predicated region
        $region77: #{tpu_custom_call.1} parent=67 // pred_check
          %p501 = pneg %p196
        $region78: #{tpu_custom_call.1} parent=67 // pred_check_branch
          %503 = sbr.rel (%p501) target = $region80
        $region79: #{tpu_custom_call.1} parent=67 // pred_region
          %504 = dma.done [#allocation8], 2048
        $region80: #{tpu_custom_call.1} parent=67 // pred_fallthru
          _
        %s505 = sand.u32 %s230, 1
        %s506 = scalar_lea.sflag [#allocation11], %s505
        %s507 = sand.u32 %s230, 1
        %s508 = smul.addr %s507, 256
        %s509 = scalar_lea.vmem [#allocation10], %s508
        // Predicated region
        $region81: #{tpu_custom_call.1} parent=67 // pred_check
          %p510 = pneg %p243
        $region82: #{tpu_custom_call.1} parent=67 // pred_check_branch
          %512 = sbr.rel (%p510) target = $region84
        $region83: #{tpu_custom_call.1} parent=67 // pred_region
          %513 = dma.done %s506, 4096
        $region84: #{tpu_custom_call.1} parent=67 // pred_fallthru
          _
        %s514 = sand.u32 %s57, 1
        %s515 = scalar_lea.sflag [#allocation5], %s514
        %s516 = sand.u32 %s57, 1
        %s517 = smul.addr %s516, 64
        %s518 = scalar_lea.vmem [#allocation4], %s517
        %p519 = pneg %p70
        %p520 = pneg %p67
        %p521 = pneg %p91
        %p522 = pneg %p88
        %p523 = pneg %p112
        %p524 = pneg %p109
        %p525 = pneg %p133
        %p526 = pneg %p130
        %p527 = pneg %p154
        %p528 = pneg %p151
        %p529 = pneg %p175
        %p530 = pneg %p172
        %p531 = pneg %p196
        %p532 = pneg %p193
        %p533 = pneg %p217
        %p534 = pneg %p214
        %s535 = sand.u32 %s230, 1
        %s536 = scalar_lea.sflag [#allocation11], %s535
        %s537 = sand.u32 %s230, 1
        %s538 = smul.addr %s537, 256
        %s539 = scalar_lea.vmem [#allocation10], %s538
        %p540 = pneg %p243
        %p541 = pneg %p240
        %s542 = smul.u32 2, %s42
        %p543 = scmp.lt.s32.totalorder %s542, 3
        %s544 = scalar_select %p543, %s542, 3
        %s545 = scalar_lea.vmem %s9, %s544
        %p546 = pneg %p269
        %p547 = pneg %p266
        %p548 = pneg %p290
        %p549 = pneg %p287
        %p550 = pneg %p311
        %p551 = pneg %p308
        %p552 = pneg %p339
        %p553 = pneg %p336
        %s554 = sand.u32 %s326, 1
        %s555 = scalar_lea.sflag [#allocation6], %s554
        %s556 = sand.u32 %s326, 1
        %s557 = smul.addr %s556, 16
        %s558 = scalar_lea.vmem [#allocation12], %s557
        %p559 = pneg %p365
        %p560 = pneg %p362
        %p561 = scmp.lt.s32.totalorder %s41, 1
        %s562 = scalar_select %p561, %s41, 1
        %s563 = smul.addr %s562, 8
        %s564 = scalar_lea.vmem %s13, %s563
        %s565 = smul.u32 8, %s41
        %s566 = smul.u32 2, %s42
        %s567 = smul.u32 2, %s42
        %p568 = scmp.lt.s32.totalorder %s567, 3
        %s569 = scalar_select %p568, %s567, 3
        %s570 = scalar_lea.vmem %s9, %s569
        %s571 = smul.u32 2, %s42
        %s572 = smul.u32 2, %s42
        %p573 = scmp.lt.s32.totalorder %s41, 1
        %s574 = scalar_select %p573, %s41, 1
        %s575 = smul.addr %s574, 8
        %s576 = scalar_lea.vmem %s13, %s575
        %p577 = scmp.eq.s32.totalorder %s42, 0
        // Predicated region
        $region85: #{tpu_custom_call.1} parent=67 // pred_check
          %p578 = pneg %p577
        $region86: #{tpu_custom_call.1} parent=67 // pred_check_branch
          %580 = sbr.rel (%p578) target = $region88
        $region87: #{tpu_custom_call.1} parent=67 // pred_region
          %v581 = vld [vmem:[%s492] sm:$0xff]
          %v582 = vld [vmem:[%s492 + $0x8] sm:$0xff]
          %v583 = vld [vmem:[%s492 + $0x10] sm:$0xff]
          %v584 = vld [vmem:[%s492 + $0x18] sm:$0xff]
          %v585 = vld [vmem:[%s492 + $0x20] sm:$0xff]
          %v586 = vld [vmem:[%s492 + $0x28] sm:$0xff]
          %v587 = vld [vmem:[%s492 + $0x30] sm:$0xff]
          %v588 = vld [vmem:[%s492 + $0x38] sm:$0xff]
          %589 = vadd.xlane.f32.xlu0 %v581
          %v590 = vpop.xlane.xlu0 %589
          %591 = vadd.xlane.f32.xlu0 %v582
          %v592 = vpop.xlane.xlu0 %591
          %593 = vadd.xlane.f32.xlu0 %v583
          %v594 = vpop.xlane.xlu0 %593
          %595 = vadd.xlane.f32.xlu0 %v584
          %v596 = vpop.xlane.xlu0 %595
          %597 = vadd.xlane.f32.xlu0 %v585
          %v598 = vpop.xlane.xlu0 %597
          %599 = vadd.xlane.f32.xlu0 %v586
          %v600 = vpop.xlane.xlu0 %599
          %601 = vadd.xlane.f32.xlu0 %v587
          %v602 = vpop.xlane.xlu0 %601
          %603 = vadd.xlane.f32.xlu0 %v588
          %v604 = vpop.xlane.xlu0 %603
          %v605 = vrcp.pop 128.0
          %v606 = vmul.f32 %v590, %v605
          %v607 = vmul.f32 %v592, %v605
          %v608 = vmul.f32 %v594, %v605
          %v609 = vmul.f32 %v596, %v605
          %v610 = vmul.f32 %v598, %v605
          %v611 = vmul.f32 %v600, %v605
          %v612 = vmul.f32 %v602, %v605
          %v613 = vmul.f32 %v604, %v605
          %v614 = vsub.f32 %v581, %v606
          %v615 = vsub.f32 %v582, %v607
          %v616 = vsub.f32 %v583, %v608
          %v617 = vsub.f32 %v584, %v609
          %v618 = vsub.f32 %v585, %v610
          %v619 = vsub.f32 %v586, %v611
          %v620 = vsub.f32 %v587, %v612
          %v621 = vsub.f32 %v588, %v613
          %v622 = vmul.f32 %v614, %v614
          %v623 = vmul.f32 %v615, %v615
          %v624 = vmul.f32 %v616, %v616
          %v625 = vmul.f32 %v617, %v617
          %v626 = vmul.f32 %v618, %v618
          %v627 = vmul.f32 %v619, %v619
          %v628 = vmul.f32 %v620, %v620
          %v629 = vmul.f32 %v621, %v621
          %630 = vadd.xlane.f32.xlu0 %v622
          %v631 = vpop.xlane.xlu0 %630
          %632 = vadd.xlane.f32.xlu0 %v623
          %v633 = vpop.xlane.xlu0 %632
          %634 = vadd.xlane.f32.xlu0 %v624
          %v635 = vpop.xlane.xlu0 %634
          %636 = vadd.xlane.f32.xlu0 %v625
          %v637 = vpop.xlane.xlu0 %636
          %638 = vadd.xlane.f32.xlu0 %v626
          %v639 = vpop.xlane.xlu0 %638
          %640 = vadd.xlane.f32.xlu0 %v627
          %v641 = vpop.xlane.xlu0 %640
          %642 = vadd.xlane.f32.xlu0 %v628
          %v643 = vpop.xlane.xlu0 %642
          %644 = vadd.xlane.f32.xlu0 %v629
          %v645 = vpop.xlane.xlu0 %644
          %v646 = vmul.f32 %v631, %v605
          %v647 = vmul.f32 %v633, %v605
          %v648 = vmul.f32 %v635, %v605
          %v649 = vmul.f32 %v637, %v605
          %v650 = vmul.f32 %v639, %v605
          %v651 = vmul.f32 %v641, %v605
          %v652 = vmul.f32 %v643, %v605
          %v653 = vmul.f32 %v645, %v605
          %v654 = vadd.f32 %v646, 1e-05
          %v655 = vadd.f32 %v647, 1e-05
          %v656 = vadd.f32 %v648, 1e-05
          %v657 = vadd.f32 %v649, 1e-05
          %v658 = vadd.f32 %v650, 1e-05
          %v659 = vadd.f32 %v651, 1e-05
          %v660 = vadd.f32 %v652, 1e-05
          %v661 = vadd.f32 %v653, 1e-05
          %v662 = vrsqrt.pop %v654
          %v663 = vrsqrt.pop %v655
          %v664 = vrsqrt.pop %v656
          %v665 = vrsqrt.pop %v657
          %v666 = vrsqrt.pop %v658
          %v667 = vrsqrt.pop %v659
          %v668 = vrsqrt.pop %v660
          %v669 = vrsqrt.pop %v661
          %v670 = vmul.f32 %v614, %v662
          %v671 = vmul.f32 %v615, %v663
          %v672 = vmul.f32 %v616, %v664
          %v673 = vmul.f32 %v617, %v665
          %v674 = vmul.f32 %v618, %v666
          %v675 = vmul.f32 %v619, %v667
          %v676 = vmul.f32 %v620, %v668
          %v677 = vmul.f32 %v621, %v669
          %v678 = vld [vmem:[%s1] sm:$0x1]
          %v680 = vlaneseq
          %v681 = vshrl.u32 %v680, 7
          %v682 = vsub.s32 0, %v681
          %v683 = vrot.slane %v678, %v682
          %v685 = vmul.f32 %v670, %v683
          %v686 = vmul.f32 %v671, %v683
          %v687 = vmul.f32 %v672, %v683
          %v688 = vmul.f32 %v673, %v683
          %v689 = vmul.f32 %v674, %v683
          %v690 = vmul.f32 %v675, %v683
          %v691 = vmul.f32 %v676, %v683
          %v692 = vmul.f32 %v677, %v683
          %v693 = vld [vmem:[%s2] sm:$0x1]
          %v695 = vlaneseq
          %v696 = vshrl.u32 %v695, 7
          %v697 = vsub.s32 0, %v696
          %v698 = vrot.slane %v693, %v697
          %v700 = vadd.f32 %v685, %v698
          %v701 = vadd.f32 %v686, %v698
          %v702 = vadd.f32 %v687, %v698
          %v703 = vadd.f32 %v688, %v698
          %v704 = vadd.f32 %v689, %v698
          %v705 = vadd.f32 %v690, %v698
          %v706 = vadd.f32 %v691, %v698
          %v707 = vadd.f32 %v692, %v698
          %v708 = vld [vmem:[%s3] sm:$0x1]
          %v709 = vlaneseq
          %v710 = vshrl.u32 %v709, 7
          %v711 = vsub.s32 0, %v710
          %v712 = vrot.slane %v708, %v711
          %v713 = vmul.f32 %v700, %v712
          %v714 = vmul.f32 %v701, %v712
          %v715 = vmul.f32 %v702, %v712
          %v716 = vmul.f32 %v703, %v712
          %v717 = vmul.f32 %v704, %v712
          %v718 = vmul.f32 %v705, %v712
          %v719 = vmul.f32 %v706, %v712
          %v720 = vmul.f32 %v707, %v712
          %721 = vadd.xlane.f32.xlu0 %v713
          %v722 = vpop.xlane.xlu0 %721
          %723 = vadd.xlane.f32.xlu0 %v714
          %v724 = vpop.xlane.xlu0 %723
          %725 = vadd.xlane.f32.xlu0 %v715
          %v726 = vpop.xlane.xlu0 %725
          %727 = vadd.xlane.f32.xlu0 %v716
          %v728 = vpop.xlane.xlu0 %727
          %729 = vadd.xlane.f32.xlu0 %v717
          %v730 = vpop.xlane.xlu0 %729
          %731 = vadd.xlane.f32.xlu0 %v718
          %v732 = vpop.xlane.xlu0 %731
          %733 = vadd.xlane.f32.xlu0 %v719
          %v734 = vpop.xlane.xlu0 %733
          %735 = vadd.xlane.f32.xlu0 %v720
          %v736 = vpop.xlane.xlu0 %735
          %v737 = vrot.slane %v722, 4
          %v738 = vmax.f32 %v722, %v737
          %v739 = vrot.slane %v738, 2
          %v740 = vmax.f32 %v738, %v739
          %v741 = vrot.slane %v740, 1
          %v742 = vmax.f32 %v740, %v741
          %v743 = vrot.slane %v724, 4
          %v744 = vmax.f32 %v724, %v743
          %v745 = vrot.slane %v744, 2
          %v746 = vmax.f32 %v744, %v745
          %v747 = vrot.slane %v746, 1
          %v748 = vmax.f32 %v746, %v747
          %v749 = vrot.slane %v726, 4
          %v750 = vmax.f32 %v726, %v749
          %v751 = vrot.slane %v750, 2
          %v752 = vmax.f32 %v750, %v751
          %v753 = vrot.slane %v752, 1
          %v754 = vmax.f32 %v752, %v753
          %v755 = vrot.slane %v728, 4
          %v756 = vmax.f32 %v728, %v755
          %v757 = vrot.slane %v756, 2
          %v758 = vmax.f32 %v756, %v757
          %v759 = vrot.slane %v758, 1
          %v760 = vmax.f32 %v758, %v759
          %v761 = vrot.slane %v730, 4
          %v762 = vmax.f32 %v730, %v761
          %v763 = vrot.slane %v762, 2
          %v764 = vmax.f32 %v762, %v763
          %v765 = vrot.slane %v764, 1
          %v766 = vmax.f32 %v764, %v765
          %v767 = vrot.slane %v732, 4
          %v768 = vmax.f32 %v732, %v767
          %v769 = vrot.slane %v768, 2
          %v770 = vmax.f32 %v768, %v769
          %v771 = vrot.slane %v770, 1
          %v772 = vmax.f32 %v770, %v771
          %v773 = vrot.slane %v734, 4
          %v774 = vmax.f32 %v734, %v773
          %v775 = vrot.slane %v774, 2
          %v776 = vmax.f32 %v774, %v775
          %v777 = vrot.slane %v776, 1
          %v778 = vmax.f32 %v776, %v777
          %v779 = vrot.slane %v736, 4
          %v780 = vmax.f32 %v736, %v779
          %v781 = vrot.slane %v780, 2
          %v782 = vmax.f32 %v780, %v781
          %v783 = vrot.slane %v782, 1
          %v784 = vmax.f32 %v782, %v783
          %v785 = vsub.f32 %v722, %v742
          %v786 = vsub.f32 %v724, %v748
          %v787 = vsub.f32 %v726, %v754
          %v788 = vsub.f32 %v728, %v760
          %v789 = vsub.f32 %v730, %v766
          %v790 = vsub.f32 %v732, %v772
          %v791 = vsub.f32 %v734, %v778
          %v792 = vsub.f32 %v736, %v784
          %v793 = vmul.f32 %v785, 1.442695
          %v794 = vpow.pop %v793
          %v795 = vmul.f32 %v786, 1.442695
          %v796 = vpow.pop %v795
          %v797 = vmul.f32 %v787, 1.442695
          %v798 = vpow.pop %v797
          %v799 = vmul.f32 %v788, 1.442695
          %v800 = vpow.pop %v799
          %v801 = vmul.f32 %v789, 1.442695
          %v802 = vpow.pop %v801
          %v803 = vmul.f32 %v790, 1.442695
          %v804 = vpow.pop %v803
          %v805 = vmul.f32 %v791, 1.442695
          %v806 = vpow.pop %v805
          %v807 = vmul.f32 %v792, 1.442695
          %v808 = vpow.pop %v807
          %v809 = vrot.slane %v794, 4
          %v810 = vadd.f32 %v794, %v809
          %v811 = vrot.slane %v810, 2
          %v812 = vadd.f32 %v810, %v811
          %v813 = vrot.slane %v812, 1
          %v814 = vadd.f32 %v812, %v813
          %v815 = vrot.slane %v796, 4
          %v816 = vadd.f32 %v796, %v815
          %v817 = vrot.slane %v816, 2
          %v818 = vadd.f32 %v816, %v817
          %v819 = vrot.slane %v818, 1
          %v820 = vadd.f32 %v818, %v819
          %v821 = vrot.slane %v798, 4
          %v822 = vadd.f32 %v798, %v821
          %v823 = vrot.slane %v822, 2
          %v824 = vadd.f32 %v822, %v823
          %v825 = vrot.slane %v824, 1
          %v826 = vadd.f32 %v824, %v825
          %v827 = vrot.slane %v800, 4
          %v828 = vadd.f32 %v800, %v827
          %v829 = vrot.slane %v828, 2
          %v830 = vadd.f32 %v828, %v829
          %v831 = vrot.slane %v830, 1
          %v832 = vadd.f32 %v830, %v831
          %v833 = vrot.slane %v802, 4
          %v834 = vadd.f32 %v802, %v833
          %v835 = vrot.slane %v834, 2
          %v836 = vadd.f32 %v834, %v835
          %v837 = vrot.slane %v836, 1
          %v838 = vadd.f32 %v836, %v837
          %v839 = vrot.slane %v804, 4
          %v840 = vadd.f32 %v804, %v839
          %v841 = vrot.slane %v840, 2
          %v842 = vadd.f32 %v840, %v841
          %v843 = vrot.slane %v842, 1
          %v844 = vadd.f32 %v842, %v843
          %v845 = vrot.slane %v806, 4
          %v846 = vadd.f32 %v806, %v845
          %v847 = vrot.slane %v846, 2
          %v848 = vadd.f32 %v846, %v847
          %v849 = vrot.slane %v848, 1
          %v850 = vadd.f32 %v848, %v849
          %v851 = vrot.slane %v808, 4
          %v852 = vadd.f32 %v808, %v851
          %v853 = vrot.slane %v852, 2
          %v854 = vadd.f32 %v852, %v853
          %v855 = vrot.slane %v854, 1
          %v856 = vadd.f32 %v854, %v855
          %v857 = vrcp.pop %v814
          %v858 = vmul.f32 %v794, %v857
          %v859 = vrcp.pop %v820
          %v860 = vmul.f32 %v796, %v859
          %v861 = vrcp.pop %v826
          %v862 = vmul.f32 %v798, %v861
          %v863 = vrcp.pop %v832
          %v864 = vmul.f32 %v800, %v863
          %v865 = vrcp.pop %v838
          %v866 = vmul.f32 %v802, %v865
          %v867 = vrcp.pop %v844
          %v868 = vmul.f32 %v804, %v867
          %v869 = vrcp.pop %v850
          %v870 = vmul.f32 %v806, %v869
          %v871 = vrcp.pop %v856
          %v872 = vmul.f32 %v808, %v871
          %v873 = vmul.f32 %v858, %v700
          %v874 = vmul.f32 %v860, %v701
          %v875 = vmul.f32 %v862, %v702
          %v876 = vmul.f32 %v864, %v703
          %v877 = vmul.f32 %v866, %v704
          %v878 = vmul.f32 %v868, %v705
          %v879 = vmul.f32 %v870, %v706
          %v880 = vmul.f32 %v872, %v707
          %v881 = vrot.slane %v873, 4
          %v882 = vadd.f32 %v873, %v881
          %v883 = vrot.slane %v882, 2
          %v884 = vadd.f32 %v882, %v883
          %v885 = vrot.slane %v884, 1
          %v886 = vadd.f32 %v884, %v885
          %v887 = vrot.slane %v874, 4
          %v888 = vadd.f32 %v874, %v887
          %v889 = vrot.slane %v888, 2
          %v890 = vadd.f32 %v888, %v889
          %v891 = vrot.slane %v890, 1
          %v892 = vadd.f32 %v890, %v891
          %v893 = vrot.slane %v875, 4
          %v894 = vadd.f32 %v875, %v893
          %v895 = vrot.slane %v894, 2
          %v896 = vadd.f32 %v894, %v895
          %v897 = vrot.slane %v896, 1
          %v898 = vadd.f32 %v896, %v897
          %v899 = vrot.slane %v876, 4
          %v900 = vadd.f32 %v876, %v899
          %v901 = vrot.slane %v900, 2
          %v902 = vadd.f32 %v900, %v901
          %v903 = vrot.slane %v902, 1
          %v904 = vadd.f32 %v902, %v903
          %v905 = vrot.slane %v877, 4
          %v906 = vadd.f32 %v877, %v905
          %v907 = vrot.slane %v906, 2
          %v908 = vadd.f32 %v906, %v907
          %v909 = vrot.slane %v908, 1
          %v910 = vadd.f32 %v908, %v909
          %v911 = vrot.slane %v878, 4
          %v912 = vadd.f32 %v878, %v911
          %v913 = vrot.slane %v912, 2
          %v914 = vadd.f32 %v912, %v913
          %v915 = vrot.slane %v914, 1
          %v916 = vadd.f32 %v914, %v915
          %v917 = vrot.slane %v879, 4
          %v918 = vadd.f32 %v879, %v917
          %v919 = vrot.slane %v918, 2
          %v920 = vadd.f32 %v918, %v919
          %v921 = vrot.slane %v920, 1
          %v922 = vadd.f32 %v920, %v921
          %v923 = vrot.slane %v880, 4
          %v924 = vadd.f32 %v880, %v923
          %v925 = vrot.slane %v924, 2
          %v926 = vadd.f32 %v924, %v925
          %v927 = vrot.slane %v926, 1
          %v928 = vadd.f32 %v926, %v927
          %v929 = vld [vmem:[%s3 + $0x1] sm:$0x1]
          %v930 = vlaneseq
          %v931 = vshrl.u32 %v930, 7
          %v932 = vsub.s32 0, %v931
          %v933 = vrot.slane %v929, %v932
          %v934 = vmul.f32 %v700, %v933
          %v935 = vmul.f32 %v701, %v933
          %v936 = vmul.f32 %v702, %v933
          %v937 = vmul.f32 %v703, %v933
          %v938 = vmul.f32 %v704, %v933
          %v939 = vmul.f32 %v705, %v933
          %v940 = vmul.f32 %v706, %v933
          %v941 = vmul.f32 %v707, %v933
          %942 = vadd.xlane.f32.xlu0 %v934
          %v943 = vpop.xlane.xlu0 %942
          %944 = vadd.xlane.f32.xlu0 %v935
          %v945 = vpop.xlane.xlu0 %944
          %946 = vadd.xlane.f32.xlu0 %v936
          %v947 = vpop.xlane.xlu0 %946
          %948 = vadd.xlane.f32.xlu0 %v937
          %v949 = vpop.xlane.xlu0 %948
          %950 = vadd.xlane.f32.xlu0 %v938
          %v951 = vpop.xlane.xlu0 %950
          %952 = vadd.xlane.f32.xlu0 %v939
          %v953 = vpop.xlane.xlu0 %952
          %954 = vadd.xlane.f32.xlu0 %v940
          %v955 = vpop.xlane.xlu0 %954
          %956 = vadd.xlane.f32.xlu0 %v941
          %v957 = vpop.xlane.xlu0 %956
          %v958 = vrot.slane %v943, 4
          %v959 = vmax.f32 %v943, %v958
          %v960 = vrot.slane %v959, 2
          %v961 = vmax.f32 %v959, %v960
          %v962 = vrot.slane %v961, 1
          %v963 = vmax.f32 %v961, %v962
          %v964 = vrot.slane %v945, 4
          %v965 = vmax.f32 %v945, %v964
          %v966 = vrot.slane %v965, 2
          %v967 = vmax.f32 %v965, %v966
          %v968 = vrot.slane %v967, 1
          %v969 = vmax.f32 %v967, %v968
          %v970 = vrot.slane %v947, 4
          %v971 = vmax.f32 %v947, %v970
          %v972 = vrot.slane %v971, 2
          %v973 = vmax.f32 %v971, %v972
          %v974 = vrot.slane %v973, 1
          %v975 = vmax.f32 %v973, %v974
          %v976 = vrot.slane %v949, 4
          %v977 = vmax.f32 %v949, %v976
          %v978 = vrot.slane %v977, 2
          %v979 = vmax.f32 %v977, %v978
          %v980 = vrot.slane %v979, 1
          %v981 = vmax.f32 %v979, %v980
          %v982 = vrot.slane %v951, 4
          %v983 = vmax.f32 %v951, %v982
          %v984 = vrot.slane %v983, 2
          %v985 = vmax.f32 %v983, %v984
          %v986 = vrot.slane %v985, 1
          %v987 = vmax.f32 %v985, %v986
          %v988 = vrot.slane %v953, 4
          %v989 = vmax.f32 %v953, %v988
          %v990 = vrot.slane %v989, 2
          %v991 = vmax.f32 %v989, %v990
          %v992 = vrot.slane %v991, 1
          %v993 = vmax.f32 %v991, %v992
          %v994 = vrot.slane %v955, 4
          %v995 = vmax.f32 %v955, %v994
          %v996 = vrot.slane %v995, 2
          %v997 = vmax.f32 %v995, %v996
          %v998 = vrot.slane %v997, 1
          %v999 = vmax.f32 %v997, %v998
          %v1000 = vrot.slane %v957, 4
          %v1001 = vmax.f32 %v957, %v1000
          %v1002 = vrot.slane %v1001, 2
          %v1003 = vmax.f32 %v1001, %v1002
          %v1004 = vrot.slane %v1003, 1
          %v1005 = vmax.f32 %v1003, %v1004
          %v1006 = vsub.f32 %v943, %v963
          %v1007 = vsub.f32 %v945, %v969
          %v1008 = vsub.f32 %v947, %v975
          %v1009 = vsub.f32 %v949, %v981
          %v1010 = vsub.f32 %v951, %v987
          %v1011 = vsub.f32 %v953, %v993
          %v1012 = vsub.f32 %v955, %v999
          %v1013 = vsub.f32 %v957, %v1005
          %v1014 = vmul.f32 %v1006, 1.442695
          %v1015 = vpow.pop %v1014
          %v1016 = vmul.f32 %v1007, 1.442695
          %v1017 = vpow.pop %v1016
          %v1018 = vmul.f32 %v1008, 1.442695
          %v1019 = vpow.pop %v1018
          %v1020 = vmul.f32 %v1009, 1.442695
          %v1021 = vpow.pop %v1020
          %v1022 = vmul.f32 %v1010, 1.442695
          %v1023 = vpow.pop %v1022
          %v1024 = vmul.f32 %v1011, 1.442695
          %v1025 = vpow.pop %v1024
          %v1026 = vmul.f32 %v1012, 1.442695
          %v1027 = vpow.pop %v1026
          %v1028 = vmul.f32 %v1013, 1.442695
          %v1029 = vpow.pop %v1028
          %v1030 = vrot.slane %v1015, 4
          %v1031 = vadd.f32 %v1015, %v1030
          %v1032 = vrot.slane %v1031, 2
          %v1033 = vadd.f32 %v1031, %v1032
          %v1034 = vrot.slane %v1033, 1
          %v1035 = vadd.f32 %v1033, %v1034
          %v1036 = vrot.slane %v1017, 4
          %v1037 = vadd.f32 %v1017, %v1036
          %v1038 = vrot.slane %v1037, 2
          %v1039 = vadd.f32 %v1037, %v1038
          %v1040 = vrot.slane %v1039, 1
          %v1041 = vadd.f32 %v1039, %v1040
          %v1042 = vrot.slane %v1019, 4
          %v1043 = vadd.f32 %v1019, %v1042
          %v1044 = vrot.slane %v1043, 2
          %v1045 = vadd.f32 %v1043, %v1044
          %v1046 = vrot.slane %v1045, 1
          %v1047 = vadd.f32 %v1045, %v1046
          %v1048 = vrot.slane %v1021, 4
          %v1049 = vadd.f32 %v1021, %v1048
          %v1050 = vrot.slane %v1049, 2
          %v1051 = vadd.f32 %v1049, %v1050
          %v1052 = vrot.slane %v1051, 1
          %v1053 = vadd.f32 %v1051, %v1052
          %v1054 = vrot.slane %v1023, 4
          %v1055 = vadd.f32 %v1023, %v1054
          %v1056 = vrot.slane %v1055, 2
          %v1057 = vadd.f32 %v1055, %v1056
          %v1058 = vrot.slane %v1057, 1
          %v1059 = vadd.f32 %v1057, %v1058
          %v1060 = vrot.slane %v1025, 4
          %v1061 = vadd.f32 %v1025, %v1060
          %v1062 = vrot.slane %v1061, 2
          %v1063 = vadd.f32 %v1061, %v1062
          %v1064 = vrot.slane %v1063, 1
          %v1065 = vadd.f32 %v1063, %v1064
          %v1066 = vrot.slane %v1027, 4
          %v1067 = vadd.f32 %v1027, %v1066
          %v1068 = vrot.slane %v1067, 2
          %v1069 = vadd.f32 %v1067, %v1068
          %v1070 = vrot.slane %v1069, 1
          %v1071 = vadd.f32 %v1069, %v1070
          %v1072 = vrot.slane %v1029, 4
          %v1073 = vadd.f32 %v1029, %v1072
          %v1074 = vrot.slane %v1073, 2
          %v1075 = vadd.f32 %v1073, %v1074
          %v1076 = vrot.slane %v1075, 1
          %v1077 = vadd.f32 %v1075, %v1076
          %v1078 = vrcp.pop %v1035
          %v1079 = vmul.f32 %v1015, %v1078
          %v1080 = vrcp.pop %v1041
          %v1081 = vmul.f32 %v1017, %v1080
          %v1082 = vrcp.pop %v1047
          %v1083 = vmul.f32 %v1019, %v1082
          %v1084 = vrcp.pop %v1053
          %v1085 = vmul.f32 %v1021, %v1084
          %v1086 = vrcp.pop %v1059
          %v1087 = vmul.f32 %v1023, %v1086
          %v1088 = vrcp.pop %v1065
          %v1089 = vmul.f32 %v1025, %v1088
          %v1090 = vrcp.pop %v1071
          %v1091 = vmul.f32 %v1027, %v1090
          %v1092 = vrcp.pop %v1077
          %v1093 = vmul.f32 %v1029, %v1092
          %v1094 = vmul.f32 %v1079, %v700
          %v1095 = vmul.f32 %v1081, %v701
          %v1096 = vmul.f32 %v1083, %v702
          %v1097 = vmul.f32 %v1085, %v703
          %v1098 = vmul.f32 %v1087, %v704
          %v1099 = vmul.f32 %v1089, %v705
          %v1100 = vmul.f32 %v1091, %v706
          %v1101 = vmul.f32 %v1093, %v707
          %v1102 = vrot.slane %v1094, 4
          %v1103 = vadd.f32 %v1094, %v1102
          %v1104 = vrot.slane %v1103, 2
          %v1105 = vadd.f32 %v1103, %v1104
          %v1106 = vrot.slane %v1105, 1
          %v1107 = vadd.f32 %v1105, %v1106
          %v1108 = vrot.slane %v1095, 4
          %v1109 = vadd.f32 %v1095, %v1108
          %v1110 = vrot.slane %v1109, 2
          %v1111 = vadd.f32 %v1109, %v1110
          %v1112 = vrot.slane %v1111, 1
          %v1113 = vadd.f32 %v1111, %v1112
          %v1114 = vrot.slane %v1096, 4
          %v1115 = vadd.f32 %v1096, %v1114
          %v1116 = vrot.slane %v1115, 2
          %v1117 = vadd.f32 %v1115, %v1116
          %v1118 = vrot.slane %v1117, 1
          %v1119 = vadd.f32 %v1117, %v1118
          %v1120 = vrot.slane %v1097, 4
          %v1121 = vadd.f32 %v1097, %v1120
          %v1122 = vrot.slane %v1121, 2
          %v1123 = vadd.f32 %v1121, %v1122
          %v1124 = vrot.slane %v1123, 1
          %v1125 = vadd.f32 %v1123, %v1124
          %v1126 = vrot.slane %v1098, 4
          %v1127 = vadd.f32 %v1098, %v1126
          %v1128 = vrot.slane %v1127, 2
          %v1129 = vadd.f32 %v1127, %v1128
          %v1130 = vrot.slane %v1129, 1
          %v1131 = vadd.f32 %v1129, %v1130
          %v1132 = vrot.slane %v1099, 4
          %v1133 = vadd.f32 %v1099, %v1132
          %v1134 = vrot.slane %v1133, 2
          %v1135 = vadd.f32 %v1133, %v1134
          %v1136 = vrot.slane %v1135, 1
          %v1137 = vadd.f32 %v1135, %v1136
          %v1138 = vrot.slane %v1100, 4
          %v1139 = vadd.f32 %v1100, %v1138
          %v1140 = vrot.slane %v1139, 2
          %v1141 = vadd.f32 %v1139, %v1140
          %v1142 = vrot.slane %v1141, 1
          %v1143 = vadd.f32 %v1141, %v1142
          %v1144 = vrot.slane %v1101, 4
          %v1145 = vadd.f32 %v1101, %v1144
          %v1146 = vrot.slane %v1145, 2
          %v1147 = vadd.f32 %v1145, %v1146
          %v1148 = vrot.slane %v1147, 1
          %v1149 = vadd.f32 %v1147, %v1148
          %v1150 = vld [vmem:[#allocation7] sm:$0xff]
          %v1151 = vld [vmem:[#allocation7 + $0x8] sm:$0xff]
          %v1152 = vld [vmem:[#allocation7 + $0x10] sm:$0xff]
          %v1153 = vld [vmem:[#allocation7 + $0x18] sm:$0xff]
          %v1154 = vld [vmem:[#allocation7 + $0x20] sm:$0xff]
          %v1155 = vld [vmem:[#allocation7 + $0x28] sm:$0xff]
          %v1156 = vld [vmem:[#allocation7 + $0x30] sm:$0xff]
          %v1157 = vld [vmem:[#allocation7 + $0x38] sm:$0xff]
          %v1158 = vld [vmem:[#allocation7 + $0x40] sm:$0xff]
          %v1159 = vld [vmem:[#allocation7 + $0x48] sm:$0xff]
          %v1160 = vld [vmem:[#allocation7 + $0x50] sm:$0xff]
          %v1161 = vld [vmem:[#allocation7 + $0x58] sm:$0xff]
          %v1162 = vld [vmem:[#allocation7 + $0x60] sm:$0xff]
          %v1163 = vld [vmem:[#allocation7 + $0x68] sm:$0xff]
          %v1164 = vld [vmem:[#allocation7 + $0x70] sm:$0xff]
          %v1165 = vld [vmem:[#allocation7 + $0x78] sm:$0xff]
          %v1166 = vld [vmem:[%s5] sm:$0x1]
          %v1168 = vlaneseq
          %v1169 = vshrl.u32 %v1168, 7
          %v1170 = vsub.s32 0, %v1169
          %v1171 = vrot.slane %v1166, %v1170
          %vm1181 = vcmask 1041409
          %v1182 = vsel %vm1181, %v892, %v886
          %vm1183 = vcmask 1042434
          %v1184 = vsel %vm1183, %v898, %v1182
          %vm1185 = vcmask 1043459
          %v1186 = vsel %vm1185, %v904, %v1184
          %vm1187 = vcmask 1044484
          %v1188 = vsel %vm1187, %v910, %v1186
          %vm1189 = vcmask 1045509
          %v1190 = vsel %vm1189, %v916, %v1188
          %vm1191 = vcmask 1046534
          %v1192 = vsel %vm1191, %v922, %v1190
          %vm1193 = vcmask 1047559
          %v1194 = vsel %vm1193, %v928, %v1192
          %1196 = vmatprep.subr.mxu0 0.0
          %1197 = vmatpush1.msra.mxu0 %v1150
          %1198 = vmatprep.subr.mxu0 0.0
          %1199 = vmatpush1.msra.mxu0 %v1151
          %1200 = vmatprep.subr.mxu0 0.0
          %1201 = vmatpush1.msra.mxu0 %v1152
          %1202 = vmatprep.subr.mxu0 0.0
          %1203 = vmatpush1.msra.mxu0 %v1153
          %1204 = vmatprep.subr.mxu0 0.0
          %1205 = vmatpush1.msra.mxu0 %v1154
          %1206 = vmatprep.subr.mxu0 0.0
          %1207 = vmatpush1.msra.mxu0 %v1155
          %1208 = vmatprep.subr.mxu0 0.0
          %1209 = vmatpush1.msra.mxu0 %v1156
          %1210 = vmatprep.subr.mxu0 0.0
          %1211 = vmatpush1.msra.mxu0 %v1157
          %1212 = vmatprep.subr.mxu0 0.0
          %1213 = vmatpush1.msra.mxu0 %v1158
          %1214 = vmatprep.subr.mxu0 0.0
          %1215 = vmatpush1.msra.mxu0 %v1159
          %1216 = vmatprep.subr.mxu0 0.0
          %1217 = vmatpush1.msra.mxu0 %v1160
          %1218 = vmatprep.subr.mxu0 0.0
          %1219 = vmatpush1.msra.mxu0 %v1161
          %1220 = vmatprep.subr.mxu0 0.0
          %1221 = vmatpush1.msra.mxu0 %v1162
          %1222 = vmatprep.subr.mxu0 0.0
          %1223 = vmatpush1.msra.mxu0 %v1163
          %1224 = vmatprep.subr.mxu0 0.0
          %1225 = vmatpush1.msra.mxu0 %v1164
          %1226 = vmatprep.subr.mxu0 0.0
          %1227 = vmatpush1.msra.mxu0 %v1165
          %1228 = vmatprep.subr.mxu0 0.0
          %1229 = vmatpush1.msra.mxu0 0.0
          %1230 = vmatprep.subr.mxu0 0.0
          %1231 = vmatpush1.msra.mxu0 0.0
          %1232 = vmatprep.subr.mxu0 0.0
          %1233 = vmatpush1.msra.mxu0 0.0
          %1234 = vmatprep.subr.mxu0 0.0
          %1235 = vmatpush1.msra.mxu0 0.0
          %1236 = vmatprep.subr.mxu0 0.0
          %1237 = vmatpush1.msra.mxu0 0.0
          %1238 = vmatprep.subr.mxu0 0.0
          %1239 = vmatpush1.msra.mxu0 0.0
          %1240 = vmatprep.subr.mxu0 0.0
          %1241 = vmatpush1.msra.mxu0 0.0
          %1242 = vmatprep.subr.mxu0 0.0
          %1243 = vmatpush1.msra.mxu0 0.0
          %1244 = vmatprep.subr.mxu0 0.0
          %1245 = vmatpush1.msra.mxu0 0.0
          %1246 = vmatprep.subr.mxu0 0.0
          %1247 = vmatpush1.msra.mxu0 0.0
          %1248 = vmatprep.subr.mxu0 0.0
          %1249 = vmatpush1.msra.mxu0 0.0
          %1250 = vmatprep.subr.mxu0 0.0
          %1251 = vmatpush1.msra.mxu0 0.0
          %1252 = vmatprep.subr.mxu0 0.0
          %1253 = vmatpush1.msra.mxu0 0.0
          %1254 = vmatprep.subr.mxu0 0.0
          %1255 = vmatpush1.msra.mxu0 0.0
          %1256 = vmatprep.subr.mxu0 0.0
          %1257 = vmatpush1.msra.mxu0 0.0
          %1258 = vmatprep.subr.mxu0 0.0
          %1259 = vmatpush1.msra.mxu0 0.0
          %1260 = vmatprep.mubr.f32.mxu0 0.0
          %1261 = vmatmul.mubr.f32.gmra.mrb[0].mxu0 %v1194
          %v1262 = vpop.f32.mrb[0].mxu0
          %v1263 = vadd.f32 %v1171, %v1262
          %v1264 = vpop.f32.mrb[0].mxu0
          %1265 = vdwg.mxu0
          %v1266 = vmul.f32 %v1263, %v1263
          %v1267 = vmul.f32 %v1263, %v1266
          %v1268 = vmul.f32 %v1267, 0.044715
          %v1269 = vadd.f32 %v1263, %v1268
          %v1270 = vmul.f32 %v1269, 0.7978846
          %v1271 = vtanh.pop %v1270
          %v1272 = vadd.f32 %v1271, 1.0
          %v1273 = vmul.f32 %v1272, 0.5
          %v1274 = vmul.f32 %v1263, %v1273
          %1275 = vst [vmem:[#allocation2] sm:$0xff] %v1274
          %v1276 = vld [vmem:[#allocation9] sm:$0xff]
          %v1277 = vld [vmem:[#allocation9 + $0x8] sm:$0xff]
          %v1278 = vld [vmem:[#allocation9 + $0x10] sm:$0xff]
          %v1279 = vld [vmem:[#allocation9 + $0x18] sm:$0xff]
          %v1280 = vld [vmem:[#allocation9 + $0x20] sm:$0xff]
          %v1281 = vld [vmem:[#allocation9 + $0x28] sm:$0xff]
          %v1282 = vld [vmem:[#allocation9 + $0x30] sm:$0xff]
          %v1283 = vld [vmem:[#allocation9 + $0x38] sm:$0xff]
          %v1284 = vld [vmem:[#allocation9 + $0x40] sm:$0xff]
          %v1285 = vld [vmem:[#allocation9 + $0x48] sm:$0xff]
          %v1286 = vld [vmem:[#allocation9 + $0x50] sm:$0xff]
          %v1287 = vld [vmem:[#allocation9 + $0x58] sm:$0xff]
          %v1288 = vld [vmem:[#allocation9 + $0x60] sm:$0xff]
          %v1289 = vld [vmem:[#allocation9 + $0x68] sm:$0xff]
          %v1290 = vld [vmem:[#allocation9 + $0x70] sm:$0xff]
          %v1291 = vld [vmem:[#allocation9 + $0x78] sm:$0xff]
          %v1292 = vld [vmem:[%s7] sm:$0x1]
          %v1294 = vlaneseq
          %v1295 = vshrl.u32 %v1294, 7
          %v1296 = vsub.s32 0, %v1295
          %v1297 = vrot.slane %v1292, %v1296
          %v1307 = vsel %vm1181, %v1113, %v1107
          %v1308 = vsel %vm1183, %v1119, %v1307
          %v1309 = vsel %vm1185, %v1125, %v1308
          %v1310 = vsel %vm1187, %v1131, %v1309
          %v1311 = vsel %vm1189, %v1137, %v1310
          %v1312 = vsel %vm1191, %v1143, %v1311
          %v1313 = vsel %vm1193, %v1149, %v1312
          %1315 = vmatprep.subr.mxu0 0.0
          %1316 = vmatpush1.msra.mxu0 %v1276
          %1317 = vmatprep.subr.mxu0 0.0
          %1318 = vmatpush1.msra.mxu0 %v1277
          %1319 = vmatprep.subr.mxu0 0.0
          %1320 = vmatpush1.msra.mxu0 %v1278
          %1321 = vmatprep.subr.mxu0 0.0
          %1322 = vmatpush1.msra.mxu0 %v1279
          %1323 = vmatprep.subr.mxu0 0.0
          %1324 = vmatpush1.msra.mxu0 %v1280
          %1325 = vmatprep.subr.mxu0 0.0
          %1326 = vmatpush1.msra.mxu0 %v1281
          %1327 = vmatprep.subr.mxu0 0.0
          %1328 = vmatpush1.msra.mxu0 %v1282
          %1329 = vmatprep.subr.mxu0 0.0
          %1330 = vmatpush1.msra.mxu0 %v1283
          %1331 = vmatprep.subr.mxu0 0.0
          %1332 = vmatpush1.msra.mxu0 %v1284
          %1333 = vmatprep.subr.mxu0 0.0
          %1334 = vmatpush1.msra.mxu0 %v1285
          %1335 = vmatprep.subr.mxu0 0.0
          %1336 = vmatpush1.msra.mxu0 %v1286
          %1337 = vmatprep.subr.mxu0 0.0
          %1338 = vmatpush1.msra.mxu0 %v1287
          %1339 = vmatprep.subr.mxu0 0.0
          %1340 = vmatpush1.msra.mxu0 %v1288
          %1341 = vmatprep.subr.mxu0 0.0
          %1342 = vmatpush1.msra.mxu0 %v1289
          %1343 = vmatprep.subr.mxu0 0.0
          %1344 = vmatpush1.msra.mxu0 %v1290
          %1345 = vmatprep.subr.mxu0 0.0
          %1346 = vmatpush1.msra.mxu0 %v1291
          %1347 = vmatprep.subr.mxu0 0.0
          %1348 = vmatpush1.msra.mxu0 0.0
          %1349 = vmatprep.subr.mxu0 0.0
          %1350 = vmatpush1.msra.mxu0 0.0
          %1351 = vmatprep.subr.mxu0 0.0
          %1352 = vmatpush1.msra.mxu0 0.0
          %1353 = vmatprep.subr.mxu0 0.0
          %1354 = vmatpush1.msra.mxu0 0.0
          %1355 = vmatprep.subr.mxu0 0.0
          %1356 = vmatpush1.msra.mxu0 0.0
          %1357 = vmatprep.subr.mxu0 0.0
          %1358 = vmatpush1.msra.mxu0 0.0
          %1359 = vmatprep.subr.mxu0 0.0
          %1360 = vmatpush1.msra.mxu0 0.0
          %1361 = vmatprep.subr.mxu0 0.0
          %1362 = vmatpush1.msra.mxu0 0.0
          %1363 = vmatprep.subr.mxu0 0.0
          %1364 = vmatpush1.msra.mxu0 0.0
          %1365 = vmatprep.subr.mxu0 0.0
          %1366 = vmatpush1.msra.mxu0 0.0
          %1367 = vmatprep.subr.mxu0 0.0
          %1368 = vmatpush1.msra.mxu0 0.0
          %1369 = vmatprep.subr.mxu0 0.0
          %1370 = vmatpush1.msra.mxu0 0.0
          %1371 = vmatprep.subr.mxu0 0.0
          %1372 = vmatpush1.msra.mxu0 0.0
          %1373 = vmatprep.subr.mxu0 0.0
          %1374 = vmatpush1.msra.mxu0 0.0
          %1375 = vmatprep.subr.mxu0 0.0
          %1376 = vmatpush1.msra.mxu0 0.0
          %1377 = vmatprep.subr.mxu0 0.0
          %1378 = vmatpush1.msra.mxu0 0.0
          %1379 = vmatprep.mubr.f32.mxu0 0.0
          %1380 = vmatmul.mubr.f32.gmra.mrb[0].mxu0 %v1313
          %v1381 = vpop.f32.mrb[0].mxu0
          %v1382 = vadd.f32 %v1297, %v1381
          %v1383 = vpop.f32.mrb[0].mxu0
          %1384 = vdwg.mxu0
          %v1385 = vmul.f32 %v1382, %v1382
          %v1386 = vmul.f32 %v1382, %v1385
          %v1387 = vmul.f32 %v1386, 0.044715
          %v1388 = vadd.f32 %v1382, %v1387
          %v1389 = vmul.f32 %v1388, 0.7978846
          %v1390 = vtanh.pop %v1389
          %v1391 = vadd.f32 %v1390, 1.0
          %v1392 = vmul.f32 %v1391, 0.5
          %v1393 = vmul.f32 %v1382, %v1392
          %v1394 = vld [vmem:[%s10] sm:$0x1]
          %v1396 = vlaneseq
          %v1397 = vshrl.u32 %v1396, 7
          %v1398 = vsub.s32 0, %v1397
          %v1399 = vrot.slane %v1394, %v1398
          %v1401 = vmul.f32 %v1393, %v1399
          %1402 = vadd.xlane.f32.xlu0 %v1401
          %v1403 = vpop.xlane.xlu0 %1402
          %v1404 = vld [vmem:[#allocation3] sm:$0x1]
          %v1406 = vlaneseq
          %v1407 = vshrl.u32 %v1406, 7
          %v1408 = vsub.s32 0, %v1407
          %v1409 = vrot.slane %v1404, %v1408
          %v1411 = vadd.f32 %v1403, %v1409
          %vm1412 = vcmask 7168
          %1413 = vst.msk [vmem:[%s576] sm:$0xff] %vm1412, %v1411
        $region88: #{tpu_custom_call.1} parent=67 // pred_fallthru
          _
        %v1414 = vld [vmem:[#allocation2] sm:$0xff]
        %v1415 = vld [vmem:[%s509] sm:$0xff]
        %v1416 = vld [vmem:[%s509 + $0x8] sm:$0xff]
        %v1417 = vld [vmem:[%s509 + $0x10] sm:$0xff]
        %v1418 = vld [vmem:[%s509 + $0x18] sm:$0xff]
        %v1419 = vld [vmem:[%s509 + $0x20] sm:$0xff]
        %v1420 = vld [vmem:[%s509 + $0x28] sm:$0xff]
        %v1421 = vld [vmem:[%s509 + $0x30] sm:$0xff]
        %v1422 = vld [vmem:[%s509 + $0x38] sm:$0xff]
        %v1423 = vld [vmem:[%s509 + $0x40] sm:$0xff]
        %v1424 = vld [vmem:[%s509 + $0x48] sm:$0xff]
        %v1425 = vld [vmem:[%s509 + $0x50] sm:$0xff]
        %v1426 = vld [vmem:[%s509 + $0x58] sm:$0xff]
        %v1427 = vld [vmem:[%s509 + $0x60] sm:$0xff]
        %v1428 = vld [vmem:[%s509 + $0x68] sm:$0xff]
        %v1429 = vld [vmem:[%s509 + $0x70] sm:$0xff]
        %v1430 = vld [vmem:[%s509 + $0x78] sm:$0xff]
        %v1431 = vld [vmem:[%s509 + $0x80] sm:$0xff]
        %v1432 = vld [vmem:[%s509 + $0x88] sm:$0xff]
        %v1433 = vld [vmem:[%s509 + $0x90] sm:$0xff]
        %v1434 = vld [vmem:[%s509 + $0x98] sm:$0xff]
        %v1435 = vld [vmem:[%s509 + $0xa0] sm:$0xff]
        %v1436 = vld [vmem:[%s509 + $0xa8] sm:$0xff]
        %v1437 = vld [vmem:[%s509 + $0xb0] sm:$0xff]
        %v1438 = vld [vmem:[%s509 + $0xb8] sm:$0xff]
        %v1439 = vld [vmem:[%s509 + $0xc0] sm:$0xff]
        %v1440 = vld [vmem:[%s509 + $0xc8] sm:$0xff]
        %v1441 = vld [vmem:[%s509 + $0xd0] sm:$0xff]
        %v1442 = vld [vmem:[%s509 + $0xd8] sm:$0xff]
        %v1443 = vld [vmem:[%s509 + $0xe0] sm:$0xff]
        %v1444 = vld [vmem:[%s509 + $0xe8] sm:$0xff]
        %v1445 = vld [vmem:[%s509 + $0xf0] sm:$0xff]
        %v1446 = vld [vmem:[%s509 + $0xf8] sm:$0xff]
        %v1447 = vld [vmem:[%s570] sm:$0x3]
        %v1449 = vlaneseq
        %v1450 = vshrl.u32 %v1449, 7
        %v1451 = vsub.s32 0, %v1450
        %v1452 = vrot.slane %v1447, %v1451
        %v1453 = vlaneseq
        %v1454 = vshrl.u32 %v1453, 7
        %v1455 = vsub.s32 1, %v1454
        %v1456 = vrot.slane %v1447, %v1455
        %1459 = vmatprep.subr.mxu0 %v1416
        %1460 = vmatpush1.msra.mxu0 %v1415
        %1461 = vmatprep.subr.mxu0 %v1418
        %1462 = vmatpush1.msra.mxu0 %v1417
        %1463 = vmatprep.subr.mxu0 %v1420
        %1464 = vmatpush1.msra.mxu0 %v1419
        %1465 = vmatprep.subr.mxu0 %v1422
        %1466 = vmatpush1.msra.mxu0 %v1421
        %1467 = vmatprep.subr.mxu0 %v1424
        %1468 = vmatpush1.msra.mxu0 %v1423
        %1469 = vmatprep.subr.mxu0 %v1426
        %1470 = vmatpush1.msra.mxu0 %v1425
        %1471 = vmatprep.subr.mxu0 %v1428
        %1472 = vmatpush1.msra.mxu0 %v1427
        %1473 = vmatprep.subr.mxu0 %v1430
        %1474 = vmatpush1.msra.mxu0 %v1429
        %1475 = vmatprep.subr.mxu0 %v1432
        %1476 = vmatpush1.msra.mxu0 %v1431
        %1477 = vmatprep.subr.mxu0 %v1434
        %1478 = vmatpush1.msra.mxu0 %v1433
        %1479 = vmatprep.subr.mxu0 %v1436
        %1480 = vmatpush1.msra.mxu0 %v1435
        %1481 = vmatprep.subr.mxu0 %v1438
        %1482 = vmatpush1.msra.mxu0 %v1437
        %1483 = vmatprep.subr.mxu0 %v1440
        %1484 = vmatpush1.msra.mxu0 %v1439
        %1485 = vmatprep.subr.mxu0 %v1442
        %1486 = vmatpush1.msra.mxu0 %v1441
        %1487 = vmatprep.subr.mxu0 %v1444
        %1488 = vmatpush1.msra.mxu0 %v1443
        %1489 = vmatprep.subr.mxu0 %v1446
        %1490 = vmatpush1.msra.mxu0 %v1445
        %1491 = vmatprep.subr.mxu0 0.0
        %1492 = vmatpush1.msra.mxu0 0.0
        %1493 = vmatprep.subr.mxu0 0.0
        %1494 = vmatpush1.msra.mxu0 0.0
        %1495 = vmatprep.subr.mxu0 0.0
        %1496 = vmatpush1.msra.mxu0 0.0
        %1497 = vmatprep.subr.mxu0 0.0
        %1498 = vmatpush1.msra.mxu0 0.0
        %1499 = vmatprep.subr.mxu0 0.0
        %1500 = vmatpush1.msra.mxu0 0.0
        %1501 = vmatprep.subr.mxu0 0.0
        %1502 = vmatpush1.msra.mxu0 0.0
        %1503 = vmatprep.subr.mxu0 0.0
        %1504 = vmatpush1.msra.mxu0 0.0
        %1505 = vmatprep.subr.mxu0 0.0
        %1506 = vmatpush1.msra.mxu0 0.0
        %1507 = vmatprep.subr.mxu0 0.0
        %1508 = vmatpush1.msra.mxu0 0.0
        %1509 = vmatprep.subr.mxu0 0.0
        %1510 = vmatpush1.msra.mxu0 0.0
        %1511 = vmatprep.subr.mxu0 0.0
        %1512 = vmatpush1.msra.mxu0 0.0
        %1513 = vmatprep.subr.mxu0 0.0
        %1514 = vmatpush1.msra.mxu0 0.0
        %1515 = vmatprep.subr.mxu0 0.0
        %1516 = vmatpush1.msra.mxu0 0.0
        %1517 = vmatprep.subr.mxu0 0.0
        %1518 = vmatpush1.msra.mxu0 0.0
        %1519 = vmatprep.subr.mxu0 0.0
        %1520 = vmatpush1.msra.mxu0 0.0
        %1521 = vmatprep.subr.mxu0 0.0
        %1522 = vmatpush1.msra.mxu0 0.0
        %1523 = vmatprep.mubr.f32.mxu0 0.0
        %1524 = vmatmul.mubr.f32.gmra.mrb[0].mxu0 %v1414
        %v1525 = vpop.f32.mrb[0].mxu0
        %v1526 = vadd.f32 %v1452, %v1525
        %v1527 = vpop.f32.mrb[0].mxu0
        %v1528 = vadd.f32 %v1456, %v1527
        %1529 = vdwg.mxu0
        %1530 = vst [vmem:[%s558] sm:$0xff] %v1526
        %1531 = vst [vmem:[%s558 + $0x8] sm:$0xff] %v1528
        %s1532 = sand.u32 %s326, 1
        %s1533 = scalar_lea.sflag [#allocation6], %s1532
        %s1534 = sand.u32 %s326, 1
        %s1535 = smul.addr %s1534, 16
        %s1536 = scalar_lea.vmem [#allocation12], %s1535
        %p1537 = scmp.lt.s32.totalorder %s41, 1
        %s1538 = scalar_select %p1537, %s41, 1
        %s1539 = smul.addr %s1538, 8
        %s1540 = scalar_lea.vmem %s13, %s1539
        // Predicated region
        $region89: #{tpu_custom_call.1} parent=67 // pred_check
          %p1541 = pneg %p336
        $region90: #{tpu_custom_call.1} parent=67 // pred_check_branch
          %1543 = sbr.rel (%p1541) target = $region92
        $region91: #{tpu_custom_call.1} parent=67 // pred_region
          %s1544 = smul.u32 2, %s42
          %s1546 = ssub.s32 256, 256
          %1547 = vsyncadd %s1533, %s1546
          %s1548 = smul.addr %s41, 4
          %s1549 = sadd.s32 %s1544, %s1548
          %s1550 = smul.addr %s1549, 128
          %s1551 = scalar_lea.hbm %s12, %s1550
          %s1553 = sshll.u32 %s1536, 4
          %s1554 = int_to_ptr.vmem [resolvable:$true] %s1553
          %1556 = dma.vmem_to_hbm [thread:$0]  %s1554, 256, %s1551, %s1533
        $region92: #{tpu_custom_call.1} parent=67 // pred_fallthru
          _
        // Predicated region
        $region93: #{tpu_custom_call.1} parent=67 // pred_check
          %p1557 = pneg %p362
        $region94: #{tpu_custom_call.1} parent=67 // pred_check_branch
          %1559 = sbr.rel (%p1557) target = $region96
        $region95: #{tpu_custom_call.1} parent=67 // pred_region
          _
        $region96: #{tpu_custom_call.1} parent=67 // pred_fallthru
          _
      $region68: #{tpu_custom_call.1} parent=5 // pred_fallthru
        _
      %p1560 = scmp.le.s32.totalorder 2, %s32
      // Predicated region
      $region97: #{tpu_custom_call.1} parent=5 // pred_check
        %p1561 = pneg %p1560
      $region98: #{tpu_custom_call.1} parent=5 // pred_check_branch
        %1563 = sbr.rel (%p1561) target = $region100
      $region99: #{tpu_custom_call.1} parent=5 // pred_region
        %s1564 = ssub.s32 %s32, 2
        // Predicated region
        $region101: #{tpu_custom_call.1} parent=99 // pred_check
          %p1565 = pneg %p342
        $region102: #{tpu_custom_call.1} parent=99 // pred_check_branch
          %1567 = sbr.rel (%p1565) target = $region104
        $region103: #{tpu_custom_call.1} parent=99 // pred_region
          %s1568 = sand.u32 %s327, 1
          %s1569 = scalar_lea.sflag [#allocation6], %s1568
          %s1570 = sand.u32 %s327, 1
          %s1571 = smul.addr %s1570, 16
          %s1572 = scalar_lea.vmem [#allocation12], %s1571
          %1573 = dma.done %s1569, 256
        $region104: #{tpu_custom_call.1} parent=99 // pred_fallthru
          _
        // Predicated region
        $region105: #{tpu_custom_call.1} parent=99 // pred_check
          %p1574 = pneg %p368
        $region106: #{tpu_custom_call.1} parent=99 // pred_check_branch
          %1576 = sbr.rel (%p1574) target = $region108
        $region107: #{tpu_custom_call.1} parent=99 // pred_region
          %p1577 = scmp.lt.s32.totalorder %s43, 1
          %s1578 = scalar_select %p1577, %s43, 1
          %s1579 = smul.addr %s1578, 8
          %s1580 = scalar_lea.vmem %s13, %s1579
        $region108: #{tpu_custom_call.1} parent=99 // pred_fallthru
          _
      $region100: #{tpu_custom_call.1} parent=5 // pred_fallthru
        _
    $region6: #{tpu_custom_call.1} parent=1 // loop_footer
      %s36 = sadd.s32 1, %s32
    $region7: #{tpu_custom_call.1} parent=1 // loop_footer_branch
      %31 = sbr.rel target = $region3
    $region8: #{tpu_custom_call.1} parent=1 // loop_exit
      _
    %1581 = vsyncpa [#allocation5], 1
    %s1582 = scalar_lea.sflag [#allocation5], 1
    %1583 = vsyncpa %s1582, 1
    %1584 = vsyncpa [#allocation8], 1
    %1585 = vsyncpa [#allocation11], 1
    %s1586 = scalar_lea.sflag [#allocation11], 1
    %1587 = vsyncpa %s1586, 1
    %1588 = vsyncpa [#allocation6], 1
    %s1589 = scalar_lea.sflag [#allocation6], 1
    %1590 = vsyncpa %s1589, 1

</llo_original>
